<compile_context>
chip_gen: v5e
topology: v5e:2x2
jax: 0.10.0
libtpu: 0.0.40
codegen_flags: <defaults>
</compile_context>

<pallas_src>
import functools

import jax
import jax.numpy as jnp
from jax import lax
from jax.experimental import pallas as pl
from jax.experimental.pallas import tpu as pltpu


def _deepvit_attention_kernel(x_ref, wqkv_ref, scale_ref, gamma_ref, beta_ref,
                              msum_ref, mmix_ref, mmean_ref, wout_ref, bout_ref,
                              o_ref, s_ref, av_ref,
                              *, b_blk, seq, heads, dim_head):
    n = seq
    dh = dim_head
    inner = heads * dh
    bn = b_blk * n

    # ---- fused QKV projection: one lane-dense MXU matmul (bf16 in, f32 accumulate) ----
    qkv = jnp.dot(x_ref[...], wqkv_ref[...], preferred_element_type=jnp.float32)  # (bn, 3*inner)
    # Per-head scale folded into the q slab with one lane-dense f32 multiply (dh-wide / head).
    q_bf = (qkv[:, :inner] * scale_ref[...]).astype(jnp.bfloat16)                  # (bn, inner)
    k_bf = qkv[:, inner:2 * inner].astype(jnp.bfloat16)
    v_bf = qkv[:, 2 * inner:].astype(jnp.bfloat16)

    # Diagonal mask (torch: dots[:, :, i, i] = -inf), built once and broadcast hoisted
    # out of the head loop (JAX does not CSE broadcast_in_dim).
    row = lax.broadcasted_iota(jnp.int32, (n, n), 0)
    col = lax.broadcasted_iota(jnp.int32, (n, n), 1)
    mask_b = jnp.broadcast_to(
        jnp.where(row == col, jnp.float32(-1e30), jnp.float32(0.0)), (b_blk, n, n))

    # ---- per-head QK^T (MXU, batched over the folded batch dim) ----
    # Each head's masked, max-centered scores go straight into the lane-packed slab
    # s_ref[:, h*n:(h+1)*n]; the per-head intermediate dies immediately (no lists -> no spill).
    for h in range(heads):
        q_h = q_bf[:, h * dh:(h + 1) * dh].reshape(b_blk, n, dh)
        k_h = k_bf[:, h * dh:(h + 1) * dh].reshape(b_blk, n, dh)
        d_h = lax.dot_general(q_h, k_h, (((2,), (2,)), ((0,), (0,))),
                              preferred_element_type=jnp.float32)                  # (b, n, n)
        d_h = d_h + mask_b
        d_h = d_h - jnp.max(d_h, axis=-1, keepdims=True)                           # per-head stable softmax
        s_ref[:, h * n:(h + 1) * n] = d_h.reshape(bn, n)

    # ---- lane-dense softmax on the packed (bn, heads*n) slab ----
    e = jnp.exp(s_ref[...])                                                        # EUP, 128-lane dense
    # Per-head row sums (already broadcast back to packed positions) via kron(I_h, 1_nxn).
    denom = jnp.dot(e, msum_ref[...], preferred_element_type=jnp.float32)
    p = e * pl.reciprocal(denom, approx=True)

    # ---- re-attention head mix as ONE MXU matmul: p @ kron(reattn, I_n) ----
    r = jnp.dot(p, mmix_ref[...], preferred_element_type=jnp.float32)

    # ---- LayerNorm over the head axis; mean / var via kron(1_hh/h, I_n) matmuls ----
    mean = jnp.dot(r, mmean_ref[...], preferred_element_type=jnp.float32)
    cent = r - mean
    var = jnp.dot(cent * cent, mmean_ref[...], preferred_element_type=jnp.float32)
    a = cent * lax.rsqrt(var + jnp.float32(1e-5)) * gamma_ref[...] + beta_ref[...]

    # ---- per-head attn @ v, packed into (bn, inner) for a single output projection ----
    a_bf = a.astype(jnp.bfloat16)
    for h in range(heads):
        a_h = a_bf[:, h * n:(h + 1) * n].reshape(b_blk, n, n)
        v_h = v_bf[:, h * dh:(h + 1) * dh].reshape(b_blk, n, dh)
        o_h = lax.dot_general(a_h, v_h, (((2,), (1,)), ((0,), (0,))),
                              preferred_element_type=jnp.float32)                  # (b, n, dh)
        av_ref[:, h * dh:(h + 1) * dh] = o_h.reshape(bn, dh).astype(jnp.bfloat16)

    out = jnp.dot(av_ref[...], wout_ref[...], preferred_element_type=jnp.float32)  # (bn, dim)
    o_ref[...] = (out + bout_ref[...]).astype(o_ref.dtype)


def _is_multi_tensorcore():
    try:
        kind = jax.devices()[0].device_kind.lower()
    except Exception:
        return False
    return ("v7" in kind) or ("7x" in kind)


def _pick_b_blk(b, n):
    # Grid steps are a serial loop on a single TensorCore, so on v5e/v6e use one step
    # (b_blk = b, no per-step overhead). Only v7x (2 TCs) benefits from >= 2 "parallel"
    # steps; there keep the x/out block's sublane dim (b_blk*n) a multiple of 8 per the
    # (8,128) BlockSpec rule and an even number of steps.
    if b <= 1 or not _is_multi_tensorcore():
        return b
    cands = [d for d in range(1, b)
             if b % d == 0 and (d * n) % 8 == 0 and (b // d) % 2 == 0]
    return max(cands) if cands else b


def deepvit_attention(x, params, *, heads, dim_head, b_blk=None):
    b, n, dim = x.shape
    inner = heads * dim_head
    hn = heads * n
    # TODO(synk): for ViT-scale sequence lengths (e.g. n = 257) the packed (bn, heads*n)
    # slab and the kron structural matrices become large; switch to a query-tiled per-head
    # variant there (and raise vmem_limit_bytes carefully on v7x's 64 MiB VMEM).
    assert hn <= 1024, "lane-packed kernel targets small n (heads * n <= 1024)"

    if b_blk is None:
        b_blk = _pick_b_blk(b, n)
    assert b % b_blk == 0 and (b_blk == b or (b_blk * n) % 8 == 0)
    grid = (b // b_blk,)
    bn_blk = b_blk * n

    kernel = functools.partial(_deepvit_attention_kernel,
                               b_blk=b_blk, seq=n, heads=heads, dim_head=dim_head)

    f32 = jnp.float32
    x2d = x.reshape(b * n, dim).astype(jnp.bfloat16)     # stream x as bf16 (MXU operand only)
    wqkv_bf = params["w_qkv"].astype(jnp.bfloat16)
    wout_bf = params["w_out"].astype(jnp.bfloat16)
    bout = params["b_out"].reshape(1, dim).astype(f32)
    scale_row = jnp.repeat(params["scale"].astype(f32), dim_head)[None, :]      # (1, inner)
    gamma_row = jnp.repeat(params["ln_gamma"].astype(f32), n)[None, :]          # (1, heads*n)
    beta_row = jnp.repeat(params["ln_beta"].astype(f32), n)[None, :]
    eye_n = jnp.eye(n, dtype=f32)
    m_sum = jnp.kron(jnp.eye(heads, dtype=f32), jnp.ones((n, n), f32))          # softmax denoms
    m_mix = jnp.kron(params["reattn"].astype(f32), eye_n)                       # re-attention mix
    m_mean = jnp.kron(jnp.ones((heads, heads), f32) / heads, eye_n)             # LN mean / var

    def const(shape):
        return pl.BlockSpec(shape, lambda i: (0, 0))

    grid_spec = pltpu.PrefetchScalarGridSpec(
        num_scalar_prefetch=0,
        grid=grid,
        in_specs=[
            pl.BlockSpec((bn_blk, dim), lambda i: (i, 0)),   # x rows (bf16)
            const((dim, 3 * inner)),                         # W_qkv (bf16)
            const((1, inner)),                               # per-head scale, lane-expanded
            const((1, hn)),                                  # LN gamma, lane-expanded
            const((1, hn)),                                  # LN beta, lane-expanded
            const((hn, hn)),                                 # kron(I_h, 1_nxn)
            const((hn, hn)),                                 # kron(reattn, I_n)
            const((hn, hn)),                                 # kron(1_hh / h, I_n)
            const((inner, dim)),                             # W_out (bf16)
            const((1, dim)),                                 # b_out
        ],
        out_specs=pl.BlockSpec((bn_blk, dim), lambda i: (i, 0)),
        scratch_shapes=[pltpu.VMEM((bn_blk, hn), jnp.float32),       # packed centered scores
                        pltpu.VMEM((bn_blk, inner), jnp.bfloat16)],  # packed attn @ v
    )
    # NOTE: at model scale the constant-index weight blocks could also use
    # pipeline_mode=pl.Buffered(1) to avoid double-buffering; irrelevant at these sizes.
    out2d = pl.pallas_call(
        kernel,
        out_shape=jax.ShapeDtypeStruct((b * n, dim), x.dtype),
        grid_spec=grid_spec,
        compiler_params=pltpu.CompilerParams(
            dimension_semantics=("parallel",),
            vmem_limit_bytes=32 * 1024 * 1024),
    )(x2d, wqkv_bf, scale_row, gamma_row, beta_row, m_sum, m_mix, m_mean, wout_bf, bout)
    return out2d.reshape(b, n, dim)


def reference(x, params, *, heads, dim_head):
    """Pure-JAX f32 reference mirroring the PyTorch forward."""
    b, n, dim = x.shape
    inner = heads * dim_head
    qkv = x @ params["w_qkv"]
    q, k, v = jnp.split(qkv, 3, axis=-1)
    sh = lambda t: t.reshape(b, n, heads, dim_head).transpose(0, 2, 1, 3)
    q, k, v = sh(q), sh(k), sh(v)
    dots = jnp.einsum('bhid,bhjd->bhij', q, k) * params["scale"][None, :, None, None]
    dots = jnp.where(jnp.eye(n, dtype=bool)[None, None], -jnp.inf, dots)
    attn = jax.nn.softmax(dots, axis=-1)
    attn = jnp.einsum('bhij,hg->bgij', attn, params["reattn"])
    mean = attn.mean(axis=1, keepdims=True)
    var = ((attn - mean) ** 2).mean(axis=1, keepdims=True)
    attn = (attn - mean) / jnp.sqrt(var + 1e-5)
    attn = attn * params["ln_gamma"][None, :, None, None] + params["ln_beta"][None, :, None, None]
    out = jnp.einsum('bhij,bhjd->bhid', attn, v)
    out = out.transpose(0, 2, 1, 3).reshape(b, n, inner)
    return out @ params["w_out"] + params["b_out"]


if __name__ == "__main__":
    b, num_patches, dim, heads, dim_head = 4, 15, 32, 8, 16
    n = num_patches + 1
    inner = heads * dim_head

    keys = jax.random.split(jax.random.PRNGKey(0), 6)
    x = jax.random.normal(keys[0], (b, n, dim), jnp.float32)
    params = {
        "w_qkv": 0.05 * jax.random.normal(keys[1], (dim, 3 * inner), jnp.float32),
        "scale": (dim_head ** -0.5) * jnp.ones((heads,), jnp.float32),   # nn.Parameter init
        "reattn": jax.random.normal(keys[2], (heads, heads), jnp.float32),
        "ln_gamma": jnp.ones((heads,), jnp.float32),                     # LayerNorm defaults
        "ln_beta": jnp.zeros((heads,), jnp.float32),
        "w_out": 0.05 * jax.random.normal(keys[3], (inner, dim), jnp.float32),
        "b_out": 0.05 * jax.random.normal(keys[4], (dim,), jnp.float32),
    }

    out = deepvit_attention(x, params, heads=heads, dim_head=dim_head)
    out = jax.block_until_ready(out)

    ref = reference(x, params, heads=heads, dim_head=dim_head)
    assert out.shape == (b, n, dim)
    # bf16 MXU operands + approx reciprocal => compare to the f32 reference with a loose bound.
    err = float(jnp.max(jnp.abs(out - ref)))
    assert jnp.allclose(out, ref, atol=5e-2, rtol=5e-2), err
    print("KERNEL_OK")
</pallas_src>

<mosaic_0001>
module attributes {stable_mosaic.version = 11 : i64} {
  func.func @_deepvit_attention_kernel(%arg0: i32, %arg1: memref<64x32xbf16, #tpu.memory_space<vmem>>, %arg2: memref<32x384xbf16, #tpu.memory_space<vmem>>, %arg3: memref<1x128xf32, #tpu.memory_space<vmem>>, %arg4: memref<1x128xf32, #tpu.memory_space<vmem>>, %arg5: memref<1x128xf32, #tpu.memory_space<vmem>>, %arg6: memref<128x128xf32, #tpu.memory_space<vmem>>, %arg7: memref<128x128xf32, #tpu.memory_space<vmem>>, %arg8: memref<128x128xf32, #tpu.memory_space<vmem>>, %arg9: memref<128x32xbf16, #tpu.memory_space<vmem>>, %arg10: memref<1x32xf32, #tpu.memory_space<vmem>>, %arg11: memref<64x32xf32, #tpu.memory_space<vmem>>, %arg12: memref<64x128xf32, #tpu.memory_space<vmem>>, %arg13: memref<64x128xbf16, #tpu.memory_space<vmem>>) attributes {dimension_semantics = [#tpu.dimension_semantics<parallel>], iteration_bounds = array<i64: 1>, scalar_prefetch = 0 : i64, scratch_operands = 2 : i64, tpu.core_type = #tpu.core_type<tc>, window_params = [{transform_indices = @transform_0, window_bounds = array<i64: 64, 32>}, {pipeline_mode = #tpu.pipeline_mode<synchronous>, transform_indices = @transform_1, window_bounds = array<i64: 32, 384>}, {pipeline_mode = #tpu.pipeline_mode<synchronous>, transform_indices = @transform_2, window_bounds = array<i64: 1, 128>}, {pipeline_mode = #tpu.pipeline_mode<synchronous>, transform_indices = @transform_3, window_bounds = array<i64: 1, 128>}, {pipeline_mode = #tpu.pipeline_mode<synchronous>, transform_indices = @transform_4, window_bounds = array<i64: 1, 128>}, {pipeline_mode = #tpu.pipeline_mode<synchronous>, transform_indices = @transform_5, window_bounds = array<i64: 128, 128>}, {pipeline_mode = #tpu.pipeline_mode<synchronous>, transform_indices = @transform_6, window_bounds = array<i64: 128, 128>}, {pipeline_mode = #tpu.pipeline_mode<synchronous>, transform_indices = @transform_7, window_bounds = array<i64: 128, 128>}, {pipeline_mode = #tpu.pipeline_mode<synchronous>, transform_indices = @transform_8, window_bounds = array<i64: 128, 32>}, {pipeline_mode = #tpu.pipeline_mode<synchronous>, transform_indices = @transform_9, window_bounds = array<i64: 1, 32>}, {transform_indices = @transform_10, window_bounds = array<i64: 64, 32>}]} {
    %c0 = arith.constant 0 : index
    %c0_0 = arith.constant 0 : index
    %0 = vector.load %arg1[%c0, %c0_0] : memref<64x32xbf16, #tpu.memory_space<vmem>>, vector<64x32xbf16>
    %c0_1 = arith.constant 0 : index
    %c0_2 = arith.constant 0 : index
    %1 = vector.load %arg2[%c0_1, %c0_2] : memref<32x384xbf16, #tpu.memory_space<vmem>>, vector<32x384xbf16>
    %cst = arith.constant dense<0.000000e+00> : vector<64x384xf32>
    %2 = tpu.matmul %0, %1, %cst {dimension_numbers = #tpu.dot_dimension_numbers<[1], [0], [0], [1], [0, 0, 1, 1], [], []>} : vector<64x32xbf16>, vector<32x384xbf16>, vector<64x384xf32> -> vector<64x384xf32>
    %3 = vector.extract_strided_slice %2 {offsets = [0, 0], sizes = [64, 128], strides = [1, 1]} : vector<64x384xf32> to vector<64x128xf32>
    %c0_3 = arith.constant 0 : index
    %c0_4 = arith.constant 0 : index
    %4 = vector.load %arg3[%c0_3, %c0_4] : memref<1x128xf32, #tpu.memory_space<vmem>>, vector<1x128xf32>
    %5 = vector.broadcast %4 : vector<1x128xf32> to vector<64x128xf32>
    %6 = arith.mulf %3, %5 : vector<64x128xf32>
    %7 = arith.truncf %6 : vector<64x128xf32> to vector<64x128xbf16>
    %8 = vector.extract_strided_slice %2 {offsets = [0, 128], sizes = [64, 128], strides = [1, 1]} : vector<64x384xf32> to vector<64x128xf32>
    %9 = arith.truncf %8 : vector<64x128xf32> to vector<64x128xbf16>
    %10 = vector.extract_strided_slice %2 {offsets = [0, 256], sizes = [64, 128], strides = [1, 1]} : vector<64x384xf32> to vector<64x128xf32>
    %11 = arith.truncf %10 : vector<64x128xf32> to vector<64x128xbf16>
    %12 = tpu.iota {dimensions = array<i32: 0>} : vector<16x16xi32>
    %13 = tpu.iota {dimensions = array<i32: 1>} : vector<16x16xi32>
    %14 = arith.cmpi eq, %12, %13 : vector<16x16xi32>
    %cst_5 = arith.constant -1.000000e+30 : f32
    %cst_6 = arith.constant 0.000000e+00 : f32
    %15 = vector.broadcast %cst_5 : f32 to vector<16x16xf32>
    %16 = vector.broadcast %cst_6 : f32 to vector<16x16xf32>
    %17 = arith.select %14, %15, %16 : vector<16x16xi1>, vector<16x16xf32>
    %18 = vector.shape_cast %17 : vector<16x16xf32> to vector<1x16x16xf32>
    %19 = vector.broadcast %18 : vector<1x16x16xf32> to vector<4x16x16xf32>
    %20 = vector.extract_strided_slice %7 {offsets = [0, 0], sizes = [64, 16], strides = [1, 1]} : vector<64x128xbf16> to vector<64x16xbf16>
    %21 = vector.shape_cast %20 : vector<64x16xbf16> to vector<4x16x16xbf16>
    %22 = vector.extract_strided_slice %9 {offsets = [0, 0], sizes = [64, 16], strides = [1, 1]} : vector<64x128xbf16> to vector<64x16xbf16>
    %23 = vector.shape_cast %22 : vector<64x16xbf16> to vector<4x16x16xbf16>
    %cst_7 = arith.constant dense<0.000000e+00> : vector<4x16x16xf32>
    %24 = tpu.matmul %21, %23, %cst_7 {dimension_numbers = #tpu.dot_dimension_numbers<[2], [2], [1], [1], [0, 0, 0, 1, 1, 1], [0], [0]>} : vector<4x16x16xbf16>, vector<4x16x16xbf16>, vector<4x16x16xf32> -> vector<4x16x16xf32>
    %25 = arith.addf %24, %19 : vector<4x16x16xf32>
    %cst_8 = arith.constant dense<0xFF800000> : vector<4x16xf32>
    %26 = vector.multi_reduction <maximumf>, %25, %cst_8 [2] : vector<4x16x16xf32> to vector<4x16xf32>
    %27 = vector.shape_cast %26 : vector<4x16xf32> to vector<4x16x1xf32>
    %28 = vector.broadcast %27 : vector<4x16x1xf32> to vector<4x16x16xf32>
    %29 = arith.subf %25, %28 : vector<4x16x16xf32>
    %30 = vector.shape_cast %29 : vector<4x16x16xf32> to vector<64x16xf32>
    %c0_9 = arith.constant 0 : index
    %c0_10 = arith.constant 0 : index
    %31 = vector.load %arg12[%c0_9, %c0_10] : memref<64x128xf32, #tpu.memory_space<vmem>>, vector<64x16xf32>
    tpu.vector_store %arg12[%c0_9, %c0_10], %30 {strides = array<i32>} : memref<64x128xf32, #tpu.memory_space<vmem>>, vector<64x16xf32>,
    %32 = vector.extract_strided_slice %7 {offsets = [0, 16], sizes = [64, 16], strides = [1, 1]} : vector<64x128xbf16> to vector<64x16xbf16>
    %33 = vector.shape_cast %32 : vector<64x16xbf16> to vector<4x16x16xbf16>
    %34 = vector.extract_strided_slice %9 {offsets = [0, 16], sizes = [64, 16], strides = [1, 1]} : vector<64x128xbf16> to vector<64x16xbf16>
    %35 = vector.shape_cast %34 : vector<64x16xbf16> to vector<4x16x16xbf16>
    %cst_11 = arith.constant dense<0.000000e+00> : vector<4x16x16xf32>
    %36 = tpu.matmul %33, %35, %cst_11 {dimension_numbers = #tpu.dot_dimension_numbers<[2], [2], [1], [1], [0, 0, 0, 1, 1, 1], [0], [0]>} : vector<4x16x16xbf16>, vector<4x16x16xbf16>, vector<4x16x16xf32> -> vector<4x16x16xf32>
    %37 = arith.addf %36, %19 : vector<4x16x16xf32>
    %cst_12 = arith.constant dense<0xFF800000> : vector<4x16xf32>
    %38 = vector.multi_reduction <maximumf>, %37, %cst_12 [2] : vector<4x16x16xf32> to vector<4x16xf32>
    %39 = vector.shape_cast %38 : vector<4x16xf32> to vector<4x16x1xf32>
    %40 = vector.broadcast %39 : vector<4x16x1xf32> to vector<4x16x16xf32>
    %41 = arith.subf %37, %40 : vector<4x16x16xf32>
    %42 = vector.shape_cast %41 : vector<4x16x16xf32> to vector<64x16xf32>
    %c0_13 = arith.constant 0 : index
    %c16 = arith.constant 16 : index
    %43 = vector.load %arg12[%c0_13, %c16] : memref<64x128xf32, #tpu.memory_space<vmem>>, vector<64x16xf32>
    tpu.vector_store %arg12[%c0_13, %c16], %42 {strides = array<i32>} : memref<64x128xf32, #tpu.memory_space<vmem>>, vector<64x16xf32>,
    %44 = vector.extract_strided_slice %7 {offsets = [0, 32], sizes = [64, 16], strides = [1, 1]} : vector<64x128xbf16> to vector<64x16xbf16>
    %45 = vector.shape_cast %44 : vector<64x16xbf16> to vector<4x16x16xbf16>
    %46 = vector.extract_strided_slice %9 {offsets = [0, 32], sizes = [64, 16], strides = [1, 1]} : vector<64x128xbf16> to vector<64x16xbf16>
    %47 = vector.shape_cast %46 : vector<64x16xbf16> to vector<4x16x16xbf16>
    %cst_14 = arith.constant dense<0.000000e+00> : vector<4x16x16xf32>
    %48 = tpu.matmul %45, %47, %cst_14 {dimension_numbers = #tpu.dot_dimension_numbers<[2], [2], [1], [1], [0, 0, 0, 1, 1, 1], [0], [0]>} : vector<4x16x16xbf16>, vector<4x16x16xbf16>, vector<4x16x16xf32> -> vector<4x16x16xf32>
    %49 = arith.addf %48, %19 : vector<4x16x16xf32>
    %cst_15 = arith.constant dense<0xFF800000> : vector<4x16xf32>
    %50 = vector.multi_reduction <maximumf>, %49, %cst_15 [2] : vector<4x16x16xf32> to vector<4x16xf32>
    %51 = vector.shape_cast %50 : vector<4x16xf32> to vector<4x16x1xf32>
    %52 = vector.broadcast %51 : vector<4x16x1xf32> to vector<4x16x16xf32>
    %53 = arith.subf %49, %52 : vector<4x16x16xf32>
    %54 = vector.shape_cast %53 : vector<4x16x16xf32> to vector<64x16xf32>
    %c0_16 = arith.constant 0 : index
    %c32 = arith.constant 32 : index
    %55 = vector.load %arg12[%c0_16, %c32] : memref<64x128xf32, #tpu.memory_space<vmem>>, vector<64x16xf32>
    tpu.vector_store %arg12[%c0_16, %c32], %54 {strides = array<i32>} : memref<64x128xf32, #tpu.memory_space<vmem>>, vector<64x16xf32>,
    %56 = vector.extract_strided_slice %7 {offsets = [0, 48], sizes = [64, 16], strides = [1, 1]} : vector<64x128xbf16> to vector<64x16xbf16>
    %57 = vector.shape_cast %56 : vector<64x16xbf16> to vector<4x16x16xbf16>
    %58 = vector.extract_strided_slice %9 {offsets = [0, 48], sizes = [64, 16], strides = [1, 1]} : vector<64x128xbf16> to vector<64x16xbf16>
    %59 = vector.shape_cast %58 : vector<64x16xbf16> to vector<4x16x16xbf16>
    %cst_17 = arith.constant dense<0.000000e+00> : vector<4x16x16xf32>
    %60 = tpu.matmul %57, %59, %cst_17 {dimension_numbers = #tpu.dot_dimension_numbers<[2], [2], [1], [1], [0, 0, 0, 1, 1, 1], [0], [0]>} : vector<4x16x16xbf16>, vector<4x16x16xbf16>, vector<4x16x16xf32> -> vector<4x16x16xf32>
    %61 = arith.addf %60, %19 : vector<4x16x16xf32>
    %cst_18 = arith.constant dense<0xFF800000> : vector<4x16xf32>
    %62 = vector.multi_reduction <maximumf>, %61, %cst_18 [2] : vector<4x16x16xf32> to vector<4x16xf32>
    %63 = vector.shape_cast %62 : vector<4x16xf32> to vector<4x16x1xf32>
    %64 = vector.broadcast %63 : vector<4x16x1xf32> to vector<4x16x16xf32>
    %65 = arith.subf %61, %64 : vector<4x16x16xf32>
    %66 = vector.shape_cast %65 : vector<4x16x16xf32> to vector<64x16xf32>
    %c0_19 = arith.constant 0 : index
    %c48 = arith.constant 48 : index
    %67 = vector.load %arg12[%c0_19, %c48] : memref<64x128xf32, #tpu.memory_space<vmem>>, vector<64x16xf32>
    tpu.vector_store %arg12[%c0_19, %c48], %66 {strides = array<i32>} : memref<64x128xf32, #tpu.memory_space<vmem>>, vector<64x16xf32>,
    %68 = vector.extract_strided_slice %7 {offsets = [0, 64], sizes = [64, 16], strides = [1, 1]} : vector<64x128xbf16> to vector<64x16xbf16>
    %69 = vector.shape_cast %68 : vector<64x16xbf16> to vector<4x16x16xbf16>
    %70 = vector.extract_strided_slice %9 {offsets = [0, 64], sizes = [64, 16], strides = [1, 1]} : vector<64x128xbf16> to vector<64x16xbf16>
    %71 = vector.shape_cast %70 : vector<64x16xbf16> to vector<4x16x16xbf16>
    %cst_20 = arith.constant dense<0.000000e+00> : vector<4x16x16xf32>
    %72 = tpu.matmul %69, %71, %cst_20 {dimension_numbers = #tpu.dot_dimension_numbers<[2], [2], [1], [1], [0, 0, 0, 1, 1, 1], [0], [0]>} : vector<4x16x16xbf16>, vector<4x16x16xbf16>, vector<4x16x16xf32> -> vector<4x16x16xf32>
    %73 = arith.addf %72, %19 : vector<4x16x16xf32>
    %cst_21 = arith.constant dense<0xFF800000> : vector<4x16xf32>
    %74 = vector.multi_reduction <maximumf>, %73, %cst_21 [2] : vector<4x16x16xf32> to vector<4x16xf32>
    %75 = vector.shape_cast %74 : vector<4x16xf32> to vector<4x16x1xf32>
    %76 = vector.broadcast %75 : vector<4x16x1xf32> to vector<4x16x16xf32>
    %77 = arith.subf %73, %76 : vector<4x16x16xf32>
    %78 = vector.shape_cast %77 : vector<4x16x16xf32> to vector<64x16xf32>
    %c0_22 = arith.constant 0 : index
    %c64 = arith.constant 64 : index
    %79 = vector.load %arg12[%c0_22, %c64] : memref<64x128xf32, #tpu.memory_space<vmem>>, vector<64x16xf32>
    tpu.vector_store %arg12[%c0_22, %c64], %78 {strides = array<i32>} : memref<64x128xf32, #tpu.memory_space<vmem>>, vector<64x16xf32>,
    %80 = vector.extract_strided_slice %7 {offsets = [0, 80], sizes = [64, 16], strides = [1, 1]} : vector<64x128xbf16> to vector<64x16xbf16>
    %81 = vector.shape_cast %80 : vector<64x16xbf16> to vector<4x16x16xbf16>
    %82 = vector.extract_strided_slice %9 {offsets = [0, 80], sizes = [64, 16], strides = [1, 1]} : vector<64x128xbf16> to vector<64x16xbf16>
    %83 = vector.shape_cast %82 : vector<64x16xbf16> to vector<4x16x16xbf16>
    %cst_23 = arith.constant dense<0.000000e+00> : vector<4x16x16xf32>
    %84 = tpu.matmul %81, %83, %cst_23 {dimension_numbers = #tpu.dot_dimension_numbers<[2], [2], [1], [1], [0, 0, 0, 1, 1, 1], [0], [0]>} : vector<4x16x16xbf16>, vector<4x16x16xbf16>, vector<4x16x16xf32> -> vector<4x16x16xf32>
    %85 = arith.addf %84, %19 : vector<4x16x16xf32>
    %cst_24 = arith.constant dense<0xFF800000> : vector<4x16xf32>
    %86 = vector.multi_reduction <maximumf>, %85, %cst_24 [2] : vector<4x16x16xf32> to vector<4x16xf32>
    %87 = vector.shape_cast %86 : vector<4x16xf32> to vector<4x16x1xf32>
    %88 = vector.broadcast %87 : vector<4x16x1xf32> to vector<4x16x16xf32>
    %89 = arith.subf %85, %88 : vector<4x16x16xf32>
    %90 = vector.shape_cast %89 : vector<4x16x16xf32> to vector<64x16xf32>
    %c0_25 = arith.constant 0 : index
    %c80 = arith.constant 80 : index
    %91 = vector.load %arg12[%c0_25, %c80] : memref<64x128xf32, #tpu.memory_space<vmem>>, vector<64x16xf32>
    tpu.vector_store %arg12[%c0_25, %c80], %90 {strides = array<i32>} : memref<64x128xf32, #tpu.memory_space<vmem>>, vector<64x16xf32>,
    %92 = vector.extract_strided_slice %7 {offsets = [0, 96], sizes = [64, 16], strides = [1, 1]} : vector<64x128xbf16> to vector<64x16xbf16>
    %93 = vector.shape_cast %92 : vector<64x16xbf16> to vector<4x16x16xbf16>
    %94 = vector.extract_strided_slice %9 {offsets = [0, 96], sizes = [64, 16], strides = [1, 1]} : vector<64x128xbf16> to vector<64x16xbf16>
    %95 = vector.shape_cast %94 : vector<64x16xbf16> to vector<4x16x16xbf16>
    %cst_26 = arith.constant dense<0.000000e+00> : vector<4x16x16xf32>
    %96 = tpu.matmul %93, %95, %cst_26 {dimension_numbers = #tpu.dot_dimension_numbers<[2], [2], [1], [1], [0, 0, 0, 1, 1, 1], [0], [0]>} : vector<4x16x16xbf16>, vector<4x16x16xbf16>, vector<4x16x16xf32> -> vector<4x16x16xf32>
    %97 = arith.addf %96, %19 : vector<4x16x16xf32>
    %cst_27 = arith.constant dense<0xFF800000> : vector<4x16xf32>
    %98 = vector.multi_reduction <maximumf>, %97, %cst_27 [2] : vector<4x16x16xf32> to vector<4x16xf32>
    %99 = vector.shape_cast %98 : vector<4x16xf32> to vector<4x16x1xf32>
    %100 = vector.broadcast %99 : vector<4x16x1xf32> to vector<4x16x16xf32>
    %101 = arith.subf %97, %100 : vector<4x16x16xf32>
    %102 = vector.shape_cast %101 : vector<4x16x16xf32> to vector<64x16xf32>
    %c0_28 = arith.constant 0 : index
    %c96 = arith.constant 96 : index
    %103 = vector.load %arg12[%c0_28, %c96] : memref<64x128xf32, #tpu.memory_space<vmem>>, vector<64x16xf32>
    tpu.vector_store %arg12[%c0_28, %c96], %102 {strides = array<i32>} : memref<64x128xf32, #tpu.memory_space<vmem>>, vector<64x16xf32>,
    %104 = vector.extract_strided_slice %7 {offsets = [0, 112], sizes = [64, 16], strides = [1, 1]} : vector<64x128xbf16> to vector<64x16xbf16>
    %105 = vector.shape_cast %104 : vector<64x16xbf16> to vector<4x16x16xbf16>
    %106 = vector.extract_strided_slice %9 {offsets = [0, 112], sizes = [64, 16], strides = [1, 1]} : vector<64x128xbf16> to vector<64x16xbf16>
    %107 = vector.shape_cast %106 : vector<64x16xbf16> to vector<4x16x16xbf16>
    %cst_29 = arith.constant dense<0.000000e+00> : vector<4x16x16xf32>
    %108 = tpu.matmul %105, %107, %cst_29 {dimension_numbers = #tpu.dot_dimension_numbers<[2], [2], [1], [1], [0, 0, 0, 1, 1, 1], [0], [0]>} : vector<4x16x16xbf16>, vector<4x16x16xbf16>, vector<4x16x16xf32> -> vector<4x16x16xf32>
    %109 = arith.addf %108, %19 : vector<4x16x16xf32>
    %cst_30 = arith.constant dense<0xFF800000> : vector<4x16xf32>
    %110 = vector.multi_reduction <maximumf>, %109, %cst_30 [2] : vector<4x16x16xf32> to vector<4x16xf32>
    %111 = vector.shape_cast %110 : vector<4x16xf32> to vector<4x16x1xf32>
    %112 = vector.broadcast %111 : vector<4x16x1xf32> to vector<4x16x16xf32>
    %113 = arith.subf %109, %112 : vector<4x16x16xf32>
    %114 = vector.shape_cast %113 : vector<4x16x16xf32> to vector<64x16xf32>
    %c0_31 = arith.constant 0 : index
    %c112 = arith.constant 112 : index
    %115 = vector.load %arg12[%c0_31, %c112] : memref<64x128xf32, #tpu.memory_space<vmem>>, vector<64x16xf32>
    tpu.vector_store %arg12[%c0_31, %c112], %114 {strides = array<i32>} : memref<64x128xf32, #tpu.memory_space<vmem>>, vector<64x16xf32>,
    %c0_32 = arith.constant 0 : index
    %c0_33 = arith.constant 0 : index
    %116 = vector.load %arg12[%c0_32, %c0_33] : memref<64x128xf32, #tpu.memory_space<vmem>>, vector<64x128xf32>
    %117 = math.exp %116 : vector<64x128xf32>
    %c0_34 = arith.constant 0 : index
    %c0_35 = arith.constant 0 : index
    %118 = vector.load %arg6[%c0_34, %c0_35] : memref<128x128xf32, #tpu.memory_space<vmem>>, vector<128x128xf32>
    %cst_36 = arith.constant dense<0.000000e+00> : vector<64x128xf32>
    %119 = tpu.matmul %117, %118, %cst_36 {dimension_numbers = #tpu.dot_dimension_numbers<[1], [0], [0], [1], [0, 0, 1, 1], [], []>} : vector<64x128xf32>, vector<128x128xf32>, vector<64x128xf32> -> vector<64x128xf32>
    %120 = tpu.reciprocal %119 {approx = true} : vector<64x128xf32> -> vector<64x128xf32>
    %121 = arith.mulf %117, %120 : vector<64x128xf32>
    %c0_37 = arith.constant 0 : index
    %c0_38 = arith.constant 0 : index
    %122 = vector.load %arg7[%c0_37, %c0_38] : memref<128x128xf32, #tpu.memory_space<vmem>>, vector<128x128xf32>
    %cst_39 = arith.constant dense<0.000000e+00> : vector<64x128xf32>
    %123 = tpu.matmul %121, %122, %cst_39 {dimension_numbers = #tpu.dot_dimension_numbers<[1], [0], [0], [1], [0, 0, 1, 1], [], []>} : vector<64x128xf32>, vector<128x128xf32>, vector<64x128xf32> -> vector<64x128xf32>
    %c0_40 = arith.constant 0 : index
    %c0_41 = arith.constant 0 : index
    %124 = vector.load %arg8[%c0_40, %c0_41] : memref<128x128xf32, #tpu.memory_space<vmem>>, vector<128x128xf32>
    %cst_42 = arith.constant dense<0.000000e+00> : vector<64x128xf32>
    %125 = tpu.matmul %123, %124, %cst_42 {dimension_numbers = #tpu.dot_dimension_numbers<[1], [0], [0], [1], [0, 0, 1, 1], [], []>} : vector<64x128xf32>, vector<128x128xf32>, vector<64x128xf32> -> vector<64x128xf32>
    %126 = arith.subf %123, %125 : vector<64x128xf32>
    %127 = arith.mulf %126, %126 : vector<64x128xf32>
    %c0_43 = arith.constant 0 : index
    %c0_44 = arith.constant 0 : index
    %128 = vector.load %arg8[%c0_43, %c0_44] : memref<128x128xf32, #tpu.memory_space<vmem>>, vector<128x128xf32>
    %cst_45 = arith.constant dense<0.000000e+00> : vector<64x128xf32>
    %129 = tpu.matmul %127, %128, %cst_45 {dimension_numbers = #tpu.dot_dimension_numbers<[1], [0], [0], [1], [0, 0, 1, 1], [], []>} : vector<64x128xf32>, vector<128x128xf32>, vector<64x128xf32> -> vector<64x128xf32>
    %cst_46 = arith.constant 9.99999974E-6 : f32
    %130 = vector.broadcast %cst_46 : f32 to vector<64x128xf32>
    %131 = arith.addf %129, %130 : vector<64x128xf32>
    %132 = math.rsqrt %131 : vector<64x128xf32>
    %133 = arith.mulf %126, %132 : vector<64x128xf32>
    %c0_47 = arith.constant 0 : index
    %c0_48 = arith.constant 0 : index
    %134 = vector.load %arg4[%c0_47, %c0_48] : memref<1x128xf32, #tpu.memory_space<vmem>>, vector<1x128xf32>
    %135 = vector.broadcast %134 : vector<1x128xf32> to vector<64x128xf32>
    %136 = arith.mulf %133, %135 : vector<64x128xf32>
    %c0_49 = arith.constant 0 : index
    %c0_50 = arith.constant 0 : index
    %137 = vector.load %arg5[%c0_49, %c0_50] : memref<1x128xf32, #tpu.memory_space<vmem>>, vector<1x128xf32>
    %138 = vector.broadcast %137 : vector<1x128xf32> to vector<64x128xf32>
    %139 = arith.addf %136, %138 : vector<64x128xf32>
    %140 = arith.truncf %139 : vector<64x128xf32> to vector<64x128xbf16>
    %141 = vector.extract_strided_slice %140 {offsets = [0, 0], sizes = [64, 16], strides = [1, 1]} : vector<64x128xbf16> to vector<64x16xbf16>
    %142 = vector.shape_cast %141 : vector<64x16xbf16> to vector<4x16x16xbf16>
    %143 = vector.extract_strided_slice %11 {offsets = [0, 0], sizes = [64, 16], strides = [1, 1]} : vector<64x128xbf16> to vector<64x16xbf16>
    %144 = vector.shape_cast %143 : vector<64x16xbf16> to vector<4x16x16xbf16>
    %cst_51 = arith.constant dense<0.000000e+00> : vector<4x16x16xf32>
    %145 = tpu.matmul %142, %144, %cst_51 {dimension_numbers = #tpu.dot_dimension_numbers<[2], [1], [1], [2], [0, 0, 0, 1, 1, 2], [0], [0]>} : vector<4x16x16xbf16>, vector<4x16x16xbf16>, vector<4x16x16xf32> -> vector<4x16x16xf32>
    %146 = vector.shape_cast %145 : vector<4x16x16xf32> to vector<64x16xf32>
    %147 = arith.truncf %146 : vector<64x16xf32> to vector<64x16xbf16>
    %c0_52 = arith.constant 0 : index
    %c0_53 = arith.constant 0 : index
    %148 = vector.load %arg13[%c0_52, %c0_53] : memref<64x128xbf16, #tpu.memory_space<vmem>>, vector<64x16xbf16>
    tpu.vector_store %arg13[%c0_52, %c0_53], %147 {strides = array<i32>} : memref<64x128xbf16, #tpu.memory_space<vmem>>, vector<64x16xbf16>,
    %149 = vector.extract_strided_slice %140 {offsets = [0, 16], sizes = [64, 16], strides = [1, 1]} : vector<64x128xbf16> to vector<64x16xbf16>
    %150 = vector.shape_cast %149 : vector<64x16xbf16> to vector<4x16x16xbf16>
    %151 = vector.extract_strided_slice %11 {offsets = [0, 16], sizes = [64, 16], strides = [1, 1]} : vector<64x128xbf16> to vector<64x16xbf16>
    %152 = vector.shape_cast %151 : vector<64x16xbf16> to vector<4x16x16xbf16>
    %cst_54 = arith.constant dense<0.000000e+00> : vector<4x16x16xf32>
    %153 = tpu.matmul %150, %152, %cst_54 {dimension_numbers = #tpu.dot_dimension_numbers<[2], [1], [1], [2], [0, 0, 0, 1, 1, 2], [0], [0]>} : vector<4x16x16xbf16>, vector<4x16x16xbf16>, vector<4x16x16xf32> -> vector<4x16x16xf32>
    %154 = vector.shape_cast %153 : vector<4x16x16xf32> to vector<64x16xf32>
    %155 = arith.truncf %154 : vector<64x16xf32> to vector<64x16xbf16>
    %c0_55 = arith.constant 0 : index
    %c16_56 = arith.constant 16 : index
    %156 = vector.load %arg13[%c0_55, %c16_56] : memref<64x128xbf16, #tpu.memory_space<vmem>>, vector<64x16xbf16>
    tpu.vector_store %arg13[%c0_55, %c16_56], %155 {strides = array<i32>} : memref<64x128xbf16, #tpu.memory_space<vmem>>, vector<64x16xbf16>,
    %157 = vector.extract_strided_slice %140 {offsets = [0, 32], sizes = [64, 16], strides = [1, 1]} : vector<64x128xbf16> to vector<64x16xbf16>
    %158 = vector.shape_cast %157 : vector<64x16xbf16> to vector<4x16x16xbf16>
    %159 = vector.extract_strided_slice %11 {offsets = [0, 32], sizes = [64, 16], strides = [1, 1]} : vector<64x128xbf16> to vector<64x16xbf16>
    %160 = vector.shape_cast %159 : vector<64x16xbf16> to vector<4x16x16xbf16>
    %cst_57 = arith.constant dense<0.000000e+00> : vector<4x16x16xf32>
    %161 = tpu.matmul %158, %160, %cst_57 {dimension_numbers = #tpu.dot_dimension_numbers<[2], [1], [1], [2], [0, 0, 0, 1, 1, 2], [0], [0]>} : vector<4x16x16xbf16>, vector<4x16x16xbf16>, vector<4x16x16xf32> -> vector<4x16x16xf32>
    %162 = vector.shape_cast %161 : vector<4x16x16xf32> to vector<64x16xf32>
    %163 = arith.truncf %162 : vector<64x16xf32> to vector<64x16xbf16>
    %c0_58 = arith.constant 0 : index
    %c32_59 = arith.constant 32 : index
    %164 = vector.load %arg13[%c0_58, %c32_59] : memref<64x128xbf16, #tpu.memory_space<vmem>>, vector<64x16xbf16>
    tpu.vector_store %arg13[%c0_58, %c32_59], %163 {strides = array<i32>} : memref<64x128xbf16, #tpu.memory_space<vmem>>, vector<64x16xbf16>,
    %165 = vector.extract_strided_slice %140 {offsets = [0, 48], sizes = [64, 16], strides = [1, 1]} : vector<64x128xbf16> to vector<64x16xbf16>
    %166 = vector.shape_cast %165 : vector<64x16xbf16> to vector<4x16x16xbf16>
    %167 = vector.extract_strided_slice %11 {offsets = [0, 48], sizes = [64, 16], strides = [1, 1]} : vector<64x128xbf16> to vector<64x16xbf16>
    %168 = vector.shape_cast %167 : vector<64x16xbf16> to vector<4x16x16xbf16>
    %cst_60 = arith.constant dense<0.000000e+00> : vector<4x16x16xf32>
    %169 = tpu.matmul %166, %168, %cst_60 {dimension_numbers = #tpu.dot_dimension_numbers<[2], [1], [1], [2], [0, 0, 0, 1, 1, 2], [0], [0]>} : vector<4x16x16xbf16>, vector<4x16x16xbf16>, vector<4x16x16xf32> -> vector<4x16x16xf32>
    %170 = vector.shape_cast %169 : vector<4x16x16xf32> to vector<64x16xf32>
    %171 = arith.truncf %170 : vector<64x16xf32> to vector<64x16xbf16>
    %c0_61 = arith.constant 0 : index
    %c48_62 = arith.constant 48 : index
    %172 = vector.load %arg13[%c0_61, %c48_62] : memref<64x128xbf16, #tpu.memory_space<vmem>>, vector<64x16xbf16>
    tpu.vector_store %arg13[%c0_61, %c48_62], %171 {strides = array<i32>} : memref<64x128xbf16, #tpu.memory_space<vmem>>, vector<64x16xbf16>,
    %173 = vector.extract_strided_slice %140 {offsets = [0, 64], sizes = [64, 16], strides = [1, 1]} : vector<64x128xbf16> to vector<64x16xbf16>
    %174 = vector.shape_cast %173 : vector<64x16xbf16> to vector<4x16x16xbf16>
    %175 = vector.extract_strided_slice %11 {offsets = [0, 64], sizes = [64, 16], strides = [1, 1]} : vector<64x128xbf16> to vector<64x16xbf16>
    %176 = vector.shape_cast %175 : vector<64x16xbf16> to vector<4x16x16xbf16>
    %cst_63 = arith.constant dense<0.000000e+00> : vector<4x16x16xf32>
    %177 = tpu.matmul %174, %176, %cst_63 {dimension_numbers = #tpu.dot_dimension_numbers<[2], [1], [1], [2], [0, 0, 0, 1, 1, 2], [0], [0]>} : vector<4x16x16xbf16>, vector<4x16x16xbf16>, vector<4x16x16xf32> -> vector<4x16x16xf32>
    %178 = vector.shape_cast %177 : vector<4x16x16xf32> to vector<64x16xf32>
    %179 = arith.truncf %178 : vector<64x16xf32> to vector<64x16xbf16>
    %c0_64 = arith.constant 0 : index
    %c64_65 = arith.constant 64 : index
    %180 = vector.load %arg13[%c0_64, %c64_65] : memref<64x128xbf16, #tpu.memory_space<vmem>>, vector<64x16xbf16>
    tpu.vector_store %arg13[%c0_64, %c64_65], %179 {strides = array<i32>} : memref<64x128xbf16, #tpu.memory_space<vmem>>, vector<64x16xbf16>,
    %181 = vector.extract_strided_slice %140 {offsets = [0, 80], sizes = [64, 16], strides = [1, 1]} : vector<64x128xbf16> to vector<64x16xbf16>
    %182 = vector.shape_cast %181 : vector<64x16xbf16> to vector<4x16x16xbf16>
    %183 = vector.extract_strided_slice %11 {offsets = [0, 80], sizes = [64, 16], strides = [1, 1]} : vector<64x128xbf16> to vector<64x16xbf16>
    %184 = vector.shape_cast %183 : vector<64x16xbf16> to vector<4x16x16xbf16>
    %cst_66 = arith.constant dense<0.000000e+00> : vector<4x16x16xf32>
    %185 = tpu.matmul %182, %184, %cst_66 {dimension_numbers = #tpu.dot_dimension_numbers<[2], [1], [1], [2], [0, 0, 0, 1, 1, 2], [0], [0]>} : vector<4x16x16xbf16>, vector<4x16x16xbf16>, vector<4x16x16xf32> -> vector<4x16x16xf32>
    %186 = vector.shape_cast %185 : vector<4x16x16xf32> to vector<64x16xf32>
    %187 = arith.truncf %186 : vector<64x16xf32> to vector<64x16xbf16>
    %c0_67 = arith.constant 0 : index
    %c80_68 = arith.constant 80 : index
    %188 = vector.load %arg13[%c0_67, %c80_68] : memref<64x128xbf16, #tpu.memory_space<vmem>>, vector<64x16xbf16>
    tpu.vector_store %arg13[%c0_67, %c80_68], %187 {strides = array<i32>} : memref<64x128xbf16, #tpu.memory_space<vmem>>, vector<64x16xbf16>,
    %189 = vector.extract_strided_slice %140 {offsets = [0, 96], sizes = [64, 16], strides = [1, 1]} : vector<64x128xbf16> to vector<64x16xbf16>
    %190 = vector.shape_cast %189 : vector<64x16xbf16> to vector<4x16x16xbf16>
    %191 = vector.extract_strided_slice %11 {offsets = [0, 96], sizes = [64, 16], strides = [1, 1]} : vector<64x128xbf16> to vector<64x16xbf16>
    %192 = vector.shape_cast %191 : vector<64x16xbf16> to vector<4x16x16xbf16>
    %cst_69 = arith.constant dense<0.000000e+00> : vector<4x16x16xf32>
    %193 = tpu.matmul %190, %192, %cst_69 {dimension_numbers = #tpu.dot_dimension_numbers<[2], [1], [1], [2], [0, 0, 0, 1, 1, 2], [0], [0]>} : vector<4x16x16xbf16>, vector<4x16x16xbf16>, vector<4x16x16xf32> -> vector<4x16x16xf32>
    %194 = vector.shape_cast %193 : vector<4x16x16xf32> to vector<64x16xf32>
    %195 = arith.truncf %194 : vector<64x16xf32> to vector<64x16xbf16>
    %c0_70 = arith.constant 0 : index
    %c96_71 = arith.constant 96 : index
    %196 = vector.load %arg13[%c0_70, %c96_71] : memref<64x128xbf16, #tpu.memory_space<vmem>>, vector<64x16xbf16>
    tpu.vector_store %arg13[%c0_70, %c96_71], %195 {strides = array<i32>} : memref<64x128xbf16, #tpu.memory_space<vmem>>, vector<64x16xbf16>,
    %197 = vector.extract_strided_slice %140 {offsets = [0, 112], sizes = [64, 16], strides = [1, 1]} : vector<64x128xbf16> to vector<64x16xbf16>
    %198 = vector.shape_cast %197 : vector<64x16xbf16> to vector<4x16x16xbf16>
    %199 = vector.extract_strided_slice %11 {offsets = [0, 112], sizes = [64, 16], strides = [1, 1]} : vector<64x128xbf16> to vector<64x16xbf16>
    %200 = vector.shape_cast %199 : vector<64x16xbf16> to vector<4x16x16xbf16>
    %cst_72 = arith.constant dense<0.000000e+00> : vector<4x16x16xf32>
    %201 = tpu.matmul %198, %200, %cst_72 {dimension_numbers = #tpu.dot_dimension_numbers<[2], [1], [1], [2], [0, 0, 0, 1, 1, 2], [0], [0]>} : vector<4x16x16xbf16>, vector<4x16x16xbf16>, vector<4x16x16xf32> -> vector<4x16x16xf32>
    %202 = vector.shape_cast %201 : vector<4x16x16xf32> to vector<64x16xf32>
    %203 = arith.truncf %202 : vector<64x16xf32> to vector<64x16xbf16>
    %c0_73 = arith.constant 0 : index
    %c112_74 = arith.constant 112 : index
    %204 = vector.load %arg13[%c0_73, %c112_74] : memref<64x128xbf16, #tpu.memory_space<vmem>>, vector<64x16xbf16>
    tpu.vector_store %arg13[%c0_73, %c112_74], %203 {strides = array<i32>} : memref<64x128xbf16, #tpu.memory_space<vmem>>, vector<64x16xbf16>,
    %c0_75 = arith.constant 0 : index
    %c0_76 = arith.constant 0 : index
    %205 = vector.load %arg13[%c0_75, %c0_76] : memref<64x128xbf16, #tpu.memory_space<vmem>>, vector<64x128xbf16>
    %c0_77 = arith.constant 0 : index
    %c0_78 = arith.constant 0 : index
    %206 = vector.load %arg9[%c0_77, %c0_78] : memref<128x32xbf16, #tpu.memory_space<vmem>>, vector<128x32xbf16>
    %cst_79 = arith.constant dense<0.000000e+00> : vector<64x32xf32>
    %207 = tpu.matmul %205, %206, %cst_79 {dimension_numbers = #tpu.dot_dimension_numbers<[1], [0], [0], [1], [0, 0, 1, 1], [], []>} : vector<64x128xbf16>, vector<128x32xbf16>, vector<64x32xf32> -> vector<64x32xf32>
    %c0_80 = arith.constant 0 : index
    %c0_81 = arith.constant 0 : index
    %208 = vector.load %arg10[%c0_80, %c0_81] : memref<1x32xf32, #tpu.memory_space<vmem>>, vector<1x32xf32>
    %209 = vector.broadcast %208 : vector<1x32xf32> to vector<64x32xf32>
    %210 = arith.addf %207, %209 : vector<64x32xf32>
    %c0_82 = arith.constant 0 : index
    %c0_83 = arith.constant 0 : index
    %211 = vector.load %arg11[%c0_82, %c0_83] : memref<64x32xf32, #tpu.memory_space<vmem>>, vector<64x32xf32>
    tpu.vector_store %arg11[%c0_82, %c0_83], %210 {strides = array<i32>} : memref<64x32xf32, #tpu.memory_space<vmem>>, vector<64x32xf32>,
    return
  }
  func.func @transform_0(%arg0: i32) -> (i32, i32) {
    %c0_i32 = arith.constant 0 : i32
    %c0_i32_0 = arith.constant 0 : i32
    return %arg0, %c0_i32 : i32, i32
  }
  func.func @transform_1(%arg0: i32) -> (i32, i32) {
    %c0_i32 = arith.constant 0 : i32
    %c0_i32_0 = arith.constant 0 : i32
    %c0_i32_1 = arith.constant 0 : i32
    return %c0_i32, %c0_i32_0 : i32, i32
  }
  func.func @transform_2(%arg0: i32) -> (i32, i32) {
    %c0_i32 = arith.constant 0 : i32
    %c0_i32_0 = arith.constant 0 : i32
    %c0_i32_1 = arith.constant 0 : i32
    return %c0_i32, %c0_i32_0 : i32, i32
  }
  func.func @transform_3(%arg0: i32) -> (i32, i32) {
    %c0_i32 = arith.constant 0 : i32
    %c0_i32_0 = arith.constant 0 : i32
    %c0_i32_1 = arith.constant 0 : i32
    return %c0_i32, %c0_i32_0 : i32, i32
  }
  func.func @transform_4(%arg0: i32) -> (i32, i32) {
    %c0_i32 = arith.constant 0 : i32
    %c0_i32_0 = arith.constant 0 : i32
    %c0_i32_1 = arith.constant 0 : i32
    return %c0_i32, %c0_i32_0 : i32, i32
  }
  func.func @transform_5(%arg0: i32) -> (i32, i32) {
    %c0_i32 = arith.constant 0 : i32
    %c0_i32_0 = arith.constant 0 : i32
    %c0_i32_1 = arith.constant 0 : i32
    return %c0_i32, %c0_i32_0 : i32, i32
  }
  func.func @transform_6(%arg0: i32) -> (i32, i32) {
    %c0_i32 = arith.constant 0 : i32
    %c0_i32_0 = arith.constant 0 : i32
    %c0_i32_1 = arith.constant 0 : i32
    return %c0_i32, %c0_i32_0 : i32, i32
  }
  func.func @transform_7(%arg0: i32) -> (i32, i32) {
    %c0_i32 = arith.constant 0 : i32
    %c0_i32_0 = arith.constant 0 : i32
    %c0_i32_1 = arith.constant 0 : i32
    return %c0_i32, %c0_i32_0 : i32, i32
  }
  func.func @transform_8(%arg0: i32) -> (i32, i32) {
    %c0_i32 = arith.constant 0 : i32
    %c0_i32_0 = arith.constant 0 : i32
    %c0_i32_1 = arith.constant 0 : i32
    return %c0_i32, %c0_i32_0 : i32, i32
  }
  func.func @transform_9(%arg0: i32) -> (i32, i32) {
    %c0_i32 = arith.constant 0 : i32
    %c0_i32_0 = arith.constant 0 : i32
    %c0_i32_1 = arith.constant 0 : i32
    return %c0_i32, %c0_i32_0 : i32, i32
  }
  func.func @transform_10(%arg0: i32) -> (i32, i32) {
    %c0_i32 = arith.constant 0 : i32
    %c0_i32_0 = arith.constant 0 : i32
    return %arg0, %c0_i32 : i32, i32
  }
}

</mosaic_0001>

<llo_original>
// kernel: tpu_custom_call.1
$region0: #{tpu_custom_call.1}
  #allocation0 [shape = 'u32[]', space=smem, size = 0x4, offset = 0x4, fixed_abs, tag = 'smem constant byte address 0x4 - core index']
  #allocation1 [shape = 'u32[72,128]{1,0:T(1,128)}', space=vmem, size = 0x9000, scoped, tag = 'internal scratch']
  #allocation2 [shape = 'f32[64,128]{1,0:T(8,128)}', space=vmem, size = 0x8000, scoped, tag = 'scratch operand']
  #allocation3 [shape = 'bf16[64,128]{1,0:T(8,128)(2,1)}', space=vmem, size = 0x4000, scoped, tag = 'scratch operand']
  %s0 = inlined_call_operand.vmem [shape: bf16[64,32], index: 0, kind: input, shape index: {}]
  %s1 = inlined_call_operand.vmem [shape: bf16[32,384], index: 1, kind: input, shape index: {}]
  %s2 = inlined_call_operand.vmem [shape: f32[1,128], index: 2, kind: input, shape index: {}]
  %s3 = inlined_call_operand.vmem [shape: f32[1,128], index: 3, kind: input, shape index: {}]
  %s4 = inlined_call_operand.vmem [shape: f32[1,128], index: 4, kind: input, shape index: {}]
  %s5 = inlined_call_operand.hbm [shape: f32[128,128], index: 5, kind: input, shape index: {}]
  %s6 = inlined_call_operand.hbm [shape: f32[128,128], index: 6, kind: input, shape index: {}]
  %s7 = inlined_call_operand.hbm [shape: f32[128,128], index: 7, kind: input, shape index: {}]
  %s8 = inlined_call_operand.vmem [shape: bf16[128,32], index: 8, kind: input, shape index: {}]
  %s9 = inlined_call_operand.vmem [shape: f32[1,32], index: 9, kind: input, shape index: {}]
  %s10 = inlined_call_operand.vmem [shape: f32[64,32], index: 10, kind: output, shape index: {}]
  %s11 = sld [smem:[#allocation0]]
  $region62: #{tpu_custom_call.1} parent=0
    _
  %s13 = ssub.s32 1, %s11
  %s14 = scalar_select 0, %s13, %s11
  $region1: #{tpu_custom_call.1} parent=0
    #allocation4 [shape = 'u8[65536]{0}', space=vmem, size = 0x10000, scoped, tag = 'input window, operand 5, single buffered']
    #allocation5 [shape = 's32[1]{0}', space=sflag, size = 0x4, scoped, tag = 'scoped memory for tpu_custom_call.1']
    #allocation6 [shape = 'u8[65536]{0}', space=vmem, size = 0x10000, scoped, tag = 'input window, operand 6, single buffered']
    #allocation7 [shape = 's32[1]{0}', space=sflag, size = 0x4, scoped, tag = 'scoped memory for tpu_custom_call.1']
    #allocation8 [shape = 'u8[65536]{0}', space=vmem, size = 0x10000, scoped, tag = 'input window, operand 7, single buffered']
    %15 = vsyncpa [#allocation5], 0
    %16 = vsyncpa [#allocation7], 0
    // Predicated region
    $region2: #{tpu_custom_call.1} parent=1 // pred_check
      _
    $region3: #{tpu_custom_call.1} parent=1 // pred_check_branch
      %18 = sbr.rel (0) target = $region5
    $region4: #{tpu_custom_call.1} parent=1 // pred_region
      _
    $region5: #{tpu_custom_call.1} parent=1 // pred_fallthru
      _
    // Predicated region
    $region6: #{tpu_custom_call.1} parent=1 // pred_check
      _
    $region7: #{tpu_custom_call.1} parent=1 // pred_check_branch
      %20 = sbr.rel (0) target = $region9
    $region8: #{tpu_custom_call.1} parent=1 // pred_region
      _
    $region9: #{tpu_custom_call.1} parent=1 // pred_fallthru
      _
    // Predicated region
    $region10: #{tpu_custom_call.1} parent=1 // pred_check
      _
    $region11: #{tpu_custom_call.1} parent=1 // pred_check_branch
      %22 = sbr.rel (0) target = $region13
    $region12: #{tpu_custom_call.1} parent=1 // pred_region
      _
    $region13: #{tpu_custom_call.1} parent=1 // pred_fallthru
      _
    // Predicated region
    $region14: #{tpu_custom_call.1} parent=1 // pred_check
      _
    $region15: #{tpu_custom_call.1} parent=1 // pred_check_branch
      %24 = sbr.rel (0) target = $region17
    $region16: #{tpu_custom_call.1} parent=1 // pred_region
      _
    $region17: #{tpu_custom_call.1} parent=1 // pred_fallthru
      _
    // Predicated region
    $region18: #{tpu_custom_call.1} parent=1 // pred_check
      _
    $region19: #{tpu_custom_call.1} parent=1 // pred_check_branch
      %26 = sbr.rel (0) target = $region21
    $region20: #{tpu_custom_call.1} parent=1 // pred_region
      _
    $region21: #{tpu_custom_call.1} parent=1 // pred_fallthru
      _
    // Predicated region
    $region22: #{tpu_custom_call.1} parent=1 // pred_check
      _
    $region23: #{tpu_custom_call.1} parent=1 // pred_check_branch
      %28 = sbr.rel (0) target = $region25
    $region24: #{tpu_custom_call.1} parent=1 // pred_region
      %30 = vsyncadd [#allocation5], 0
      %s31 = sshll.u32 %s5, 4
      %s32 = int_to_ptr.hbm [resolvable:$true] %s31
      %s33 = sshll.u32 [#allocation4], 4
      %s34 = int_to_ptr.vmem [resolvable:$true] %s33
      %39 = dma.hbm_to_vmem [thread:$0]  %s32, 2048, %s34, [#allocation5], 128, 128, 8
    $region25: #{tpu_custom_call.1} parent=1 // pred_fallthru
      _
    // Predicated region
    $region26: #{tpu_custom_call.1} parent=1 // pred_check
      _
    $region27: #{tpu_custom_call.1} parent=1 // pred_check_branch
      %41 = sbr.rel (0) target = $region29
    $region28: #{tpu_custom_call.1} parent=1 // pred_region
      %43 = vsyncadd [#allocation7], 0
      %s44 = sshll.u32 %s6, 4
      %s45 = int_to_ptr.hbm [resolvable:$true] %s44
      %s46 = sshll.u32 [#allocation6], 4
      %s47 = int_to_ptr.vmem [resolvable:$true] %s46
      %52 = dma.hbm_to_vmem [thread:$0]  %s45, 2048, %s47, [#allocation7], 128, 128, 8
    $region29: #{tpu_custom_call.1} parent=1 // pred_fallthru
      _
    // Predicated region
    $region30: #{tpu_custom_call.1} parent=1 // pred_check
      _
    $region31: #{tpu_custom_call.1} parent=1 // pred_check_branch
      %54 = sbr.rel (0) target = $region33
    $region32: #{tpu_custom_call.1} parent=1 // pred_region
      %56 = vsyncadd [#allocation7], 0
      %s57 = sshll.u32 %s7, 4
      %s58 = int_to_ptr.hbm [resolvable:$true] %s57
      %s59 = sshll.u32 [#allocation8], 4
      %s60 = int_to_ptr.vmem [resolvable:$true] %s59
      %65 = dma.hbm_to_vmem [thread:$0]  %s58, 2048, %s60, [#allocation7], 128, 128, 8
    $region33: #{tpu_custom_call.1} parent=1 // pred_fallthru
      _
    // Predicated region
    $region34: #{tpu_custom_call.1} parent=1 // pred_check
      _
    $region35: #{tpu_custom_call.1} parent=1 // pred_check_branch
      %67 = sbr.rel (0) target = $region37
    $region36: #{tpu_custom_call.1} parent=1 // pred_region
      _
    $region37: #{tpu_custom_call.1} parent=1 // pred_fallthru
      _
    // Predicated region
    $region38: #{tpu_custom_call.1} parent=1 // pred_check
      _
    $region39: #{tpu_custom_call.1} parent=1 // pred_check_branch
      %69 = sbr.rel (0) target = $region41
    $region40: #{tpu_custom_call.1} parent=1 // pred_region
      _
    $region41: #{tpu_custom_call.1} parent=1 // pred_fallthru
      _
    // Predicated region
    $region42: #{tpu_custom_call.1} parent=1 // pred_check
      _
    $region43: #{tpu_custom_call.1} parent=1 // pred_check_branch
      %71 = sbr.rel (0) target = $region45
    $region44: #{tpu_custom_call.1} parent=1 // pred_region
      %73 = dma.done [#allocation5], 2048
    $region45: #{tpu_custom_call.1} parent=1 // pred_fallthru
      _
    // Predicated region
    $region46: #{tpu_custom_call.1} parent=1 // pred_check
      _
    $region47: #{tpu_custom_call.1} parent=1 // pred_check_branch
      %75 = sbr.rel (0) target = $region49
    $region48: #{tpu_custom_call.1} parent=1 // pred_region
      %77 = dma.done [#allocation7], 2048
    $region49: #{tpu_custom_call.1} parent=1 // pred_fallthru
      _
    // Predicated region
    $region50: #{tpu_custom_call.1} parent=1 // pred_check
      _
    $region51: #{tpu_custom_call.1} parent=1 // pred_check_branch
      %79 = sbr.rel (0) target = $region53
    $region52: #{tpu_custom_call.1} parent=1 // pred_region
      %81 = dma.done [#allocation7], 2048
    $region53: #{tpu_custom_call.1} parent=1 // pred_fallthru
      _
    %v83 = vld [vmem:[%s0] sm:$0xf]
    %v84 = vld [vmem:[%s0 + $0x4] sm:$0xf]
    %v85 = vld [vmem:[%s0 + $0x8] sm:$0xf]
    %v86 = vld [vmem:[%s0 + $0xc] sm:$0xf]
    %v87 = vld [vmem:[%s0 + $0x10] sm:$0xf]
    %v88 = vld [vmem:[%s0 + $0x14] sm:$0xf]
    %v89 = vld [vmem:[%s0 + $0x18] sm:$0xf]
    %v90 = vld [vmem:[%s0 + $0x1c] sm:$0xf]
    %v91 = vld [vmem:[%s1] sm:$0xff]
    %v92 = vld [vmem:[%s1 + $0x8] sm:$0xf]
    %v93 = vld [vmem:[%s1 + $0xc] sm:$0xff]
    %v94 = vld [vmem:[%s1 + $0x14] sm:$0xf]
    %v95 = vld [vmem:[%s1 + $0x18] sm:$0xff]
    %v96 = vld [vmem:[%s1 + $0x20] sm:$0xf]
    %v97 = vld [vmem:[%s1 + $0x24] sm:$0xff]
    %v98 = vld [vmem:[%s1 + $0x2c] sm:$0xf]
    %v107 = vunpack.c.l.b16 %v83
    %v108 = vunpack.c.l.b16 %v84
    %v109 = vunpack.c.l.b16 %v85
    %v110 = vunpack.c.l.b16 %v86
    %v111 = vunpack.c.l.b16 %v87
    %v112 = vunpack.c.l.b16 %v88
    %v113 = vunpack.c.l.b16 %v89
    %v114 = vunpack.c.l.b16 %v90
    %v115 = vpack.c.b16 %v108, %v107
    %v116 = vpack.c.b16 %v110, %v109
    %v117 = vpack.c.b16 %v112, %v111
    %v118 = vpack.c.b16 %v114, %v113
    %v127 = vunpack.c.l.b16 %v91
    %v128 = vunpack.c.h.b16 %v91
    %v129 = vunpack.c.l.b16 %v92
    %v130 = vunpack.c.l.b16 %v93
    %v131 = vunpack.c.h.b16 %v93
    %v132 = vunpack.c.l.b16 %v94
    %v133 = vunpack.c.l.b16 %v95
    %v134 = vunpack.c.h.b16 %v95
    %v135 = vunpack.c.l.b16 %v96
    %v136 = vunpack.c.l.b16 %v97
    %v137 = vunpack.c.h.b16 %v97
    %v138 = vunpack.c.l.b16 %v98
    %v139 = vpack.c.b16 %v130, %v127
    %v140 = vpack.c.b16 %v131, %v128
    %v141 = vpack.c.b16 %v132, %v129
    %v142 = vpack.c.b16 %v136, %v133
    %v143 = vpack.c.b16 %v137, %v134
    %v144 = vpack.c.b16 %v138, %v135
    %vm151 = vcmask 261120
    %v153 = vsel %vm151, %v115, 0
    %v156 = vsel %vm151, %v116, 0
    %v159 = vsel %vm151, %v117, 0
    %v162 = vsel %vm151, %v118, 0
    %164 = vmatpush.bf16.msra.mxu0 0
    %165 = vmatpush.bf16.msra.mxu0 0
    %166 = vmatpush.bf16.msra.mxu0 0
    %167 = vmatpush.bf16.msra.mxu0 0
    %168 = vmatpush.bf16.msra.mxu0 0
    %169 = vmatpush.bf16.msra.mxu0 0
    %170 = vmatpush.bf16.msra.mxu0 %v142
    %171 = vmatpush.bf16.msra.mxu0 %v139
    %172 = vmatmul.bf16.gmra.mxu0 %v153
    %v173 = vpop.f32.mrf.mxu0
    %v174 = vadd.f32 0.0, %v173
    %v175 = vpop.f32.mrf.mxu0
    %v176 = vadd.f32 0.0, %v175
    %177 = vmatmul.bf16.gmra.mxu0 %v156
    %v178 = vpop.f32.mrf.mxu0
    %v179 = vadd.f32 0.0, %v178
    %v180 = vpop.f32.mrf.mxu0
    %v181 = vadd.f32 0.0, %v180
    %182 = vmatmul.bf16.gmra.mxu0 %v159
    %v183 = vpop.f32.mrf.mxu0
    %v184 = vadd.f32 0.0, %v183
    %v185 = vpop.f32.mrf.mxu0
    %v186 = vadd.f32 0.0, %v185
    %187 = vmatmul.bf16.gmra.mxu0 %v162
    %v188 = vpop.f32.mrf.mxu0
    %v189 = vadd.f32 0.0, %v188
    %v190 = vpop.f32.mrf.mxu0
    %v191 = vadd.f32 0.0, %v190
    %192 = vdwg.mxu0
    %193 = vmatpush.bf16.msra.mxu0 0
    %194 = vmatpush.bf16.msra.mxu0 0
    %195 = vmatpush.bf16.msra.mxu0 0
    %196 = vmatpush.bf16.msra.mxu0 0
    %197 = vmatpush.bf16.msra.mxu0 0
    %198 = vmatpush.bf16.msra.mxu0 0
    %199 = vmatpush.bf16.msra.mxu0 %v143
    %200 = vmatpush.bf16.msra.mxu0 %v140
    %201 = vmatmul.bf16.gmra.mxu0 %v153
    %v202 = vpop.f32.mrf.mxu0
    %v203 = vadd.f32 0.0, %v202
    %v204 = vpop.f32.mrf.mxu0
    %v205 = vadd.f32 0.0, %v204
    %206 = vmatmul.bf16.gmra.mxu0 %v156
    %v207 = vpop.f32.mrf.mxu0
    %v208 = vadd.f32 0.0, %v207
    %v209 = vpop.f32.mrf.mxu0
    %v210 = vadd.f32 0.0, %v209
    %211 = vmatmul.bf16.gmra.mxu0 %v159
    %v212 = vpop.f32.mrf.mxu0
    %v213 = vadd.f32 0.0, %v212
    %v214 = vpop.f32.mrf.mxu0
    %v215 = vadd.f32 0.0, %v214
    %216 = vmatmul.bf16.gmra.mxu0 %v162
    %v217 = vpop.f32.mrf.mxu0
    %v218 = vadd.f32 0.0, %v217
    %v219 = vpop.f32.mrf.mxu0
    %v220 = vadd.f32 0.0, %v219
    %221 = vdwg.mxu0
    %222 = vmatpush.bf16.msra.mxu0 0
    %223 = vmatpush.bf16.msra.mxu0 0
    %224 = vmatpush.bf16.msra.mxu0 0
    %225 = vmatpush.bf16.msra.mxu0 0
    %226 = vmatpush.bf16.msra.mxu0 0
    %227 = vmatpush.bf16.msra.mxu0 0
    %228 = vmatpush.bf16.msra.mxu0 %v144
    %229 = vmatpush.bf16.msra.mxu0 %v141
    %230 = vmatmul.bf16.gmra.mxu0 %v153
    %v231 = vpop.f32.mrf.mxu0
    %v232 = vadd.f32 0.0, %v231
    %v233 = vpop.f32.mrf.mxu0
    %v234 = vadd.f32 0.0, %v233
    %235 = vmatmul.bf16.gmra.mxu0 %v156
    %v236 = vpop.f32.mrf.mxu0
    %v237 = vadd.f32 0.0, %v236
    %v238 = vpop.f32.mrf.mxu0
    %v239 = vadd.f32 0.0, %v238
    %240 = vmatmul.bf16.gmra.mxu0 %v159
    %v241 = vpop.f32.mrf.mxu0
    %v242 = vadd.f32 0.0, %v241
    %v243 = vpop.f32.mrf.mxu0
    %v244 = vadd.f32 0.0, %v243
    %245 = vmatmul.bf16.gmra.mxu0 %v162
    %v246 = vpop.f32.mrf.mxu0
    %v247 = vadd.f32 0.0, %v246
    %v248 = vpop.f32.mrf.mxu0
    %v249 = vadd.f32 0.0, %v248
    %250 = vdwg.mxu0
    %v251 = vld [vmem:[%s2] sm:$0x1]
    %v253 = vperm.slane %v251, 0
    %v255 = vmul.f32 %v174, %v253
    %v256 = vmul.f32 %v176, %v253
    %v257 = vmul.f32 %v179, %v253
    %v258 = vmul.f32 %v181, %v253
    %v259 = vmul.f32 %v184, %v253
    %v260 = vmul.f32 %v186, %v253
    %v261 = vmul.f32 %v189, %v253
    %v262 = vmul.f32 %v191, %v253
    %v263 = vpack.c.bf16 %v255, %v255
    %v264 = vpack.c.bf16 %v256, %v256
    %v265 = vpack.c.bf16 %v257, %v257
    %v266 = vpack.c.bf16 %v258, %v258
    %v267 = vpack.c.bf16 %v259, %v259
    %v268 = vpack.c.bf16 %v260, %v260
    %v269 = vpack.c.bf16 %v261, %v261
    %v270 = vpack.c.bf16 %v262, %v262
    %v271 = vpack.c.bf16 %v203, %v203
    %v272 = vpack.c.bf16 %v205, %v205
    %v273 = vpack.c.bf16 %v208, %v208
    %v274 = vpack.c.bf16 %v210, %v210
    %v275 = vpack.c.bf16 %v213, %v213
    %v276 = vpack.c.bf16 %v215, %v215
    %v277 = vpack.c.bf16 %v218, %v218
    %v278 = vpack.c.bf16 %v220, %v220
    %v279 = vpack.c.bf16 %v232, %v232
    %v280 = vpack.c.bf16 %v234, %v234
    %v281 = vpack.c.bf16 %v237, %v237
    %v282 = vpack.c.bf16 %v239, %v239
    %v283 = vpack.c.bf16 %v242, %v242
    %v284 = vpack.c.bf16 %v244, %v244
    %v285 = vpack.c.bf16 %v247, %v247
    %v286 = vpack.c.bf16 %v249, %v249
    %v287 = vlaneseq
    %v288 = vshrl.u32 %v287, 7
    %v289 = vadd.s32 %v288, 8
    %v290 = vlaneseq
    %v291 = vand.u32 %v290, 127
    %vm292 = vcmp.eq.s32.totalorder %v288, %v291
    %vm293 = vcmp.eq.s32.totalorder %v289, %v291
    %v294 = vsel %vm292, -1e+30, 0.0
    %v295 = vsel %vm293, -1e+30, 0.0
    %v298 = vunpack.c.l.b16 %v263
    %v299 = vunpack.c.l.b16 %v264
    %v300 = vpack.c.b16 %v299, %v298
    %v303 = vunpack.c.l.b16 %v271
    %v304 = vunpack.c.l.b16 %v272
    %v305 = vpack.c.b16 %v304, %v303
    %vm306 = vcmask 130048
    %v308 = vsel %vm306, %v300, 0
    %v311 = vsel %vm306, %v305, 0
    %313 = vmatpush.bf16.xpose.msra.mxu0 0
    %314 = vmatpush.bf16.xpose.msra.mxu0 0
    %315 = vmatpush.bf16.xpose.msra.mxu0 0
    %316 = vmatpush.bf16.xpose.msra.mxu0 0
    %317 = vmatpush.bf16.xpose.msra.mxu0 0
    %318 = vmatpush.bf16.xpose.msra.mxu0 0
    %319 = vmatpush.bf16.xpose.msra.mxu0 0
    %320 = vmatpush.bf16.xpose.msra.mxu0 %v311
    %321 = vmatmul.bf16.gmra.mxu0 %v308
    %v322 = vpop.f32.mrf.mxu0
    %v323 = vadd.f32 %v294, %v322
    %v324 = vpop.f32.mrf.mxu0
    %v325 = vadd.f32 %v295, %v324
    %326 = vdwg.mxu0
    %v329 = vunpack.c.l.b16 %v265
    %v330 = vunpack.c.l.b16 %v266
    %v331 = vpack.c.b16 %v330, %v329
    %v334 = vunpack.c.l.b16 %v273
    %v335 = vunpack.c.l.b16 %v274
    %v336 = vpack.c.b16 %v335, %v334
    %v338 = vsel %vm306, %v331, 0
    %v341 = vsel %vm306, %v336, 0
    %343 = vmatpush.bf16.xpose.msra.mxu0 0
    %344 = vmatpush.bf16.xpose.msra.mxu0 0
    %345 = vmatpush.bf16.xpose.msra.mxu0 0
    %346 = vmatpush.bf16.xpose.msra.mxu0 0
    %347 = vmatpush.bf16.xpose.msra.mxu0 0
    %348 = vmatpush.bf16.xpose.msra.mxu0 0
    %349 = vmatpush.bf16.xpose.msra.mxu0 0
    %350 = vmatpush.bf16.xpose.msra.mxu0 %v341
    %351 = vmatmul.bf16.gmra.mxu0 %v338
    %v352 = vpop.f32.mrf.mxu0
    %v353 = vadd.f32 %v294, %v352
    %v354 = vpop.f32.mrf.mxu0
    %v355 = vadd.f32 %v295, %v354
    %356 = vdwg.mxu0
    %v359 = vunpack.c.l.b16 %v267
    %v360 = vunpack.c.l.b16 %v268
    %v361 = vpack.c.b16 %v360, %v359
    %v364 = vunpack.c.l.b16 %v275
    %v365 = vunpack.c.l.b16 %v276
    %v366 = vpack.c.b16 %v365, %v364
    %v368 = vsel %vm306, %v361, 0
    %v371 = vsel %vm306, %v366, 0
    %373 = vmatpush.bf16.xpose.msra.mxu0 0
    %374 = vmatpush.bf16.xpose.msra.mxu0 0
    %375 = vmatpush.bf16.xpose.msra.mxu0 0
    %376 = vmatpush.bf16.xpose.msra.mxu0 0
    %377 = vmatpush.bf16.xpose.msra.mxu0 0
    %378 = vmatpush.bf16.xpose.msra.mxu0 0
    %379 = vmatpush.bf16.xpose.msra.mxu0 0
    %380 = vmatpush.bf16.xpose.msra.mxu0 %v371
    %381 = vmatmul.bf16.gmra.mxu0 %v368
    %v382 = vpop.f32.mrf.mxu0
    %v383 = vadd.f32 %v294, %v382
    %v384 = vpop.f32.mrf.mxu0
    %v385 = vadd.f32 %v295, %v384
    %386 = vdwg.mxu0
    %v389 = vunpack.c.l.b16 %v269
    %v390 = vunpack.c.l.b16 %v270
    %v391 = vpack.c.b16 %v390, %v389
    %v394 = vunpack.c.l.b16 %v277
    %v395 = vunpack.c.l.b16 %v278
    %v396 = vpack.c.b16 %v395, %v394
    %v398 = vsel %vm306, %v391, 0
    %v401 = vsel %vm306, %v396, 0
    %403 = vmatpush.bf16.xpose.msra.mxu0 0
    %404 = vmatpush.bf16.xpose.msra.mxu0 0
    %405 = vmatpush.bf16.xpose.msra.mxu0 0
    %406 = vmatpush.bf16.xpose.msra.mxu0 0
    %407 = vmatpush.bf16.xpose.msra.mxu0 0
    %408 = vmatpush.bf16.xpose.msra.mxu0 0
    %409 = vmatpush.bf16.xpose.msra.mxu0 0
    %410 = vmatpush.bf16.xpose.msra.mxu0 %v401
    %411 = vmatmul.bf16.gmra.mxu0 %v398
    %v412 = vpop.f32.mrf.mxu0
    %v413 = vadd.f32 %v294, %v412
    %v414 = vpop.f32.mrf.mxu0
    %v415 = vadd.f32 %v295, %v414
    %416 = vdwg.mxu0
    %v417 = vsel %vm306, %v323, -inf
    %418 = vmax.xlane.f32.xlu0 %v417
    %v419 = vpop.xlane.xlu0 %418
    %v420 = vsel %vm306, %v325, -inf
    %421 = vmax.xlane.f32.xlu0 %v420
    %v422 = vpop.xlane.xlu0 %421
    %v423 = vsel %vm306, %v353, -inf
    %424 = vmax.xlane.f32.xlu0 %v423
    %v425 = vpop.xlane.xlu0 %424
    %v426 = vsel %vm306, %v355, -inf
    %427 = vmax.xlane.f32.xlu0 %v426
    %v428 = vpop.xlane.xlu0 %427
    %v429 = vsel %vm306, %v383, -inf
    %430 = vmax.xlane.f32.xlu0 %v429
    %v431 = vpop.xlane.xlu0 %430
    %v432 = vsel %vm306, %v385, -inf
    %433 = vmax.xlane.f32.xlu0 %v432
    %v434 = vpop.xlane.xlu0 %433
    %v435 = vsel %vm306, %v413, -inf
    %436 = vmax.xlane.f32.xlu0 %v435
    %v437 = vpop.xlane.xlu0 %436
    %v438 = vsel %vm306, %v415, -inf
    %439 = vmax.xlane.f32.xlu0 %v438
    %v440 = vpop.xlane.xlu0 %439
    %v441 = vsub.f32 %v323, %v419
    %v442 = vsub.f32 %v325, %v422
    %v443 = vsub.f32 %v353, %v425
    %v444 = vsub.f32 %v355, %v428
    %v445 = vsub.f32 %v383, %v431
    %v446 = vsub.f32 %v385, %v434
    %v447 = vsub.f32 %v413, %v437
    %v448 = vsub.f32 %v415, %v440
    %449 = vst.msk [vmem:[#allocation2] sm:$0xff] %vm306, %v441
    %450 = vst.msk [vmem:[#allocation2 + $0x8] sm:$0xff] %vm306, %v442
    %451 = vst.msk [vmem:[#allocation2 + $0x10] sm:$0xff] %vm306, %v443
    %452 = vst.msk [vmem:[#allocation2 + $0x18] sm:$0xff] %vm306, %v444
    %453 = vst.msk [vmem:[#allocation2 + $0x20] sm:$0xff] %vm306, %v445
    %454 = vst.msk [vmem:[#allocation2 + $0x28] sm:$0xff] %vm306, %v446
    %455 = vst.msk [vmem:[#allocation2 + $0x30] sm:$0xff] %vm306, %v447
    %456 = vst.msk [vmem:[#allocation2 + $0x38] sm:$0xff] %vm306, %v448
    %457 = vrot.lane.b32.xlu0 %v300, 112
    %v458 = vpop.permute.xlu0 %457
    %459 = vrot.lane.b32.xlu0 %v305, 112
    %v460 = vpop.permute.xlu0 %459
    %v462 = vsel %vm306, %v458, 0
    %v465 = vsel %vm306, %v460, 0
    %467 = vmatpush.bf16.xpose.msra.mxu0 0
    %468 = vmatpush.bf16.xpose.msra.mxu0 0
    %469 = vmatpush.bf16.xpose.msra.mxu0 0
    %470 = vmatpush.bf16.xpose.msra.mxu0 0
    %471 = vmatpush.bf16.xpose.msra.mxu0 0
    %472 = vmatpush.bf16.xpose.msra.mxu0 0
    %473 = vmatpush.bf16.xpose.msra.mxu0 0
    %474 = vmatpush.bf16.xpose.msra.mxu0 %v465
    %475 = vmatmul.bf16.gmra.mxu0 %v462
    %v476 = vpop.f32.mrf.mxu0
    %v477 = vadd.f32 %v294, %v476
    %v478 = vpop.f32.mrf.mxu0
    %v479 = vadd.f32 %v295, %v478
    %480 = vdwg.mxu0
    %481 = vrot.lane.b32.xlu0 %v331, 112
    %v482 = vpop.permute.xlu0 %481
    %483 = vrot.lane.b32.xlu0 %v336, 112
    %v484 = vpop.permute.xlu0 %483
    %v486 = vsel %vm306, %v482, 0
    %v489 = vsel %vm306, %v484, 0
    %491 = vmatpush.bf16.xpose.msra.mxu0 0
    %492 = vmatpush.bf16.xpose.msra.mxu0 0
    %493 = vmatpush.bf16.xpose.msra.mxu0 0
    %494 = vmatpush.bf16.xpose.msra.mxu0 0
    %495 = vmatpush.bf16.xpose.msra.mxu0 0
    %496 = vmatpush.bf16.xpose.msra.mxu0 0
    %497 = vmatpush.bf16.xpose.msra.mxu0 0
    %498 = vmatpush.bf16.xpose.msra.mxu0 %v489
    %499 = vmatmul.bf16.gmra.mxu0 %v486
    %v500 = vpop.f32.mrf.mxu0
    %v501 = vadd.f32 %v294, %v500
    %v502 = vpop.f32.mrf.mxu0
    %v503 = vadd.f32 %v295, %v502
    %504 = vdwg.mxu0
    %505 = vrot.lane.b32.xlu0 %v361, 112
    %v506 = vpop.permute.xlu0 %505
    %507 = vrot.lane.b32.xlu0 %v366, 112
    %v508 = vpop.permute.xlu0 %507
    %v510 = vsel %vm306, %v506, 0
    %v513 = vsel %vm306, %v508, 0
    %515 = vmatpush.bf16.xpose.msra.mxu0 0
    %516 = vmatpush.bf16.xpose.msra.mxu0 0
    %517 = vmatpush.bf16.xpose.msra.mxu0 0
    %518 = vmatpush.bf16.xpose.msra.mxu0 0
    %519 = vmatpush.bf16.xpose.msra.mxu0 0
    %520 = vmatpush.bf16.xpose.msra.mxu0 0
    %521 = vmatpush.bf16.xpose.msra.mxu0 0
    %522 = vmatpush.bf16.xpose.msra.mxu0 %v513
    %523 = vmatmul.bf16.gmra.mxu0 %v510
    %v524 = vpop.f32.mrf.mxu0
    %v525 = vadd.f32 %v294, %v524
    %v526 = vpop.f32.mrf.mxu0
    %v527 = vadd.f32 %v295, %v526
    %528 = vdwg.mxu0
    %529 = vrot.lane.b32.xlu0 %v391, 112
    %v530 = vpop.permute.xlu0 %529
    %531 = vrot.lane.b32.xlu0 %v396, 112
    %v532 = vpop.permute.xlu0 %531
    %v534 = vsel %vm306, %v530, 0
    %v537 = vsel %vm306, %v532, 0
    %539 = vmatpush.bf16.xpose.msra.mxu0 0
    %540 = vmatpush.bf16.xpose.msra.mxu0 0
    %541 = vmatpush.bf16.xpose.msra.mxu0 0
    %542 = vmatpush.bf16.xpose.msra.mxu0 0
    %543 = vmatpush.bf16.xpose.msra.mxu0 0
    %544 = vmatpush.bf16.xpose.msra.mxu0 0
    %545 = vmatpush.bf16.xpose.msra.mxu0 0
    %546 = vmatpush.bf16.xpose.msra.mxu0 %v537
    %547 = vmatmul.bf16.gmra.mxu0 %v534
    %v548 = vpop.f32.mrf.mxu0
    %v549 = vadd.f32 %v294, %v548
    %v550 = vpop.f32.mrf.mxu0
    %v551 = vadd.f32 %v295, %v550
    %552 = vdwg.mxu0
    %v553 = vsel %vm306, %v477, -inf
    %554 = vmax.xlane.f32.xlu0 %v553
    %v555 = vpop.xlane.xlu0 %554
    %v556 = vsel %vm306, %v479, -inf
    %557 = vmax.xlane.f32.xlu0 %v556
    %v558 = vpop.xlane.xlu0 %557
    %v559 = vsel %vm306, %v501, -inf
    %560 = vmax.xlane.f32.xlu0 %v559
    %v561 = vpop.xlane.xlu0 %560
    %v562 = vsel %vm306, %v503, -inf
    %563 = vmax.xlane.f32.xlu0 %v562
    %v564 = vpop.xlane.xlu0 %563
    %v565 = vsel %vm306, %v525, -inf
    %566 = vmax.xlane.f32.xlu0 %v565
    %v567 = vpop.xlane.xlu0 %566
    %v568 = vsel %vm306, %v527, -inf
    %569 = vmax.xlane.f32.xlu0 %v568
    %v570 = vpop.xlane.xlu0 %569
    %v571 = vsel %vm306, %v549, -inf
    %572 = vmax.xlane.f32.xlu0 %v571
    %v573 = vpop.xlane.xlu0 %572
    %v574 = vsel %vm306, %v551, -inf
    %575 = vmax.xlane.f32.xlu0 %v574
    %v576 = vpop.xlane.xlu0 %575
    %v577 = vsub.f32 %v477, %v555
    %v578 = vsub.f32 %v479, %v558
    %v579 = vsub.f32 %v501, %v561
    %v580 = vsub.f32 %v503, %v564
    %v581 = vsub.f32 %v525, %v567
    %v582 = vsub.f32 %v527, %v570
    %v583 = vsub.f32 %v549, %v573
    %v584 = vsub.f32 %v551, %v576
    %593 = vrot.lane.b32.xlu0 %v577, 16
    %v594 = vpop.permute.xlu0 %593
    %595 = vrot.lane.b32.xlu0 %v578, 16
    %v596 = vpop.permute.xlu0 %595
    %597 = vrot.lane.b32.xlu0 %v579, 16
    %v598 = vpop.permute.xlu0 %597
    %599 = vrot.lane.b32.xlu0 %v580, 16
    %v600 = vpop.permute.xlu0 %599
    %601 = vrot.lane.b32.xlu0 %v581, 16
    %v602 = vpop.permute.xlu0 %601
    %603 = vrot.lane.b32.xlu0 %v582, 16
    %v604 = vpop.permute.xlu0 %603
    %605 = vrot.lane.b32.xlu0 %v583, 16
    %v606 = vpop.permute.xlu0 %605
    %607 = vrot.lane.b32.xlu0 %v584, 16
    %v608 = vpop.permute.xlu0 %607
    %vm617 = vcmask 261248
    %618 = vst.msk [vmem:[#allocation2] sm:$0xff] %vm617, %v594
    %619 = vst.msk [vmem:[#allocation2 + $0x8] sm:$0xff] %vm617, %v596
    %620 = vst.msk [vmem:[#allocation2 + $0x10] sm:$0xff] %vm617, %v598
    %621 = vst.msk [vmem:[#allocation2 + $0x18] sm:$0xff] %vm617, %v600
    %622 = vst.msk [vmem:[#allocation2 + $0x20] sm:$0xff] %vm617, %v602
    %623 = vst.msk [vmem:[#allocation2 + $0x28] sm:$0xff] %vm617, %v604
    %624 = vst.msk [vmem:[#allocation2 + $0x30] sm:$0xff] %vm617, %v606
    %625 = vst.msk [vmem:[#allocation2 + $0x38] sm:$0xff] %vm617, %v608
    %626 = vrot.lane.b32.xlu0 %v300, 96
    %v627 = vpop.permute.xlu0 %626
    %628 = vrot.lane.b32.xlu0 %v305, 96
    %v629 = vpop.permute.xlu0 %628
    %v631 = vsel %vm306, %v627, 0
    %v634 = vsel %vm306, %v629, 0
    %636 = vmatpush.bf16.xpose.msra.mxu0 0
    %637 = vmatpush.bf16.xpose.msra.mxu0 0
    %638 = vmatpush.bf16.xpose.msra.mxu0 0
    %639 = vmatpush.bf16.xpose.msra.mxu0 0
    %640 = vmatpush.bf16.xpose.msra.mxu0 0
    %641 = vmatpush.bf16.xpose.msra.mxu0 0
    %642 = vmatpush.bf16.xpose.msra.mxu0 0
    %643 = vmatpush.bf16.xpose.msra.mxu0 %v634
    %644 = vmatmul.bf16.gmra.mxu0 %v631
    %v645 = vpop.f32.mrf.mxu0
    %v646 = vadd.f32 %v294, %v645
    %v647 = vpop.f32.mrf.mxu0
    %v648 = vadd.f32 %v295, %v647
    %649 = vdwg.mxu0
    %650 = vrot.lane.b32.xlu0 %v331, 96
    %v651 = vpop.permute.xlu0 %650
    %652 = vrot.lane.b32.xlu0 %v336, 96
    %v653 = vpop.permute.xlu0 %652
    %v655 = vsel %vm306, %v651, 0
    %v658 = vsel %vm306, %v653, 0
    %660 = vmatpush.bf16.xpose.msra.mxu0 0
    %661 = vmatpush.bf16.xpose.msra.mxu0 0
    %662 = vmatpush.bf16.xpose.msra.mxu0 0
    %663 = vmatpush.bf16.xpose.msra.mxu0 0
    %664 = vmatpush.bf16.xpose.msra.mxu0 0
    %665 = vmatpush.bf16.xpose.msra.mxu0 0
    %666 = vmatpush.bf16.xpose.msra.mxu0 0
    %667 = vmatpush.bf16.xpose.msra.mxu0 %v658
    %668 = vmatmul.bf16.gmra.mxu0 %v655
    %v669 = vpop.f32.mrf.mxu0
    %v670 = vadd.f32 %v294, %v669
    %v671 = vpop.f32.mrf.mxu0
    %v672 = vadd.f32 %v295, %v671
    %673 = vdwg.mxu0
    %674 = vrot.lane.b32.xlu0 %v361, 96
    %v675 = vpop.permute.xlu0 %674
    %676 = vrot.lane.b32.xlu0 %v366, 96
    %v677 = vpop.permute.xlu0 %676
    %v679 = vsel %vm306, %v675, 0
    %v682 = vsel %vm306, %v677, 0
    %684 = vmatpush.bf16.xpose.msra.mxu0 0
    %685 = vmatpush.bf16.xpose.msra.mxu0 0
    %686 = vmatpush.bf16.xpose.msra.mxu0 0
    %687 = vmatpush.bf16.xpose.msra.mxu0 0
    %688 = vmatpush.bf16.xpose.msra.mxu0 0
    %689 = vmatpush.bf16.xpose.msra.mxu0 0
    %690 = vmatpush.bf16.xpose.msra.mxu0 0
    %691 = vmatpush.bf16.xpose.msra.mxu0 %v682
    %692 = vmatmul.bf16.gmra.mxu0 %v679
    %v693 = vpop.f32.mrf.mxu0
    %v694 = vadd.f32 %v294, %v693
    %v695 = vpop.f32.mrf.mxu0
    %v696 = vadd.f32 %v295, %v695
    %697 = vdwg.mxu0
    %698 = vrot.lane.b32.xlu0 %v391, 96
    %v699 = vpop.permute.xlu0 %698
    %700 = vrot.lane.b32.xlu0 %v396, 96
    %v701 = vpop.permute.xlu0 %700
    %v703 = vsel %vm306, %v699, 0
    %v706 = vsel %vm306, %v701, 0
    %708 = vmatpush.bf16.xpose.msra.mxu0 0
    %709 = vmatpush.bf16.xpose.msra.mxu0 0
    %710 = vmatpush.bf16.xpose.msra.mxu0 0
    %711 = vmatpush.bf16.xpose.msra.mxu0 0
    %712 = vmatpush.bf16.xpose.msra.mxu0 0
    %713 = vmatpush.bf16.xpose.msra.mxu0 0
    %714 = vmatpush.bf16.xpose.msra.mxu0 0
    %715 = vmatpush.bf16.xpose.msra.mxu0 %v706
    %716 = vmatmul.bf16.gmra.mxu0 %v703
    %v717 = vpop.f32.mrf.mxu0
    %v718 = vadd.f32 %v294, %v717
    %v719 = vpop.f32.mrf.mxu0
    %v720 = vadd.f32 %v295, %v719
    %721 = vdwg.mxu0
    %v722 = vsel %vm306, %v646, -inf
    %723 = vmax.xlane.f32.xlu0 %v722
    %v724 = vpop.xlane.xlu0 %723
    %v725 = vsel %vm306, %v648, -inf
    %726 = vmax.xlane.f32.xlu0 %v725
    %v727 = vpop.xlane.xlu0 %726
    %v728 = vsel %vm306, %v670, -inf
    %729 = vmax.xlane.f32.xlu0 %v728
    %v730 = vpop.xlane.xlu0 %729
    %v731 = vsel %vm306, %v672, -inf
    %732 = vmax.xlane.f32.xlu0 %v731
    %v733 = vpop.xlane.xlu0 %732
    %v734 = vsel %vm306, %v694, -inf
    %735 = vmax.xlane.f32.xlu0 %v734
    %v736 = vpop.xlane.xlu0 %735
    %v737 = vsel %vm306, %v696, -inf
    %738 = vmax.xlane.f32.xlu0 %v737
    %v739 = vpop.xlane.xlu0 %738
    %v740 = vsel %vm306, %v718, -inf
    %741 = vmax.xlane.f32.xlu0 %v740
    %v742 = vpop.xlane.xlu0 %741
    %v743 = vsel %vm306, %v720, -inf
    %744 = vmax.xlane.f32.xlu0 %v743
    %v745 = vpop.xlane.xlu0 %744
    %v746 = vsub.f32 %v646, %v724
    %v747 = vsub.f32 %v648, %v727
    %v748 = vsub.f32 %v670, %v730
    %v749 = vsub.f32 %v672, %v733
    %v750 = vsub.f32 %v694, %v736
    %v751 = vsub.f32 %v696, %v739
    %v752 = vsub.f32 %v718, %v742
    %v753 = vsub.f32 %v720, %v745
    %762 = vrot.lane.b32.xlu0 %v746, 32
    %v763 = vpop.permute.xlu0 %762
    %764 = vrot.lane.b32.xlu0 %v747, 32
    %v765 = vpop.permute.xlu0 %764
    %766 = vrot.lane.b32.xlu0 %v748, 32
    %v767 = vpop.permute.xlu0 %766
    %768 = vrot.lane.b32.xlu0 %v749, 32
    %v769 = vpop.permute.xlu0 %768
    %770 = vrot.lane.b32.xlu0 %v750, 32
    %v771 = vpop.permute.xlu0 %770
    %772 = vrot.lane.b32.xlu0 %v751, 32
    %v773 = vpop.permute.xlu0 %772
    %774 = vrot.lane.b32.xlu0 %v752, 32
    %v775 = vpop.permute.xlu0 %774
    %776 = vrot.lane.b32.xlu0 %v753, 32
    %v777 = vpop.permute.xlu0 %776
    %vm786 = vcmask 392448
    %787 = vst.msk [vmem:[#allocation2] sm:$0xff] %vm786, %v763
    %788 = vst.msk [vmem:[#allocation2 + $0x8] sm:$0xff] %vm786, %v765
    %789 = vst.msk [vmem:[#allocation2 + $0x10] sm:$0xff] %vm786, %v767
    %790 = vst.msk [vmem:[#allocation2 + $0x18] sm:$0xff] %vm786, %v769
    %791 = vst.msk [vmem:[#allocation2 + $0x20] sm:$0xff] %vm786, %v771
    %792 = vst.msk [vmem:[#allocation2 + $0x28] sm:$0xff] %vm786, %v773
    %793 = vst.msk [vmem:[#allocation2 + $0x30] sm:$0xff] %vm786, %v775
    %794 = vst.msk [vmem:[#allocation2 + $0x38] sm:$0xff] %vm786, %v777
    %795 = vrot.lane.b32.xlu0 %v300, 80
    %v796 = vpop.permute.xlu0 %795
    %797 = vrot.lane.b32.xlu0 %v305, 80
    %v798 = vpop.permute.xlu0 %797
    %v800 = vsel %vm306, %v796, 0
    %v803 = vsel %vm306, %v798, 0
    %805 = vmatpush.bf16.xpose.msra.mxu0 0
    %806 = vmatpush.bf16.xpose.msra.mxu0 0
    %807 = vmatpush.bf16.xpose.msra.mxu0 0
    %808 = vmatpush.bf16.xpose.msra.mxu0 0
    %809 = vmatpush.bf16.xpose.msra.mxu0 0
    %810 = vmatpush.bf16.xpose.msra.mxu0 0
    %811 = vmatpush.bf16.xpose.msra.mxu0 0
    %812 = vmatpush.bf16.xpose.msra.mxu0 %v803
    %813 = vmatmul.bf16.gmra.mxu0 %v800
    %v814 = vpop.f32.mrf.mxu0
    %v815 = vadd.f32 %v294, %v814
    %v816 = vpop.f32.mrf.mxu0
    %v817 = vadd.f32 %v295, %v816
    %818 = vdwg.mxu0
    %819 = vrot.lane.b32.xlu0 %v331, 80
    %v820 = vpop.permute.xlu0 %819
    %821 = vrot.lane.b32.xlu0 %v336, 80
    %v822 = vpop.permute.xlu0 %821
    %v824 = vsel %vm306, %v820, 0
    %v827 = vsel %vm306, %v822, 0
    %829 = vmatpush.bf16.xpose.msra.mxu0 0
    %830 = vmatpush.bf16.xpose.msra.mxu0 0
    %831 = vmatpush.bf16.xpose.msra.mxu0 0
    %832 = vmatpush.bf16.xpose.msra.mxu0 0
    %833 = vmatpush.bf16.xpose.msra.mxu0 0
    %834 = vmatpush.bf16.xpose.msra.mxu0 0
    %835 = vmatpush.bf16.xpose.msra.mxu0 0
    %836 = vmatpush.bf16.xpose.msra.mxu0 %v827
    %837 = vmatmul.bf16.gmra.mxu0 %v824
    %v838 = vpop.f32.mrf.mxu0
    %v839 = vadd.f32 %v294, %v838
    %v840 = vpop.f32.mrf.mxu0
    %v841 = vadd.f32 %v295, %v840
    %842 = vdwg.mxu0
    %843 = vrot.lane.b32.xlu0 %v361, 80
    %v844 = vpop.permute.xlu0 %843
    %845 = vrot.lane.b32.xlu0 %v366, 80
    %v846 = vpop.permute.xlu0 %845
    %v848 = vsel %vm306, %v844, 0
    %v851 = vsel %vm306, %v846, 0
    %853 = vmatpush.bf16.xpose.msra.mxu0 0
    %854 = vmatpush.bf16.xpose.msra.mxu0 0
    %855 = vmatpush.bf16.xpose.msra.mxu0 0
    %856 = vmatpush.bf16.xpose.msra.mxu0 0
    %857 = vmatpush.bf16.xpose.msra.mxu0 0
    %858 = vmatpush.bf16.xpose.msra.mxu0 0
    %859 = vmatpush.bf16.xpose.msra.mxu0 0
    %860 = vmatpush.bf16.xpose.msra.mxu0 %v851
    %861 = vmatmul.bf16.gmra.mxu0 %v848
    %v862 = vpop.f32.mrf.mxu0
    %v863 = vadd.f32 %v294, %v862
    %v864 = vpop.f32.mrf.mxu0
    %v865 = vadd.f32 %v295, %v864
    %866 = vdwg.mxu0
    %867 = vrot.lane.b32.xlu0 %v391, 80
    %v868 = vpop.permute.xlu0 %867
    %869 = vrot.lane.b32.xlu0 %v396, 80
    %v870 = vpop.permute.xlu0 %869
    %v872 = vsel %vm306, %v868, 0
    %v875 = vsel %vm306, %v870, 0
    %877 = vmatpush.bf16.xpose.msra.mxu0 0
    %878 = vmatpush.bf16.xpose.msra.mxu0 0
    %879 = vmatpush.bf16.xpose.msra.mxu0 0
    %880 = vmatpush.bf16.xpose.msra.mxu0 0
    %881 = vmatpush.bf16.xpose.msra.mxu0 0
    %882 = vmatpush.bf16.xpose.msra.mxu0 0
    %883 = vmatpush.bf16.xpose.msra.mxu0 0
    %884 = vmatpush.bf16.xpose.msra.mxu0 %v875
    %885 = vmatmul.bf16.gmra.mxu0 %v872
    %v886 = vpop.f32.mrf.mxu0
    %v887 = vadd.f32 %v294, %v886
    %v888 = vpop.f32.mrf.mxu0
    %v889 = vadd.f32 %v295, %v888
    %890 = vdwg.mxu0
    %v891 = vsel %vm306, %v815, -inf
    %892 = vmax.xlane.f32.xlu0 %v891
    %v893 = vpop.xlane.xlu0 %892
    %v894 = vsel %vm306, %v817, -inf
    %895 = vmax.xlane.f32.xlu0 %v894
    %v896 = vpop.xlane.xlu0 %895
    %v897 = vsel %vm306, %v839, -inf
    %898 = vmax.xlane.f32.xlu0 %v897
    %v899 = vpop.xlane.xlu0 %898
    %v900 = vsel %vm306, %v841, -inf
    %901 = vmax.xlane.f32.xlu0 %v900
    %v902 = vpop.xlane.xlu0 %901
    %v903 = vsel %vm306, %v863, -inf
    %904 = vmax.xlane.f32.xlu0 %v903
    %v905 = vpop.xlane.xlu0 %904
    %v906 = vsel %vm306, %v865, -inf
    %907 = vmax.xlane.f32.xlu0 %v906
    %v908 = vpop.xlane.xlu0 %907
    %v909 = vsel %vm306, %v887, -inf
    %910 = vmax.xlane.f32.xlu0 %v909
    %v911 = vpop.xlane.xlu0 %910
    %v912 = vsel %vm306, %v889, -inf
    %913 = vmax.xlane.f32.xlu0 %v912
    %v914 = vpop.xlane.xlu0 %913
    %v915 = vsub.f32 %v815, %v893
    %v916 = vsub.f32 %v817, %v896
    %v917 = vsub.f32 %v839, %v899
    %v918 = vsub.f32 %v841, %v902
    %v919 = vsub.f32 %v863, %v905
    %v920 = vsub.f32 %v865, %v908
    %v921 = vsub.f32 %v887, %v911
    %v922 = vsub.f32 %v889, %v914
    %931 = vrot.lane.b32.xlu0 %v915, 48
    %v932 = vpop.permute.xlu0 %931
    %933 = vrot.lane.b32.xlu0 %v916, 48
    %v934 = vpop.permute.xlu0 %933
    %935 = vrot.lane.b32.xlu0 %v917, 48
    %v936 = vpop.permute.xlu0 %935
    %937 = vrot.lane.b32.xlu0 %v918, 48
    %v938 = vpop.permute.xlu0 %937
    %939 = vrot.lane.b32.xlu0 %v919, 48
    %v940 = vpop.permute.xlu0 %939
    %941 = vrot.lane.b32.xlu0 %v920, 48
    %v942 = vpop.permute.xlu0 %941
    %943 = vrot.lane.b32.xlu0 %v921, 48
    %v944 = vpop.permute.xlu0 %943
    %945 = vrot.lane.b32.xlu0 %v922, 48
    %v946 = vpop.permute.xlu0 %945
    %vm955 = vcmask 523648
    %956 = vst.msk [vmem:[#allocation2] sm:$0xff] %vm955, %v932
    %957 = vst.msk [vmem:[#allocation2 + $0x8] sm:$0xff] %vm955, %v934
    %958 = vst.msk [vmem:[#allocation2 + $0x10] sm:$0xff] %vm955, %v936
    %959 = vst.msk [vmem:[#allocation2 + $0x18] sm:$0xff] %vm955, %v938
    %960 = vst.msk [vmem:[#allocation2 + $0x20] sm:$0xff] %vm955, %v940
    %961 = vst.msk [vmem:[#allocation2 + $0x28] sm:$0xff] %vm955, %v942
    %962 = vst.msk [vmem:[#allocation2 + $0x30] sm:$0xff] %vm955, %v944
    %963 = vst.msk [vmem:[#allocation2 + $0x38] sm:$0xff] %vm955, %v946
    %964 = vrot.lane.b32.xlu0 %v300, 64
    %v965 = vpop.permute.xlu0 %964
    %966 = vrot.lane.b32.xlu0 %v305, 64
    %v967 = vpop.permute.xlu0 %966
    %v969 = vsel %vm306, %v965, 0
    %v972 = vsel %vm306, %v967, 0
    %974 = vmatpush.bf16.xpose.msra.mxu0 0
    %975 = vmatpush.bf16.xpose.msra.mxu0 0
    %976 = vmatpush.bf16.xpose.msra.mxu0 0
    %977 = vmatpush.bf16.xpose.msra.mxu0 0
    %978 = vmatpush.bf16.xpose.msra.mxu0 0
    %979 = vmatpush.bf16.xpose.msra.mxu0 0
    %980 = vmatpush.bf16.xpose.msra.mxu0 0
    %981 = vmatpush.bf16.xpose.msra.mxu0 %v972
    %982 = vmatmul.bf16.gmra.mxu0 %v969
    %v983 = vpop.f32.mrf.mxu0
    %v984 = vadd.f32 %v294, %v983
    %v985 = vpop.f32.mrf.mxu0
    %v986 = vadd.f32 %v295, %v985
    %987 = vdwg.mxu0
    %988 = vrot.lane.b32.xlu0 %v331, 64
    %v989 = vpop.permute.xlu0 %988
    %990 = vrot.lane.b32.xlu0 %v336, 64
    %v991 = vpop.permute.xlu0 %990
    %v993 = vsel %vm306, %v989, 0
    %v996 = vsel %vm306, %v991, 0
    %998 = vmatpush.bf16.xpose.msra.mxu0 0
    %999 = vmatpush.bf16.xpose.msra.mxu0 0
    %1000 = vmatpush.bf16.xpose.msra.mxu0 0
    %1001 = vmatpush.bf16.xpose.msra.mxu0 0
    %1002 = vmatpush.bf16.xpose.msra.mxu0 0
    %1003 = vmatpush.bf16.xpose.msra.mxu0 0
    %1004 = vmatpush.bf16.xpose.msra.mxu0 0
    %1005 = vmatpush.bf16.xpose.msra.mxu0 %v996
    %1006 = vmatmul.bf16.gmra.mxu0 %v993
    %v1007 = vpop.f32.mrf.mxu0
    %v1008 = vadd.f32 %v294, %v1007
    %v1009 = vpop.f32.mrf.mxu0
    %v1010 = vadd.f32 %v295, %v1009
    %1011 = vdwg.mxu0
    %1012 = vrot.lane.b32.xlu0 %v361, 64
    %v1013 = vpop.permute.xlu0 %1012
    %1014 = vrot.lane.b32.xlu0 %v366, 64
    %v1015 = vpop.permute.xlu0 %1014
    %v1017 = vsel %vm306, %v1013, 0
    %v1020 = vsel %vm306, %v1015, 0
    %1022 = vmatpush.bf16.xpose.msra.mxu0 0
    %1023 = vmatpush.bf16.xpose.msra.mxu0 0
    %1024 = vmatpush.bf16.xpose.msra.mxu0 0
    %1025 = vmatpush.bf16.xpose.msra.mxu0 0
    %1026 = vmatpush.bf16.xpose.msra.mxu0 0
    %1027 = vmatpush.bf16.xpose.msra.mxu0 0
    %1028 = vmatpush.bf16.xpose.msra.mxu0 0
    %1029 = vmatpush.bf16.xpose.msra.mxu0 %v1020
    %1030 = vmatmul.bf16.gmra.mxu0 %v1017
    %v1031 = vpop.f32.mrf.mxu0
    %v1032 = vadd.f32 %v294, %v1031
    %v1033 = vpop.f32.mrf.mxu0
    %v1034 = vadd.f32 %v295, %v1033
    %1035 = vdwg.mxu0
    %1036 = vrot.lane.b32.xlu0 %v391, 64
    %v1037 = vpop.permute.xlu0 %1036
    %1038 = vrot.lane.b32.xlu0 %v396, 64
    %v1039 = vpop.permute.xlu0 %1038
    %v1041 = vsel %vm306, %v1037, 0
    %v1044 = vsel %vm306, %v1039, 0
    %1046 = vmatpush.bf16.xpose.msra.mxu0 0
    %1047 = vmatpush.bf16.xpose.msra.mxu0 0
    %1048 = vmatpush.bf16.xpose.msra.mxu0 0
    %1049 = vmatpush.bf16.xpose.msra.mxu0 0
    %1050 = vmatpush.bf16.xpose.msra.mxu0 0
    %1051 = vmatpush.bf16.xpose.msra.mxu0 0
    %1052 = vmatpush.bf16.xpose.msra.mxu0 0
    %1053 = vmatpush.bf16.xpose.msra.mxu0 %v1044
    %1054 = vmatmul.bf16.gmra.mxu0 %v1041
    %v1055 = vpop.f32.mrf.mxu0
    %v1056 = vadd.f32 %v294, %v1055
    %v1057 = vpop.f32.mrf.mxu0
    %v1058 = vadd.f32 %v295, %v1057
    %1059 = vdwg.mxu0
    %v1060 = vsel %vm306, %v984, -inf
    %1061 = vmax.xlane.f32.xlu0 %v1060
    %v1062 = vpop.xlane.xlu0 %1061
    %v1063 = vsel %vm306, %v986, -inf
    %1064 = vmax.xlane.f32.xlu0 %v1063
    %v1065 = vpop.xlane.xlu0 %1064
    %v1066 = vsel %vm306, %v1008, -inf
    %1067 = vmax.xlane.f32.xlu0 %v1066
    %v1068 = vpop.xlane.xlu0 %1067
    %v1069 = vsel %vm306, %v1010, -inf
    %1070 = vmax.xlane.f32.xlu0 %v1069
    %v1071 = vpop.xlane.xlu0 %1070
    %v1072 = vsel %vm306, %v1032, -inf
    %1073 = vmax.xlane.f32.xlu0 %v1072
    %v1074 = vpop.xlane.xlu0 %1073
    %v1075 = vsel %vm306, %v1034, -inf
    %1076 = vmax.xlane.f32.xlu0 %v1075
    %v1077 = vpop.xlane.xlu0 %1076
    %v1078 = vsel %vm306, %v1056, -inf
    %1079 = vmax.xlane.f32.xlu0 %v1078
    %v1080 = vpop.xlane.xlu0 %1079
    %v1081 = vsel %vm306, %v1058, -inf
    %1082 = vmax.xlane.f32.xlu0 %v1081
    %v1083 = vpop.xlane.xlu0 %1082
    %v1084 = vsub.f32 %v984, %v1062
    %v1085 = vsub.f32 %v986, %v1065
    %v1086 = vsub.f32 %v1008, %v1068
    %v1087 = vsub.f32 %v1010, %v1071
    %v1088 = vsub.f32 %v1032, %v1074
    %v1089 = vsub.f32 %v1034, %v1077
    %v1090 = vsub.f32 %v1056, %v1080
    %v1091 = vsub.f32 %v1058, %v1083
    %1100 = vrot.lane.b32.xlu0 %v1084, 64
    %v1101 = vpop.permute.xlu0 %1100
    %1102 = vrot.lane.b32.xlu0 %v1085, 64
    %v1103 = vpop.permute.xlu0 %1102
    %1104 = vrot.lane.b32.xlu0 %v1086, 64
    %v1105 = vpop.permute.xlu0 %1104
    %1106 = vrot.lane.b32.xlu0 %v1087, 64
    %v1107 = vpop.permute.xlu0 %1106
    %1108 = vrot.lane.b32.xlu0 %v1088, 64
    %v1109 = vpop.permute.xlu0 %1108
    %1110 = vrot.lane.b32.xlu0 %v1089, 64
    %v1111 = vpop.permute.xlu0 %1110
    %1112 = vrot.lane.b32.xlu0 %v1090, 64
    %v1113 = vpop.permute.xlu0 %1112
    %1114 = vrot.lane.b32.xlu0 %v1091, 64
    %v1115 = vpop.permute.xlu0 %1114
    %vm1124 = vcmask 654848
    %1125 = vst.msk [vmem:[#allocation2] sm:$0xff] %vm1124, %v1101
    %1126 = vst.msk [vmem:[#allocation2 + $0x8] sm:$0xff] %vm1124, %v1103
    %1127 = vst.msk [vmem:[#allocation2 + $0x10] sm:$0xff] %vm1124, %v1105
    %1128 = vst.msk [vmem:[#allocation2 + $0x18] sm:$0xff] %vm1124, %v1107
    %1129 = vst.msk [vmem:[#allocation2 + $0x20] sm:$0xff] %vm1124, %v1109
    %1130 = vst.msk [vmem:[#allocation2 + $0x28] sm:$0xff] %vm1124, %v1111
    %1131 = vst.msk [vmem:[#allocation2 + $0x30] sm:$0xff] %vm1124, %v1113
    %1132 = vst.msk [vmem:[#allocation2 + $0x38] sm:$0xff] %vm1124, %v1115
    %1133 = vrot.lane.b32.xlu0 %v300, 48
    %v1134 = vpop.permute.xlu0 %1133
    %1135 = vrot.lane.b32.xlu0 %v305, 48
    %v1136 = vpop.permute.xlu0 %1135
    %v1138 = vsel %vm306, %v1134, 0
    %v1141 = vsel %vm306, %v1136, 0
    %1143 = vmatpush.bf16.xpose.msra.mxu0 0
    %1144 = vmatpush.bf16.xpose.msra.mxu0 0
    %1145 = vmatpush.bf16.xpose.msra.mxu0 0
    %1146 = vmatpush.bf16.xpose.msra.mxu0 0
    %1147 = vmatpush.bf16.xpose.msra.mxu0 0
    %1148 = vmatpush.bf16.xpose.msra.mxu0 0
    %1149 = vmatpush.bf16.xpose.msra.mxu0 0
    %1150 = vmatpush.bf16.xpose.msra.mxu0 %v1141
    %1151 = vmatmul.bf16.gmra.mxu0 %v1138
    %v1152 = vpop.f32.mrf.mxu0
    %v1153 = vadd.f32 %v294, %v1152
    %v1154 = vpop.f32.mrf.mxu0
    %v1155 = vadd.f32 %v295, %v1154
    %1156 = vdwg.mxu0
    %1157 = vrot.lane.b32.xlu0 %v331, 48
    %v1158 = vpop.permute.xlu0 %1157
    %1159 = vrot.lane.b32.xlu0 %v336, 48
    %v1160 = vpop.permute.xlu0 %1159
    %v1162 = vsel %vm306, %v1158, 0
    %v1165 = vsel %vm306, %v1160, 0
    %1167 = vmatpush.bf16.xpose.msra.mxu0 0
    %1168 = vmatpush.bf16.xpose.msra.mxu0 0
    %1169 = vmatpush.bf16.xpose.msra.mxu0 0
    %1170 = vmatpush.bf16.xpose.msra.mxu0 0
    %1171 = vmatpush.bf16.xpose.msra.mxu0 0
    %1172 = vmatpush.bf16.xpose.msra.mxu0 0
    %1173 = vmatpush.bf16.xpose.msra.mxu0 0
    %1174 = vmatpush.bf16.xpose.msra.mxu0 %v1165
    %1175 = vmatmul.bf16.gmra.mxu0 %v1162
    %v1176 = vpop.f32.mrf.mxu0
    %v1177 = vadd.f32 %v294, %v1176
    %v1178 = vpop.f32.mrf.mxu0
    %v1179 = vadd.f32 %v295, %v1178
    %1180 = vdwg.mxu0
    %1181 = vrot.lane.b32.xlu0 %v361, 48
    %v1182 = vpop.permute.xlu0 %1181
    %1183 = vrot.lane.b32.xlu0 %v366, 48
    %v1184 = vpop.permute.xlu0 %1183
    %v1186 = vsel %vm306, %v1182, 0
    %v1189 = vsel %vm306, %v1184, 0
    %1191 = vmatpush.bf16.xpose.msra.mxu0 0
    %1192 = vmatpush.bf16.xpose.msra.mxu0 0
    %1193 = vmatpush.bf16.xpose.msra.mxu0 0
    %1194 = vmatpush.bf16.xpose.msra.mxu0 0
    %1195 = vmatpush.bf16.xpose.msra.mxu0 0
    %1196 = vmatpush.bf16.xpose.msra.mxu0 0
    %1197 = vmatpush.bf16.xpose.msra.mxu0 0
    %1198 = vmatpush.bf16.xpose.msra.mxu0 %v1189
    %1199 = vmatmul.bf16.gmra.mxu0 %v1186
    %v1200 = vpop.f32.mrf.mxu0
    %v1201 = vadd.f32 %v294, %v1200
    %v1202 = vpop.f32.mrf.mxu0
    %v1203 = vadd.f32 %v295, %v1202
    %1204 = vdwg.mxu0
    %1205 = vrot.lane.b32.xlu0 %v391, 48
    %v1206 = vpop.permute.xlu0 %1205
    %1207 = vrot.lane.b32.xlu0 %v396, 48
    %v1208 = vpop.permute.xlu0 %1207
    %v1210 = vsel %vm306, %v1206, 0
    %v1213 = vsel %vm306, %v1208, 0
    %1215 = vmatpush.bf16.xpose.msra.mxu0 0
    %1216 = vmatpush.bf16.xpose.msra.mxu0 0
    %1217 = vmatpush.bf16.xpose.msra.mxu0 0
    %1218 = vmatpush.bf16.xpose.msra.mxu0 0
    %1219 = vmatpush.bf16.xpose.msra.mxu0 0
    %1220 = vmatpush.bf16.xpose.msra.mxu0 0
    %1221 = vmatpush.bf16.xpose.msra.mxu0 0
    %1222 = vmatpush.bf16.xpose.msra.mxu0 %v1213
    %1223 = vmatmul.bf16.gmra.mxu0 %v1210
    %v1224 = vpop.f32.mrf.mxu0
    %v1225 = vadd.f32 %v294, %v1224
    %v1226 = vpop.f32.mrf.mxu0
    %v1227 = vadd.f32 %v295, %v1226
    %1228 = vdwg.mxu0
    %v1229 = vsel %vm306, %v1153, -inf
    %1230 = vmax.xlane.f32.xlu0 %v1229
    %v1231 = vpop.xlane.xlu0 %1230
    %v1232 = vsel %vm306, %v1155, -inf
    %1233 = vmax.xlane.f32.xlu0 %v1232
    %v1234 = vpop.xlane.xlu0 %1233
    %v1235 = vsel %vm306, %v1177, -inf
    %1236 = vmax.xlane.f32.xlu0 %v1235
    %v1237 = vpop.xlane.xlu0 %1236
    %v1238 = vsel %vm306, %v1179, -inf
    %1239 = vmax.xlane.f32.xlu0 %v1238
    %v1240 = vpop.xlane.xlu0 %1239
    %v1241 = vsel %vm306, %v1201, -inf
    %1242 = vmax.xlane.f32.xlu0 %v1241
    %v1243 = vpop.xlane.xlu0 %1242
    %v1244 = vsel %vm306, %v1203, -inf
    %1245 = vmax.xlane.f32.xlu0 %v1244
    %v1246 = vpop.xlane.xlu0 %1245
    %v1247 = vsel %vm306, %v1225, -inf
    %1248 = vmax.xlane.f32.xlu0 %v1247
    %v1249 = vpop.xlane.xlu0 %1248
    %v1250 = vsel %vm306, %v1227, -inf
    %1251 = vmax.xlane.f32.xlu0 %v1250
    %v1252 = vpop.xlane.xlu0 %1251
    %v1253 = vsub.f32 %v1153, %v1231
    %v1254 = vsub.f32 %v1155, %v1234
    %v1255 = vsub.f32 %v1177, %v1237
    %v1256 = vsub.f32 %v1179, %v1240
    %v1257 = vsub.f32 %v1201, %v1243
    %v1258 = vsub.f32 %v1203, %v1246
    %v1259 = vsub.f32 %v1225, %v1249
    %v1260 = vsub.f32 %v1227, %v1252
    %1269 = vrot.lane.b32.xlu0 %v1253, 80
    %v1270 = vpop.permute.xlu0 %1269
    %1271 = vrot.lane.b32.xlu0 %v1254, 80
    %v1272 = vpop.permute.xlu0 %1271
    %1273 = vrot.lane.b32.xlu0 %v1255, 80
    %v1274 = vpop.permute.xlu0 %1273
    %1275 = vrot.lane.b32.xlu0 %v1256, 80
    %v1276 = vpop.permute.xlu0 %1275
    %1277 = vrot.lane.b32.xlu0 %v1257, 80
    %v1278 = vpop.permute.xlu0 %1277
    %1279 = vrot.lane.b32.xlu0 %v1258, 80
    %v1280 = vpop.permute.xlu0 %1279
    %1281 = vrot.lane.b32.xlu0 %v1259, 80
    %v1282 = vpop.permute.xlu0 %1281
    %1283 = vrot.lane.b32.xlu0 %v1260, 80
    %v1284 = vpop.permute.xlu0 %1283
    %vm1293 = vcmask 786048
    %1294 = vst.msk [vmem:[#allocation2] sm:$0xff] %vm1293, %v1270
    %1295 = vst.msk [vmem:[#allocation2 + $0x8] sm:$0xff] %vm1293, %v1272
    %1296 = vst.msk [vmem:[#allocation2 + $0x10] sm:$0xff] %vm1293, %v1274
    %1297 = vst.msk [vmem:[#allocation2 + $0x18] sm:$0xff] %vm1293, %v1276
    %1298 = vst.msk [vmem:[#allocation2 + $0x20] sm:$0xff] %vm1293, %v1278
    %1299 = vst.msk [vmem:[#allocation2 + $0x28] sm:$0xff] %vm1293, %v1280
    %1300 = vst.msk [vmem:[#allocation2 + $0x30] sm:$0xff] %vm1293, %v1282
    %1301 = vst.msk [vmem:[#allocation2 + $0x38] sm:$0xff] %vm1293, %v1284
    %1302 = vrot.lane.b32.xlu0 %v300, 32
    %v1303 = vpop.permute.xlu0 %1302
    %1304 = vrot.lane.b32.xlu0 %v305, 32
    %v1305 = vpop.permute.xlu0 %1304
    %v1307 = vsel %vm306, %v1303, 0
    %v1310 = vsel %vm306, %v1305, 0
    %1312 = vmatpush.bf16.xpose.msra.mxu0 0
    %1313 = vmatpush.bf16.xpose.msra.mxu0 0
    %1314 = vmatpush.bf16.xpose.msra.mxu0 0
    %1315 = vmatpush.bf16.xpose.msra.mxu0 0
    %1316 = vmatpush.bf16.xpose.msra.mxu0 0
    %1317 = vmatpush.bf16.xpose.msra.mxu0 0
    %1318 = vmatpush.bf16.xpose.msra.mxu0 0
    %1319 = vmatpush.bf16.xpose.msra.mxu0 %v1310
    %1320 = vmatmul.bf16.gmra.mxu0 %v1307
    %v1321 = vpop.f32.mrf.mxu0
    %v1322 = vadd.f32 %v294, %v1321
    %v1323 = vpop.f32.mrf.mxu0
    %v1324 = vadd.f32 %v295, %v1323
    %1325 = vdwg.mxu0
    %1326 = vrot.lane.b32.xlu0 %v331, 32
    %v1327 = vpop.permute.xlu0 %1326
    %1328 = vrot.lane.b32.xlu0 %v336, 32
    %v1329 = vpop.permute.xlu0 %1328
    %v1331 = vsel %vm306, %v1327, 0
    %v1334 = vsel %vm306, %v1329, 0
    %1336 = vmatpush.bf16.xpose.msra.mxu0 0
    %1337 = vmatpush.bf16.xpose.msra.mxu0 0
    %1338 = vmatpush.bf16.xpose.msra.mxu0 0
    %1339 = vmatpush.bf16.xpose.msra.mxu0 0
    %1340 = vmatpush.bf16.xpose.msra.mxu0 0
    %1341 = vmatpush.bf16.xpose.msra.mxu0 0
    %1342 = vmatpush.bf16.xpose.msra.mxu0 0
    %1343 = vmatpush.bf16.xpose.msra.mxu0 %v1334
    %1344 = vmatmul.bf16.gmra.mxu0 %v1331
    %v1345 = vpop.f32.mrf.mxu0
    %v1346 = vadd.f32 %v294, %v1345
    %v1347 = vpop.f32.mrf.mxu0
    %v1348 = vadd.f32 %v295, %v1347
    %1349 = vdwg.mxu0
    %1350 = vrot.lane.b32.xlu0 %v361, 32
    %v1351 = vpop.permute.xlu0 %1350
    %1352 = vrot.lane.b32.xlu0 %v366, 32
    %v1353 = vpop.permute.xlu0 %1352
    %v1355 = vsel %vm306, %v1351, 0
    %v1358 = vsel %vm306, %v1353, 0
    %1360 = vmatpush.bf16.xpose.msra.mxu0 0
    %1361 = vmatpush.bf16.xpose.msra.mxu0 0
    %1362 = vmatpush.bf16.xpose.msra.mxu0 0
    %1363 = vmatpush.bf16.xpose.msra.mxu0 0
    %1364 = vmatpush.bf16.xpose.msra.mxu0 0
    %1365 = vmatpush.bf16.xpose.msra.mxu0 0
    %1366 = vmatpush.bf16.xpose.msra.mxu0 0
    %1367 = vmatpush.bf16.xpose.msra.mxu0 %v1358
    %1368 = vmatmul.bf16.gmra.mxu0 %v1355
    %v1369 = vpop.f32.mrf.mxu0
    %v1370 = vadd.f32 %v294, %v1369
    %v1371 = vpop.f32.mrf.mxu0
    %v1372 = vadd.f32 %v295, %v1371
    %1373 = vdwg.mxu0
    %1374 = vrot.lane.b32.xlu0 %v391, 32
    %v1375 = vpop.permute.xlu0 %1374
    %1376 = vrot.lane.b32.xlu0 %v396, 32
    %v1377 = vpop.permute.xlu0 %1376
    %v1379 = vsel %vm306, %v1375, 0
    %v1382 = vsel %vm306, %v1377, 0
    %1384 = vmatpush.bf16.xpose.msra.mxu0 0
    %1385 = vmatpush.bf16.xpose.msra.mxu0 0
    %1386 = vmatpush.bf16.xpose.msra.mxu0 0
    %1387 = vmatpush.bf16.xpose.msra.mxu0 0
    %1388 = vmatpush.bf16.xpose.msra.mxu0 0
    %1389 = vmatpush.bf16.xpose.msra.mxu0 0
    %1390 = vmatpush.bf16.xpose.msra.mxu0 0
    %1391 = vmatpush.bf16.xpose.msra.mxu0 %v1382
    %1392 = vmatmul.bf16.gmra.mxu0 %v1379
    %v1393 = vpop.f32.mrf.mxu0
    %v1394 = vadd.f32 %v294, %v1393
    %v1395 = vpop.f32.mrf.mxu0
    %v1396 = vadd.f32 %v295, %v1395
    %1397 = vdwg.mxu0
    %v1398 = vsel %vm306, %v1322, -inf
    %1399 = vmax.xlane.f32.xlu0 %v1398
    %v1400 = vpop.xlane.xlu0 %1399
    %v1401 = vsel %vm306, %v1324, -inf
    %1402 = vmax.xlane.f32.xlu0 %v1401
    %v1403 = vpop.xlane.xlu0 %1402
    %v1404 = vsel %vm306, %v1346, -inf
    %1405 = vmax.xlane.f32.xlu0 %v1404
    %v1406 = vpop.xlane.xlu0 %1405
    %v1407 = vsel %vm306, %v1348, -inf
    %1408 = vmax.xlane.f32.xlu0 %v1407
    %v1409 = vpop.xlane.xlu0 %1408
    %v1410 = vsel %vm306, %v1370, -inf
    %1411 = vmax.xlane.f32.xlu0 %v1410
    %v1412 = vpop.xlane.xlu0 %1411
    %v1413 = vsel %vm306, %v1372, -inf
    %1414 = vmax.xlane.f32.xlu0 %v1413
    %v1415 = vpop.xlane.xlu0 %1414
    %v1416 = vsel %vm306, %v1394, -inf
    %1417 = vmax.xlane.f32.xlu0 %v1416
    %v1418 = vpop.xlane.xlu0 %1417
    %v1419 = vsel %vm306, %v1396, -inf
    %1420 = vmax.xlane.f32.xlu0 %v1419
    %v1421 = vpop.xlane.xlu0 %1420
    %v1422 = vsub.f32 %v1322, %v1400
    %v1423 = vsub.f32 %v1324, %v1403
    %v1424 = vsub.f32 %v1346, %v1406
    %v1425 = vsub.f32 %v1348, %v1409
    %v1426 = vsub.f32 %v1370, %v1412
    %v1427 = vsub.f32 %v1372, %v1415
    %v1428 = vsub.f32 %v1394, %v1418
    %v1429 = vsub.f32 %v1396, %v1421
    %1438 = vrot.lane.b32.xlu0 %v1422, 96
    %v1439 = vpop.permute.xlu0 %1438
    %1440 = vrot.lane.b32.xlu0 %v1423, 96
    %v1441 = vpop.permute.xlu0 %1440
    %1442 = vrot.lane.b32.xlu0 %v1424, 96
    %v1443 = vpop.permute.xlu0 %1442
    %1444 = vrot.lane.b32.xlu0 %v1425, 96
    %v1445 = vpop.permute.xlu0 %1444
    %1446 = vrot.lane.b32.xlu0 %v1426, 96
    %v1447 = vpop.permute.xlu0 %1446
    %1448 = vrot.lane.b32.xlu0 %v1427, 96
    %v1449 = vpop.permute.xlu0 %1448
    %1450 = vrot.lane.b32.xlu0 %v1428, 96
    %v1451 = vpop.permute.xlu0 %1450
    %1452 = vrot.lane.b32.xlu0 %v1429, 96
    %v1453 = vpop.permute.xlu0 %1452
    %vm1462 = vcmask 917248
    %1463 = vst.msk [vmem:[#allocation2] sm:$0xff] %vm1462, %v1439
    %1464 = vst.msk [vmem:[#allocation2 + $0x8] sm:$0xff] %vm1462, %v1441
    %1465 = vst.msk [vmem:[#allocation2 + $0x10] sm:$0xff] %vm1462, %v1443
    %1466 = vst.msk [vmem:[#allocation2 + $0x18] sm:$0xff] %vm1462, %v1445
    %1467 = vst.msk [vmem:[#allocation2 + $0x20] sm:$0xff] %vm1462, %v1447
    %1468 = vst.msk [vmem:[#allocation2 + $0x28] sm:$0xff] %vm1462, %v1449
    %1469 = vst.msk [vmem:[#allocation2 + $0x30] sm:$0xff] %vm1462, %v1451
    %1470 = vst.msk [vmem:[#allocation2 + $0x38] sm:$0xff] %vm1462, %v1453
    %1471 = vrot.lane.b32.xlu0 %v300, 16
    %v1472 = vpop.permute.xlu0 %1471
    %1473 = vrot.lane.b32.xlu0 %v305, 16
    %v1474 = vpop.permute.xlu0 %1473
    %v1476 = vsel %vm306, %v1472, 0
    %v1479 = vsel %vm306, %v1474, 0
    %1481 = vmatpush.bf16.xpose.msra.mxu0 0
    %1482 = vmatpush.bf16.xpose.msra.mxu0 0
    %1483 = vmatpush.bf16.xpose.msra.mxu0 0
    %1484 = vmatpush.bf16.xpose.msra.mxu0 0
    %1485 = vmatpush.bf16.xpose.msra.mxu0 0
    %1486 = vmatpush.bf16.xpose.msra.mxu0 0
    %1487 = vmatpush.bf16.xpose.msra.mxu0 0
    %1488 = vmatpush.bf16.xpose.msra.mxu0 %v1479
    %1489 = vmatmul.bf16.gmra.mxu0 %v1476
    %v1490 = vpop.f32.mrf.mxu0
    %v1491 = vadd.f32 %v294, %v1490
    %v1492 = vpop.f32.mrf.mxu0
    %v1493 = vadd.f32 %v295, %v1492
    %1494 = vdwg.mxu0
    %1495 = vrot.lane.b32.xlu0 %v331, 16
    %v1496 = vpop.permute.xlu0 %1495
    %1497 = vrot.lane.b32.xlu0 %v336, 16
    %v1498 = vpop.permute.xlu0 %1497
    %v1500 = vsel %vm306, %v1496, 0
    %v1503 = vsel %vm306, %v1498, 0
    %1505 = vmatpush.bf16.xpose.msra.mxu0 0
    %1506 = vmatpush.bf16.xpose.msra.mxu0 0
    %1507 = vmatpush.bf16.xpose.msra.mxu0 0
    %1508 = vmatpush.bf16.xpose.msra.mxu0 0
    %1509 = vmatpush.bf16.xpose.msra.mxu0 0
    %1510 = vmatpush.bf16.xpose.msra.mxu0 0
    %1511 = vmatpush.bf16.xpose.msra.mxu0 0
    %1512 = vmatpush.bf16.xpose.msra.mxu0 %v1503
    %1513 = vmatmul.bf16.gmra.mxu0 %v1500
    %v1514 = vpop.f32.mrf.mxu0
    %v1515 = vadd.f32 %v294, %v1514
    %v1516 = vpop.f32.mrf.mxu0
    %v1517 = vadd.f32 %v295, %v1516
    %1518 = vdwg.mxu0
    %1519 = vrot.lane.b32.xlu0 %v361, 16
    %v1520 = vpop.permute.xlu0 %1519
    %1521 = vrot.lane.b32.xlu0 %v366, 16
    %v1522 = vpop.permute.xlu0 %1521
    %v1524 = vsel %vm306, %v1520, 0
    %v1527 = vsel %vm306, %v1522, 0
    %1529 = vmatpush.bf16.xpose.msra.mxu0 0
    %1530 = vmatpush.bf16.xpose.msra.mxu0 0
    %1531 = vmatpush.bf16.xpose.msra.mxu0 0
    %1532 = vmatpush.bf16.xpose.msra.mxu0 0
    %1533 = vmatpush.bf16.xpose.msra.mxu0 0
    %1534 = vmatpush.bf16.xpose.msra.mxu0 0
    %1535 = vmatpush.bf16.xpose.msra.mxu0 0
    %1536 = vmatpush.bf16.xpose.msra.mxu0 %v1527
    %1537 = vmatmul.bf16.gmra.mxu0 %v1524
    %v1538 = vpop.f32.mrf.mxu0
    %v1539 = vadd.f32 %v294, %v1538
    %v1540 = vpop.f32.mrf.mxu0
    %v1541 = vadd.f32 %v295, %v1540
    %1542 = vdwg.mxu0
    %1543 = vrot.lane.b32.xlu0 %v391, 16
    %v1544 = vpop.permute.xlu0 %1543
    %1545 = vrot.lane.b32.xlu0 %v396, 16
    %v1546 = vpop.permute.xlu0 %1545
    %v1548 = vsel %vm306, %v1544, 0
    %v1551 = vsel %vm306, %v1546, 0
    %1553 = vmatpush.bf16.xpose.msra.mxu0 0
    %1554 = vmatpush.bf16.xpose.msra.mxu0 0
    %1555 = vmatpush.bf16.xpose.msra.mxu0 0
    %1556 = vmatpush.bf16.xpose.msra.mxu0 0
    %1557 = vmatpush.bf16.xpose.msra.mxu0 0
    %1558 = vmatpush.bf16.xpose.msra.mxu0 0
    %1559 = vmatpush.bf16.xpose.msra.mxu0 0
    %1560 = vmatpush.bf16.xpose.msra.mxu0 %v1551
    %1561 = vmatmul.bf16.gmra.mxu0 %v1548
    %v1562 = vpop.f32.mrf.mxu0
    %v1563 = vadd.f32 %v294, %v1562
    %v1564 = vpop.f32.mrf.mxu0
    %v1565 = vadd.f32 %v295, %v1564
    %1566 = vdwg.mxu0
    %v1567 = vsel %vm306, %v1491, -inf
    %1568 = vmax.xlane.f32.xlu0 %v1567
    %v1569 = vpop.xlane.xlu0 %1568
    %v1570 = vsel %vm306, %v1493, -inf
    %1571 = vmax.xlane.f32.xlu0 %v1570
    %v1572 = vpop.xlane.xlu0 %1571
    %v1573 = vsel %vm306, %v1515, -inf
    %1574 = vmax.xlane.f32.xlu0 %v1573
    %v1575 = vpop.xlane.xlu0 %1574
    %v1576 = vsel %vm306, %v1517, -inf
    %1577 = vmax.xlane.f32.xlu0 %v1576
    %v1578 = vpop.xlane.xlu0 %1577
    %v1579 = vsel %vm306, %v1539, -inf
    %1580 = vmax.xlane.f32.xlu0 %v1579
    %v1581 = vpop.xlane.xlu0 %1580
    %v1582 = vsel %vm306, %v1541, -inf
    %1583 = vmax.xlane.f32.xlu0 %v1582
    %v1584 = vpop.xlane.xlu0 %1583
    %v1585 = vsel %vm306, %v1563, -inf
    %1586 = vmax.xlane.f32.xlu0 %v1585
    %v1587 = vpop.xlane.xlu0 %1586
    %v1588 = vsel %vm306, %v1565, -inf
    %1589 = vmax.xlane.f32.xlu0 %v1588
    %v1590 = vpop.xlane.xlu0 %1589
    %v1591 = vsub.f32 %v1491, %v1569
    %v1592 = vsub.f32 %v1493, %v1572
    %v1593 = vsub.f32 %v1515, %v1575
    %v1594 = vsub.f32 %v1517, %v1578
    %v1595 = vsub.f32 %v1539, %v1581
    %v1596 = vsub.f32 %v1541, %v1584
    %v1597 = vsub.f32 %v1563, %v1587
    %v1598 = vsub.f32 %v1565, %v1590
    %1607 = vrot.lane.b32.xlu0 %v1591, 112
    %v1608 = vpop.permute.xlu0 %1607
    %1609 = vrot.lane.b32.xlu0 %v1592, 112
    %v1610 = vpop.permute.xlu0 %1609
    %1611 = vrot.lane.b32.xlu0 %v1593, 112
    %v1612 = vpop.permute.xlu0 %1611
    %1613 = vrot.lane.b32.xlu0 %v1594, 112
    %v1614 = vpop.permute.xlu0 %1613
    %1615 = vrot.lane.b32.xlu0 %v1595, 112
    %v1616 = vpop.permute.xlu0 %1615
    %1617 = vrot.lane.b32.xlu0 %v1596, 112
    %v1618 = vpop.permute.xlu0 %1617
    %1619 = vrot.lane.b32.xlu0 %v1597, 112
    %v1620 = vpop.permute.xlu0 %1619
    %1621 = vrot.lane.b32.xlu0 %v1598, 112
    %v1622 = vpop.permute.xlu0 %1621
    %vm1631 = vcmask 1048448
    %1632 = vst.msk [vmem:[#allocation2] sm:$0xff] %vm1631, %v1608
    %1633 = vst.msk [vmem:[#allocation2 + $0x8] sm:$0xff] %vm1631, %v1610
    %1634 = vst.msk [vmem:[#allocation2 + $0x10] sm:$0xff] %vm1631, %v1612
    %1635 = vst.msk [vmem:[#allocation2 + $0x18] sm:$0xff] %vm1631, %v1614
    %1636 = vst.msk [vmem:[#allocation2 + $0x20] sm:$0xff] %vm1631, %v1616
    %1637 = vst.msk [vmem:[#allocation2 + $0x28] sm:$0xff] %vm1631, %v1618
    %1638 = vst.msk [vmem:[#allocation2 + $0x30] sm:$0xff] %vm1631, %v1620
    %1639 = vst.msk [vmem:[#allocation2 + $0x38] sm:$0xff] %vm1631, %v1622
    %v1640 = vld [vmem:[#allocation2] sm:$0xff]
    %v1641 = vld [vmem:[#allocation2 + $0x8] sm:$0xff]
    %v1642 = vld [vmem:[#allocation2 + $0x10] sm:$0xff]
    %v1643 = vld [vmem:[#allocation2 + $0x18] sm:$0xff]
    %v1644 = vld [vmem:[#allocation2 + $0x20] sm:$0xff]
    %v1645 = vld [vmem:[#allocation2 + $0x28] sm:$0xff]
    %v1646 = vld [vmem:[#allocation2 + $0x30] sm:$0xff]
    %v1647 = vld [vmem:[#allocation2 + $0x38] sm:$0xff]
    %v1648 = vmul.f32 %v1640, 1.442695
    %v1649 = vpow.pop %v1648
    %v1650 = vmul.f32 %v1641, 1.442695
    %v1651 = vpow.pop %v1650
    %v1652 = vmul.f32 %v1642, 1.442695
    %v1653 = vpow.pop %v1652
    %v1654 = vmul.f32 %v1643, 1.442695
    %v1655 = vpow.pop %v1654
    %v1656 = vmul.f32 %v1644, 1.442695
    %v1657 = vpow.pop %v1656
    %v1658 = vmul.f32 %v1645, 1.442695
    %v1659 = vpow.pop %v1658
    %v1660 = vmul.f32 %v1646, 1.442695
    %v1661 = vpow.pop %v1660
    %v1662 = vmul.f32 %v1647, 1.442695
    %v1663 = vpow.pop %v1662
    %v1664 = vld [vmem:[#allocation4] sm:$0xff]
    %v1665 = vld [vmem:[#allocation4 + $0x8] sm:$0xff]
    %v1666 = vld [vmem:[#allocation4 + $0x10] sm:$0xff]
    %v1667 = vld [vmem:[#allocation4 + $0x18] sm:$0xff]
    %v1668 = vld [vmem:[#allocation4 + $0x20] sm:$0xff]
    %v1669 = vld [vmem:[#allocation4 + $0x28] sm:$0xff]
    %v1670 = vld [vmem:[#allocation4 + $0x30] sm:$0xff]
    %v1671 = vld [vmem:[#allocation4 + $0x38] sm:$0xff]
    %v1672 = vld [vmem:[#allocation4 + $0x40] sm:$0xff]
    %v1673 = vld [vmem:[#allocation4 + $0x48] sm:$0xff]
    %v1674 = vld [vmem:[#allocation4 + $0x50] sm:$0xff]
    %v1675 = vld [vmem:[#allocation4 + $0x58] sm:$0xff]
    %v1676 = vld [vmem:[#allocation4 + $0x60] sm:$0xff]
    %v1677 = vld [vmem:[#allocation4 + $0x68] sm:$0xff]
    %v1678 = vld [vmem:[#allocation4 + $0x70] sm:$0xff]
    %v1679 = vld [vmem:[#allocation4 + $0x78] sm:$0xff]
    %1680 = vmatpush.msra.mxu0 %v1679
    %1681 = vmatpush.msra.mxu0 %v1678
    %1682 = vmatpush.msra.mxu0 %v1677
    %1683 = vmatpush.msra.mxu0 %v1676
    %1684 = vmatpush.msra.mxu0 %v1675
    %1685 = vmatpush.msra.mxu0 %v1674
    %1686 = vmatpush.msra.mxu0 %v1673
    %1687 = vmatpush.msra.mxu0 %v1672
    %1688 = vmatpush.msra.mxu0 %v1671
    %1689 = vmatpush.msra.mxu0 %v1670
    %1690 = vmatpush.msra.mxu0 %v1669
    %1691 = vmatpush.msra.mxu0 %v1668
    %1692 = vmatpush.msra.mxu0 %v1667
    %1693 = vmatpush.msra.mxu0 %v1666
    %1694 = vmatpush.msra.mxu0 %v1665
    %1695 = vmatpush.msra.mxu0 %v1664
    %1696 = vmatmul.f32.gmra.mxu0 %v1649
    %v1697 = vpop.f32.mrf.mxu0
    %v1698 = vadd.f32 0.0, %v1697
    %1699 = vmatmul.f32.gmra.mxu0 %v1651
    %v1700 = vpop.f32.mrf.mxu0
    %v1701 = vadd.f32 0.0, %v1700
    %1702 = vmatmul.f32.gmra.mxu0 %v1653
    %v1703 = vpop.f32.mrf.mxu0
    %v1704 = vadd.f32 0.0, %v1703
    %1705 = vmatmul.f32.gmra.mxu0 %v1655
    %v1706 = vpop.f32.mrf.mxu0
    %v1707 = vadd.f32 0.0, %v1706
    %1708 = vmatmul.f32.gmra.mxu0 %v1657
    %v1709 = vpop.f32.mrf.mxu0
    %v1710 = vadd.f32 0.0, %v1709
    %1711 = vmatmul.f32.gmra.mxu0 %v1659
    %v1712 = vpop.f32.mrf.mxu0
    %v1713 = vadd.f32 0.0, %v1712
    %1714 = vmatmul.f32.gmra.mxu0 %v1661
    %v1715 = vpop.f32.mrf.mxu0
    %v1716 = vadd.f32 0.0, %v1715
    %1717 = vmatmul.f32.gmra.mxu0 %v1663
    %v1718 = vpop.f32.mrf.mxu0
    %v1719 = vadd.f32 0.0, %v1718
    %1720 = vdwg.mxu0
    %v1721 = vrcp.pop %v1698
    %v1722 = vrcp.pop %v1701
    %v1723 = vrcp.pop %v1704
    %v1724 = vrcp.pop %v1707
    %v1725 = vrcp.pop %v1710
    %v1726 = vrcp.pop %v1713
    %v1727 = vrcp.pop %v1716
    %v1728 = vrcp.pop %v1719
    %v1729 = vmul.f32 %v1649, %v1721
    %v1730 = vmul.f32 %v1651, %v1722
    %v1731 = vmul.f32 %v1653, %v1723
    %v1732 = vmul.f32 %v1655, %v1724
    %v1733 = vmul.f32 %v1657, %v1725
    %v1734 = vmul.f32 %v1659, %v1726
    %v1735 = vmul.f32 %v1661, %v1727
    %v1736 = vmul.f32 %v1663, %v1728
    %v1737 = vld [vmem:[#allocation6] sm:$0xff]
    %v1738 = vld [vmem:[#allocation6 + $0x8] sm:$0xff]
    %v1739 = vld [vmem:[#allocation6 + $0x10] sm:$0xff]
    %v1740 = vld [vmem:[#allocation6 + $0x18] sm:$0xff]
    %v1741 = vld [vmem:[#allocation6 + $0x20] sm:$0xff]
    %v1742 = vld [vmem:[#allocation6 + $0x28] sm:$0xff]
    %v1743 = vld [vmem:[#allocation6 + $0x30] sm:$0xff]
    %v1744 = vld [vmem:[#allocation6 + $0x38] sm:$0xff]
    %v1745 = vld [vmem:[#allocation6 + $0x40] sm:$0xff]
    %v1746 = vld [vmem:[#allocation6 + $0x48] sm:$0xff]
    %v1747 = vld [vmem:[#allocation6 + $0x50] sm:$0xff]
    %v1748 = vld [vmem:[#allocation6 + $0x58] sm:$0xff]
    %v1749 = vld [vmem:[#allocation6 + $0x60] sm:$0xff]
    %v1750 = vld [vmem:[#allocation6 + $0x68] sm:$0xff]
    %v1751 = vld [vmem:[#allocation6 + $0x70] sm:$0xff]
    %v1752 = vld [vmem:[#allocation6 + $0x78] sm:$0xff]
    %1753 = vmatpush.msra.mxu0 %v1752
    %1754 = vmatpush.msra.mxu0 %v1751
    %1755 = vmatpush.msra.mxu0 %v1750
    %1756 = vmatpush.msra.mxu0 %v1749
    %1757 = vmatpush.msra.mxu0 %v1748
    %1758 = vmatpush.msra.mxu0 %v1747
    %1759 = vmatpush.msra.mxu0 %v1746
    %1760 = vmatpush.msra.mxu0 %v1745
    %1761 = vmatpush.msra.mxu0 %v1744
    %1762 = vmatpush.msra.mxu0 %v1743
    %1763 = vmatpush.msra.mxu0 %v1742
    %1764 = vmatpush.msra.mxu0 %v1741
    %1765 = vmatpush.msra.mxu0 %v1740
    %1766 = vmatpush.msra.mxu0 %v1739
    %1767 = vmatpush.msra.mxu0 %v1738
    %1768 = vmatpush.msra.mxu0 %v1737
    %1769 = vmatmul.f32.gmra.mxu0 %v1729
    %v1770 = vpop.f32.mrf.mxu0
    %v1771 = vadd.f32 0.0, %v1770
    %1772 = vmatmul.f32.gmra.mxu0 %v1730
    %v1773 = vpop.f32.mrf.mxu0
    %v1774 = vadd.f32 0.0, %v1773
    %1775 = vmatmul.f32.gmra.mxu0 %v1731
    %v1776 = vpop.f32.mrf.mxu0
    %v1777 = vadd.f32 0.0, %v1776
    %1778 = vmatmul.f32.gmra.mxu0 %v1732
    %v1779 = vpop.f32.mrf.mxu0
    %v1780 = vadd.f32 0.0, %v1779
    %1781 = vmatmul.f32.gmra.mxu0 %v1733
    %v1782 = vpop.f32.mrf.mxu0
    %v1783 = vadd.f32 0.0, %v1782
    %1784 = vmatmul.f32.gmra.mxu0 %v1734
    %v1785 = vpop.f32.mrf.mxu0
    %v1786 = vadd.f32 0.0, %v1785
    %1787 = vmatmul.f32.gmra.mxu0 %v1735
    %v1788 = vpop.f32.mrf.mxu0
    %v1789 = vadd.f32 0.0, %v1788
    %1790 = vmatmul.f32.gmra.mxu0 %v1736
    %v1791 = vpop.f32.mrf.mxu0
    %v1792 = vadd.f32 0.0, %v1791
    %1793 = vdwg.mxu0
    %v1794 = vld [vmem:[#allocation8] sm:$0xff]
    %v1795 = vld [vmem:[#allocation8 + $0x8] sm:$0xff]
    %v1796 = vld [vmem:[#allocation8 + $0x10] sm:$0xff]
    %v1797 = vld [vmem:[#allocation8 + $0x18] sm:$0xff]
    %v1798 = vld [vmem:[#allocation8 + $0x20] sm:$0xff]
    %v1799 = vld [vmem:[#allocation8 + $0x28] sm:$0xff]
    %v1800 = vld [vmem:[#allocation8 + $0x30] sm:$0xff]
    %v1801 = vld [vmem:[#allocation8 + $0x38] sm:$0xff]
    %v1802 = vld [vmem:[#allocation8 + $0x40] sm:$0xff]
    %v1803 = vld [vmem:[#allocation8 + $0x48] sm:$0xff]
    %v1804 = vld [vmem:[#allocation8 + $0x50] sm:$0xff]
    %v1805 = vld [vmem:[#allocation8 + $0x58] sm:$0xff]
    %v1806 = vld [vmem:[#allocation8 + $0x60] sm:$0xff]
    %v1807 = vld [vmem:[#allocation8 + $0x68] sm:$0xff]
    %v1808 = vld [vmem:[#allocation8 + $0x70] sm:$0xff]
    %v1809 = vld [vmem:[#allocation8 + $0x78] sm:$0xff]
    %1810 = vmatpush.msra.mxu0 %v1809
    %1811 = vmatpush.msra.mxu0 %v1808
    %1812 = vmatpush.msra.mxu0 %v1807
    %1813 = vmatpush.msra.mxu0 %v1806
    %1814 = vmatpush.msra.mxu0 %v1805
    %1815 = vmatpush.msra.mxu0 %v1804
    %1816 = vmatpush.msra.mxu0 %v1803
    %1817 = vmatpush.msra.mxu0 %v1802
    %1818 = vmatpush.msra.mxu0 %v1801
    %1819 = vmatpush.msra.mxu0 %v1800
    %1820 = vmatpush.msra.mxu0 %v1799
    %1821 = vmatpush.msra.mxu0 %v1798
    %1822 = vmatpush.msra.mxu0 %v1797
    %1823 = vmatpush.msra.mxu0 %v1796
    %1824 = vmatpush.msra.mxu0 %v1795
    %1825 = vmatpush.msra.mxu0 %v1794
    %1826 = vmatmul.f32.gmra.mxu0 %v1771
    %v1827 = vpop.f32.mrf.mxu0
    %v1828 = vadd.f32 0.0, %v1827
    %1829 = vmatmul.f32.gmra.mxu0 %v1774
    %v1830 = vpop.f32.mrf.mxu0
    %v1831 = vadd.f32 0.0, %v1830
    %1832 = vmatmul.f32.gmra.mxu0 %v1777
    %v1833 = vpop.f32.mrf.mxu0
    %v1834 = vadd.f32 0.0, %v1833
    %1835 = vmatmul.f32.gmra.mxu0 %v1780
    %v1836 = vpop.f32.mrf.mxu0
    %v1837 = vadd.f32 0.0, %v1836
    %1838 = vmatmul.f32.gmra.mxu0 %v1783
    %v1839 = vpop.f32.mrf.mxu0
    %v1840 = vadd.f32 0.0, %v1839
    %1841 = vmatmul.f32.gmra.mxu0 %v1786
    %v1842 = vpop.f32.mrf.mxu0
    %v1843 = vadd.f32 0.0, %v1842
    %1844 = vmatmul.f32.gmra.mxu0 %v1789
    %v1845 = vpop.f32.mrf.mxu0
    %v1846 = vadd.f32 0.0, %v1845
    %1847 = vmatmul.f32.gmra.mxu0 %v1792
    %v1848 = vpop.f32.mrf.mxu0
    %v1849 = vadd.f32 0.0, %v1848
    %1850 = vdwg.mxu0
    %v1851 = vsub.f32 %v1771, %v1828
    %v1852 = vsub.f32 %v1774, %v1831
    %v1853 = vsub.f32 %v1777, %v1834
    %v1854 = vsub.f32 %v1780, %v1837
    %v1855 = vsub.f32 %v1783, %v1840
    %v1856 = vsub.f32 %v1786, %v1843
    %v1857 = vsub.f32 %v1789, %v1846
    %v1858 = vsub.f32 %v1792, %v1849
    %v1859 = vmul.f32 %v1851, %v1851
    %v1860 = vmul.f32 %v1852, %v1852
    %v1861 = vmul.f32 %v1853, %v1853
    %v1862 = vmul.f32 %v1854, %v1854
    %v1863 = vmul.f32 %v1855, %v1855
    %v1864 = vmul.f32 %v1856, %v1856
    %v1865 = vmul.f32 %v1857, %v1857
    %v1866 = vmul.f32 %v1858, %v1858
    %1867 = vmatpush.msra.mxu0 %v1809
    %1868 = vmatpush.msra.mxu0 %v1808
    %1869 = vmatpush.msra.mxu0 %v1807
    %1870 = vmatpush.msra.mxu0 %v1806
    %1871 = vmatpush.msra.mxu0 %v1805
    %1872 = vmatpush.msra.mxu0 %v1804
    %1873 = vmatpush.msra.mxu0 %v1803
    %1874 = vmatpush.msra.mxu0 %v1802
    %1875 = vmatpush.msra.mxu0 %v1801
    %1876 = vmatpush.msra.mxu0 %v1800
    %1877 = vmatpush.msra.mxu0 %v1799
    %1878 = vmatpush.msra.mxu0 %v1798
    %1879 = vmatpush.msra.mxu0 %v1797
    %1880 = vmatpush.msra.mxu0 %v1796
    %1881 = vmatpush.msra.mxu0 %v1795
    %1882 = vmatpush.msra.mxu0 %v1794
    %1883 = vmatmul.f32.gmra.mxu0 %v1859
    %v1884 = vpop.f32.mrf.mxu0
    %v1885 = vadd.f32 1e-05, %v1884
    %1886 = vmatmul.f32.gmra.mxu0 %v1860
    %v1887 = vpop.f32.mrf.mxu0
    %v1888 = vadd.f32 1e-05, %v1887
    %1889 = vmatmul.f32.gmra.mxu0 %v1861
    %v1890 = vpop.f32.mrf.mxu0
    %v1891 = vadd.f32 1e-05, %v1890
    %1892 = vmatmul.f32.gmra.mxu0 %v1862
    %v1893 = vpop.f32.mrf.mxu0
    %v1894 = vadd.f32 1e-05, %v1893
    %1895 = vmatmul.f32.gmra.mxu0 %v1863
    %v1896 = vpop.f32.mrf.mxu0
    %v1897 = vadd.f32 1e-05, %v1896
    %1898 = vmatmul.f32.gmra.mxu0 %v1864
    %v1899 = vpop.f32.mrf.mxu0
    %v1900 = vadd.f32 1e-05, %v1899
    %1901 = vmatmul.f32.gmra.mxu0 %v1865
    %v1902 = vpop.f32.mrf.mxu0
    %v1903 = vadd.f32 1e-05, %v1902
    %1904 = vmatmul.f32.gmra.mxu0 %v1866
    %v1905 = vpop.f32.mrf.mxu0
    %v1906 = vadd.f32 1e-05, %v1905
    %1907 = vdwg.mxu0
    %v1908 = vrsqrt.pop %v1885
    %v1909 = vmul.f32 %v1908, %v1885
    %v1910 = vmul.f32 %v1909, %v1908
    %v1911 = vmul.f32 0.5, %v1910
    %v1912 = vsub.f32 1.5, %v1911
    %v1913 = vmul.f32 %v1908, %v1912
    %vm1914 = vweird.f32 %v1885
    %vm1915 = vweird.f32 %v1908
    %vm1916 = vmor %vm1914, %vm1915
    %v1917 = vsel %vm1916, %v1908, %v1913
    %v1918 = vrsqrt.pop %v1888
    %v1919 = vmul.f32 %v1918, %v1888
    %v1920 = vmul.f32 %v1919, %v1918
    %v1921 = vmul.f32 0.5, %v1920
    %v1922 = vsub.f32 1.5, %v1921
    %v1923 = vmul.f32 %v1918, %v1922
    %vm1924 = vweird.f32 %v1888
    %vm1925 = vweird.f32 %v1918
    %vm1926 = vmor %vm1924, %vm1925
    %v1927 = vsel %vm1926, %v1918, %v1923
    %v1928 = vrsqrt.pop %v1891
    %v1929 = vmul.f32 %v1928, %v1891
    %v1930 = vmul.f32 %v1929, %v1928
    %v1931 = vmul.f32 0.5, %v1930
    %v1932 = vsub.f32 1.5, %v1931
    %v1933 = vmul.f32 %v1928, %v1932
    %vm1934 = vweird.f32 %v1891
    %vm1935 = vweird.f32 %v1928
    %vm1936 = vmor %vm1934, %vm1935
    %v1937 = vsel %vm1936, %v1928, %v1933
    %v1938 = vrsqrt.pop %v1894
    %v1939 = vmul.f32 %v1938, %v1894
    %v1940 = vmul.f32 %v1939, %v1938
    %v1941 = vmul.f32 0.5, %v1940
    %v1942 = vsub.f32 1.5, %v1941
    %v1943 = vmul.f32 %v1938, %v1942
    %vm1944 = vweird.f32 %v1894
    %vm1945 = vweird.f32 %v1938
    %vm1946 = vmor %vm1944, %vm1945
    %v1947 = vsel %vm1946, %v1938, %v1943
    %v1948 = vrsqrt.pop %v1897
    %v1949 = vmul.f32 %v1948, %v1897
    %v1950 = vmul.f32 %v1949, %v1948
    %v1951 = vmul.f32 0.5, %v1950
    %v1952 = vsub.f32 1.5, %v1951
    %v1953 = vmul.f32 %v1948, %v1952
    %vm1954 = vweird.f32 %v1897
    %vm1955 = vweird.f32 %v1948
    %vm1956 = vmor %vm1954, %vm1955
    %v1957 = vsel %vm1956, %v1948, %v1953
    %v1958 = vrsqrt.pop %v1900
    %v1959 = vmul.f32 %v1958, %v1900
    %v1960 = vmul.f32 %v1959, %v1958
    %v1961 = vmul.f32 0.5, %v1960
    %v1962 = vsub.f32 1.5, %v1961
    %v1963 = vmul.f32 %v1958, %v1962
    %vm1964 = vweird.f32 %v1900
    %vm1965 = vweird.f32 %v1958
    %vm1966 = vmor %vm1964, %vm1965
    %v1967 = vsel %vm1966, %v1958, %v1963
    %v1968 = vrsqrt.pop %v1903
    %v1969 = vmul.f32 %v1968, %v1903
    %v1970 = vmul.f32 %v1969, %v1968
    %v1971 = vmul.f32 0.5, %v1970
    %v1972 = vsub.f32 1.5, %v1971
    %v1973 = vmul.f32 %v1968, %v1972
    %vm1974 = vweird.f32 %v1903
    %vm1975 = vweird.f32 %v1968
    %vm1976 = vmor %vm1974, %vm1975
    %v1977 = vsel %vm1976, %v1968, %v1973
    %v1978 = vrsqrt.pop %v1906
    %v1979 = vmul.f32 %v1978, %v1906
    %v1980 = vmul.f32 %v1979, %v1978
    %v1981 = vmul.f32 0.5, %v1980
    %v1982 = vsub.f32 1.5, %v1981
    %v1983 = vmul.f32 %v1978, %v1982
    %vm1984 = vweird.f32 %v1906
    %vm1985 = vweird.f32 %v1978
    %vm1986 = vmor %vm1984, %vm1985
    %v1987 = vsel %vm1986, %v1978, %v1983
    %v1988 = vmul.f32 %v1851, %v1917
    %v1989 = vmul.f32 %v1852, %v1927
    %v1990 = vmul.f32 %v1853, %v1937
    %v1991 = vmul.f32 %v1854, %v1947
    %v1992 = vmul.f32 %v1855, %v1957
    %v1993 = vmul.f32 %v1856, %v1967
    %v1994 = vmul.f32 %v1857, %v1977
    %v1995 = vmul.f32 %v1858, %v1987
    %v1996 = vld [vmem:[%s3] sm:$0x1]
    %v1998 = vperm.slane %v1996, 0
    %v2000 = vmul.f32 %v1988, %v1998
    %v2001 = vmul.f32 %v1989, %v1998
    %v2002 = vmul.f32 %v1990, %v1998
    %v2003 = vmul.f32 %v1991, %v1998
    %v2004 = vmul.f32 %v1992, %v1998
    %v2005 = vmul.f32 %v1993, %v1998
    %v2006 = vmul.f32 %v1994, %v1998
    %v2007 = vmul.f32 %v1995, %v1998
    %v2008 = vld [vmem:[%s4] sm:$0x1]
    %v2010 = vperm.slane %v2008, 0
    %v2012 = vadd.f32 %v2000, %v2010
    %v2013 = vadd.f32 %v2001, %v2010
    %v2014 = vadd.f32 %v2002, %v2010
    %v2015 = vadd.f32 %v2003, %v2010
    %v2016 = vadd.f32 %v2004, %v2010
    %v2017 = vadd.f32 %v2005, %v2010
    %v2018 = vadd.f32 %v2006, %v2010
    %v2019 = vadd.f32 %v2007, %v2010
    %v2020 = vpack.c.bf16 %v2012, %v2012
    %v2021 = vpack.c.bf16 %v2013, %v2013
    %v2022 = vpack.c.bf16 %v2014, %v2014
    %v2023 = vpack.c.bf16 %v2015, %v2015
    %v2024 = vpack.c.bf16 %v2016, %v2016
    %v2025 = vpack.c.bf16 %v2017, %v2017
    %v2026 = vpack.c.bf16 %v2018, %v2018
    %v2027 = vpack.c.bf16 %v2019, %v2019
    %v2030 = vunpack.c.l.b16 %v2020
    %v2031 = vunpack.c.l.b16 %v2021
    %v2032 = vpack.c.b16 %v2031, %v2030
    %v2035 = vunpack.c.l.b16 %v279
    %v2036 = vunpack.c.l.b16 %v280
    %v2037 = vpack.c.b16 %v2036, %v2035
    %v2040 = vsel %vm306, %v2032, 0
    %2042 = vmatpush.bf16.msra.mxu0 0
    %2043 = vmatpush.bf16.msra.mxu0 0
    %2044 = vmatpush.bf16.msra.mxu0 0
    %2045 = vmatpush.bf16.msra.mxu0 0
    %2046 = vmatpush.bf16.msra.mxu0 0
    %2047 = vmatpush.bf16.msra.mxu0 0
    %2048 = vmatpush.bf16.msra.mxu0 0
    %2049 = vmatpush.bf16.msra.mxu0 %v2037
    %2050 = vmatmul.bf16.gmra.mxu0 %v2040
    %v2051 = vpop.f32.mrf.mxu0
    %v2052 = vadd.f32 0.0, %v2051
    %v2053 = vpop.f32.mrf.mxu0
    %v2054 = vadd.f32 0.0, %v2053
    %2055 = vdwg.mxu0
    %v2058 = vunpack.c.l.b16 %v2022
    %v2059 = vunpack.c.l.b16 %v2023
    %v2060 = vpack.c.b16 %v2059, %v2058
    %v2063 = vunpack.c.l.b16 %v281
    %v2064 = vunpack.c.l.b16 %v282
    %v2065 = vpack.c.b16 %v2064, %v2063
    %v2068 = vsel %vm306, %v2060, 0
    %2070 = vmatpush.bf16.msra.mxu0 0
    %2071 = vmatpush.bf16.msra.mxu0 0
    %2072 = vmatpush.bf16.msra.mxu0 0
    %2073 = vmatpush.bf16.msra.mxu0 0
    %2074 = vmatpush.bf16.msra.mxu0 0
    %2075 = vmatpush.bf16.msra.mxu0 0
    %2076 = vmatpush.bf16.msra.mxu0 0
    %2077 = vmatpush.bf16.msra.mxu0 %v2065
    %2078 = vmatmul.bf16.gmra.mxu0 %v2068
    %v2079 = vpop.f32.mrf.mxu0
    %v2080 = vadd.f32 0.0, %v2079
    %v2081 = vpop.f32.mrf.mxu0
    %v2082 = vadd.f32 0.0, %v2081
    %2083 = vdwg.mxu0
    %v2086 = vunpack.c.l.b16 %v2024
    %v2087 = vunpack.c.l.b16 %v2025
    %v2088 = vpack.c.b16 %v2087, %v2086
    %v2091 = vunpack.c.l.b16 %v283
    %v2092 = vunpack.c.l.b16 %v284
    %v2093 = vpack.c.b16 %v2092, %v2091
    %v2096 = vsel %vm306, %v2088, 0
    %2098 = vmatpush.bf16.msra.mxu0 0
    %2099 = vmatpush.bf16.msra.mxu0 0
    %2100 = vmatpush.bf16.msra.mxu0 0
    %2101 = vmatpush.bf16.msra.mxu0 0
    %2102 = vmatpush.bf16.msra.mxu0 0
    %2103 = vmatpush.bf16.msra.mxu0 0
    %2104 = vmatpush.bf16.msra.mxu0 0
    %2105 = vmatpush.bf16.msra.mxu0 %v2093
    %2106 = vmatmul.bf16.gmra.mxu0 %v2096
    %v2107 = vpop.f32.mrf.mxu0
    %v2108 = vadd.f32 0.0, %v2107
    %v2109 = vpop.f32.mrf.mxu0
    %v2110 = vadd.f32 0.0, %v2109
    %2111 = vdwg.mxu0
    %v2114 = vunpack.c.l.b16 %v2026
    %v2115 = vunpack.c.l.b16 %v2027
    %v2116 = vpack.c.b16 %v2115, %v2114
    %v2119 = vunpack.c.l.b16 %v285
    %v2120 = vunpack.c.l.b16 %v286
    %v2121 = vpack.c.b16 %v2120, %v2119
    %v2124 = vsel %vm306, %v2116, 0
    %2126 = vmatpush.bf16.msra.mxu0 0
    %2127 = vmatpush.bf16.msra.mxu0 0
    %2128 = vmatpush.bf16.msra.mxu0 0
    %2129 = vmatpush.bf16.msra.mxu0 0
    %2130 = vmatpush.bf16.msra.mxu0 0
    %2131 = vmatpush.bf16.msra.mxu0 0
    %2132 = vmatpush.bf16.msra.mxu0 0
    %2133 = vmatpush.bf16.msra.mxu0 %v2121
    %2134 = vmatmul.bf16.gmra.mxu0 %v2124
    %v2135 = vpop.f32.mrf.mxu0
    %v2136 = vadd.f32 0.0, %v2135
    %v2137 = vpop.f32.mrf.mxu0
    %v2138 = vadd.f32 0.0, %v2137
    %2139 = vdwg.mxu0
    %v2140 = vpack.c.bf16 %v2052, %v2052
    %v2141 = vpack.c.bf16 %v2054, %v2054
    %v2142 = vpack.c.bf16 %v2080, %v2080
    %v2143 = vpack.c.bf16 %v2082, %v2082
    %v2144 = vpack.c.bf16 %v2108, %v2108
    %v2145 = vpack.c.bf16 %v2110, %v2110
    %v2146 = vpack.c.bf16 %v2136, %v2136
    %v2147 = vpack.c.bf16 %v2138, %v2138
    %vm2148 = vcmask 125952
    %2149 = vst.msk [vmem:[#allocation3] sm:$0xf] %vm2148, %v2140
    %2150 = vst.msk [vmem:[#allocation3 + $0x4] sm:$0xf] %vm2148, %v2141
    %2151 = vst.msk [vmem:[#allocation3 + $0x8] sm:$0xf] %vm2148, %v2142
    %2152 = vst.msk [vmem:[#allocation3 + $0xc] sm:$0xf] %vm2148, %v2143
    %2153 = vst.msk [vmem:[#allocation3 + $0x10] sm:$0xf] %vm2148, %v2144
    %2154 = vst.msk [vmem:[#allocation3 + $0x14] sm:$0xf] %vm2148, %v2145
    %2155 = vst.msk [vmem:[#allocation3 + $0x18] sm:$0xf] %vm2148, %v2146
    %2156 = vst.msk [vmem:[#allocation3 + $0x1c] sm:$0xf] %vm2148, %v2147
    %2157 = vrot.lane.b32.xlu0 %v2032, 112
    %v2158 = vpop.permute.xlu0 %2157
    %2159 = vrot.lane.b32.xlu0 %v2037, 112
    %v2160 = vpop.permute.xlu0 %2159
    %v2163 = vsel %vm306, %v2158, 0
    %2165 = vmatpush.bf16.msra.mxu0 0
    %2166 = vmatpush.bf16.msra.mxu0 0
    %2167 = vmatpush.bf16.msra.mxu0 0
    %2168 = vmatpush.bf16.msra.mxu0 0
    %2169 = vmatpush.bf16.msra.mxu0 0
    %2170 = vmatpush.bf16.msra.mxu0 0
    %2171 = vmatpush.bf16.msra.mxu0 0
    %2172 = vmatpush.bf16.msra.mxu0 %v2160
    %2173 = vmatmul.bf16.gmra.mxu0 %v2163
    %v2174 = vpop.f32.mrf.mxu0
    %v2175 = vadd.f32 0.0, %v2174
    %v2176 = vpop.f32.mrf.mxu0
    %v2177 = vadd.f32 0.0, %v2176
    %2178 = vdwg.mxu0
    %2179 = vrot.lane.b32.xlu0 %v2060, 112
    %v2180 = vpop.permute.xlu0 %2179
    %2181 = vrot.lane.b32.xlu0 %v2065, 112
    %v2182 = vpop.permute.xlu0 %2181
    %v2185 = vsel %vm306, %v2180, 0
    %2187 = vmatpush.bf16.msra.mxu0 0
    %2188 = vmatpush.bf16.msra.mxu0 0
    %2189 = vmatpush.bf16.msra.mxu0 0
    %2190 = vmatpush.bf16.msra.mxu0 0
    %2191 = vmatpush.bf16.msra.mxu0 0
    %2192 = vmatpush.bf16.msra.mxu0 0
    %2193 = vmatpush.bf16.msra.mxu0 0
    %2194 = vmatpush.bf16.msra.mxu0 %v2182
    %2195 = vmatmul.bf16.gmra.mxu0 %v2185
    %v2196 = vpop.f32.mrf.mxu0
    %v2197 = vadd.f32 0.0, %v2196
    %v2198 = vpop.f32.mrf.mxu0
    %v2199 = vadd.f32 0.0, %v2198
    %2200 = vdwg.mxu0
    %2201 = vrot.lane.b32.xlu0 %v2088, 112
    %v2202 = vpop.permute.xlu0 %2201
    %2203 = vrot.lane.b32.xlu0 %v2093, 112
    %v2204 = vpop.permute.xlu0 %2203
    %v2207 = vsel %vm306, %v2202, 0
    %2209 = vmatpush.bf16.msra.mxu0 0
    %2210 = vmatpush.bf16.msra.mxu0 0
    %2211 = vmatpush.bf16.msra.mxu0 0
    %2212 = vmatpush.bf16.msra.mxu0 0
    %2213 = vmatpush.bf16.msra.mxu0 0
    %2214 = vmatpush.bf16.msra.mxu0 0
    %2215 = vmatpush.bf16.msra.mxu0 0
    %2216 = vmatpush.bf16.msra.mxu0 %v2204
    %2217 = vmatmul.bf16.gmra.mxu0 %v2207
    %v2218 = vpop.f32.mrf.mxu0
    %v2219 = vadd.f32 0.0, %v2218
    %v2220 = vpop.f32.mrf.mxu0
    %v2221 = vadd.f32 0.0, %v2220
    %2222 = vdwg.mxu0
    %2223 = vrot.lane.b32.xlu0 %v2116, 112
    %v2224 = vpop.permute.xlu0 %2223
    %2225 = vrot.lane.b32.xlu0 %v2121, 112
    %v2226 = vpop.permute.xlu0 %2225
    %v2229 = vsel %vm306, %v2224, 0
    %2231 = vmatpush.bf16.msra.mxu0 0
    %2232 = vmatpush.bf16.msra.mxu0 0
    %2233 = vmatpush.bf16.msra.mxu0 0
    %2234 = vmatpush.bf16.msra.mxu0 0
    %2235 = vmatpush.bf16.msra.mxu0 0
    %2236 = vmatpush.bf16.msra.mxu0 0
    %2237 = vmatpush.bf16.msra.mxu0 0
    %2238 = vmatpush.bf16.msra.mxu0 %v2226
    %2239 = vmatmul.bf16.gmra.mxu0 %v2229
    %v2240 = vpop.f32.mrf.mxu0
    %v2241 = vadd.f32 0.0, %v2240
    %v2242 = vpop.f32.mrf.mxu0
    %v2243 = vadd.f32 0.0, %v2242
    %2244 = vdwg.mxu0
    %v2245 = vpack.c.bf16 %v2175, %v2175
    %v2246 = vpack.c.bf16 %v2177, %v2177
    %v2247 = vpack.c.bf16 %v2197, %v2197
    %v2248 = vpack.c.bf16 %v2199, %v2199
    %v2249 = vpack.c.bf16 %v2219, %v2219
    %v2250 = vpack.c.bf16 %v2221, %v2221
    %v2251 = vpack.c.bf16 %v2241, %v2241
    %v2252 = vpack.c.bf16 %v2243, %v2243
    %2261 = vrot.lane.b32.xlu0 %v2245, 16
    %v2262 = vpop.permute.xlu0 %2261
    %2263 = vrot.lane.b32.xlu0 %v2246, 16
    %v2264 = vpop.permute.xlu0 %2263
    %2265 = vrot.lane.b32.xlu0 %v2247, 16
    %v2266 = vpop.permute.xlu0 %2265
    %2267 = vrot.lane.b32.xlu0 %v2248, 16
    %v2268 = vpop.permute.xlu0 %2267
    %2269 = vrot.lane.b32.xlu0 %v2249, 16
    %v2270 = vpop.permute.xlu0 %2269
    %2271 = vrot.lane.b32.xlu0 %v2250, 16
    %v2272 = vpop.permute.xlu0 %2271
    %2273 = vrot.lane.b32.xlu0 %v2251, 16
    %v2274 = vpop.permute.xlu0 %2273
    %2275 = vrot.lane.b32.xlu0 %v2252, 16
    %v2276 = vpop.permute.xlu0 %2275
    %vm2285 = vcmask 257152
    %2286 = vst.msk [vmem:[#allocation3] sm:$0xf] %vm2285, %v2262
    %2287 = vst.msk [vmem:[#allocation3 + $0x4] sm:$0xf] %vm2285, %v2264
    %2288 = vst.msk [vmem:[#allocation3 + $0x8] sm:$0xf] %vm2285, %v2266
    %2289 = vst.msk [vmem:[#allocation3 + $0xc] sm:$0xf] %vm2285, %v2268
    %2290 = vst.msk [vmem:[#allocation3 + $0x10] sm:$0xf] %vm2285, %v2270
    %2291 = vst.msk [vmem:[#allocation3 + $0x14] sm:$0xf] %vm2285, %v2272
    %2292 = vst.msk [vmem:[#allocation3 + $0x18] sm:$0xf] %vm2285, %v2274
    %2293 = vst.msk [vmem:[#allocation3 + $0x1c] sm:$0xf] %vm2285, %v2276
    %2294 = vrot.lane.b32.xlu0 %v2032, 96
    %v2295 = vpop.permute.xlu0 %2294
    %2296 = vrot.lane.b32.xlu0 %v2037, 96
    %v2297 = vpop.permute.xlu0 %2296
    %v2300 = vsel %vm306, %v2295, 0
    %2302 = vmatpush.bf16.msra.mxu0 0
    %2303 = vmatpush.bf16.msra.mxu0 0
    %2304 = vmatpush.bf16.msra.mxu0 0
    %2305 = vmatpush.bf16.msra.mxu0 0
    %2306 = vmatpush.bf16.msra.mxu0 0
    %2307 = vmatpush.bf16.msra.mxu0 0
    %2308 = vmatpush.bf16.msra.mxu0 0
    %2309 = vmatpush.bf16.msra.mxu0 %v2297
    %2310 = vmatmul.bf16.gmra.mxu0 %v2300
    %v2311 = vpop.f32.mrf.mxu0
    %v2312 = vadd.f32 0.0, %v2311
    %v2313 = vpop.f32.mrf.mxu0
    %v2314 = vadd.f32 0.0, %v2313
    %2315 = vdwg.mxu0
    %2316 = vrot.lane.b32.xlu0 %v2060, 96
    %v2317 = vpop.permute.xlu0 %2316
    %2318 = vrot.lane.b32.xlu0 %v2065, 96
    %v2319 = vpop.permute.xlu0 %2318
    %v2322 = vsel %vm306, %v2317, 0
    %2324 = vmatpush.bf16.msra.mxu0 0
    %2325 = vmatpush.bf16.msra.mxu0 0
    %2326 = vmatpush.bf16.msra.mxu0 0
    %2327 = vmatpush.bf16.msra.mxu0 0
    %2328 = vmatpush.bf16.msra.mxu0 0
    %2329 = vmatpush.bf16.msra.mxu0 0
    %2330 = vmatpush.bf16.msra.mxu0 0
    %2331 = vmatpush.bf16.msra.mxu0 %v2319
    %2332 = vmatmul.bf16.gmra.mxu0 %v2322
    %v2333 = vpop.f32.mrf.mxu0
    %v2334 = vadd.f32 0.0, %v2333
    %v2335 = vpop.f32.mrf.mxu0
    %v2336 = vadd.f32 0.0, %v2335
    %2337 = vdwg.mxu0
    %2338 = vrot.lane.b32.xlu0 %v2088, 96
    %v2339 = vpop.permute.xlu0 %2338
    %2340 = vrot.lane.b32.xlu0 %v2093, 96
    %v2341 = vpop.permute.xlu0 %2340
    %v2344 = vsel %vm306, %v2339, 0
    %2346 = vmatpush.bf16.msra.mxu0 0
    %2347 = vmatpush.bf16.msra.mxu0 0
    %2348 = vmatpush.bf16.msra.mxu0 0
    %2349 = vmatpush.bf16.msra.mxu0 0
    %2350 = vmatpush.bf16.msra.mxu0 0
    %2351 = vmatpush.bf16.msra.mxu0 0
    %2352 = vmatpush.bf16.msra.mxu0 0
    %2353 = vmatpush.bf16.msra.mxu0 %v2341
    %2354 = vmatmul.bf16.gmra.mxu0 %v2344
    %v2355 = vpop.f32.mrf.mxu0
    %v2356 = vadd.f32 0.0, %v2355
    %v2357 = vpop.f32.mrf.mxu0
    %v2358 = vadd.f32 0.0, %v2357
    %2359 = vdwg.mxu0
    %2360 = vrot.lane.b32.xlu0 %v2116, 96
    %v2361 = vpop.permute.xlu0 %2360
    %2362 = vrot.lane.b32.xlu0 %v2121, 96
    %v2363 = vpop.permute.xlu0 %2362
    %v2366 = vsel %vm306, %v2361, 0
    %2368 = vmatpush.bf16.msra.mxu0 0
    %2369 = vmatpush.bf16.msra.mxu0 0
    %2370 = vmatpush.bf16.msra.mxu0 0
    %2371 = vmatpush.bf16.msra.mxu0 0
    %2372 = vmatpush.bf16.msra.mxu0 0
    %2373 = vmatpush.bf16.msra.mxu0 0
    %2374 = vmatpush.bf16.msra.mxu0 0
    %2375 = vmatpush.bf16.msra.mxu0 %v2363
    %2376 = vmatmul.bf16.gmra.mxu0 %v2366
    %v2377 = vpop.f32.mrf.mxu0
    %v2378 = vadd.f32 0.0, %v2377
    %v2379 = vpop.f32.mrf.mxu0
    %v2380 = vadd.f32 0.0, %v2379
    %2381 = vdwg.mxu0
    %v2382 = vpack.c.bf16 %v2312, %v2312
    %v2383 = vpack.c.bf16 %v2314, %v2314
    %v2384 = vpack.c.bf16 %v2334, %v2334
    %v2385 = vpack.c.bf16 %v2336, %v2336
    %v2386 = vpack.c.bf16 %v2356, %v2356
    %v2387 = vpack.c.bf16 %v2358, %v2358
    %v2388 = vpack.c.bf16 %v2378, %v2378
    %v2389 = vpack.c.bf16 %v2380, %v2380
    %2398 = vrot.lane.b32.xlu0 %v2382, 32
    %v2399 = vpop.permute.xlu0 %2398
    %2400 = vrot.lane.b32.xlu0 %v2383, 32
    %v2401 = vpop.permute.xlu0 %2400
    %2402 = vrot.lane.b32.xlu0 %v2384, 32
    %v2403 = vpop.permute.xlu0 %2402
    %2404 = vrot.lane.b32.xlu0 %v2385, 32
    %v2405 = vpop.permute.xlu0 %2404
    %2406 = vrot.lane.b32.xlu0 %v2386, 32
    %v2407 = vpop.permute.xlu0 %2406
    %2408 = vrot.lane.b32.xlu0 %v2387, 32
    %v2409 = vpop.permute.xlu0 %2408
    %2410 = vrot.lane.b32.xlu0 %v2388, 32
    %v2411 = vpop.permute.xlu0 %2410
    %2412 = vrot.lane.b32.xlu0 %v2389, 32
    %v2413 = vpop.permute.xlu0 %2412
    %vm2422 = vcmask 388352
    %2423 = vst.msk [vmem:[#allocation3] sm:$0xf] %vm2422, %v2399
    %2424 = vst.msk [vmem:[#allocation3 + $0x4] sm:$0xf] %vm2422, %v2401
    %2425 = vst.msk [vmem:[#allocation3 + $0x8] sm:$0xf] %vm2422, %v2403
    %2426 = vst.msk [vmem:[#allocation3 + $0xc] sm:$0xf] %vm2422, %v2405
    %2427 = vst.msk [vmem:[#allocation3 + $0x10] sm:$0xf] %vm2422, %v2407
    %2428 = vst.msk [vmem:[#allocation3 + $0x14] sm:$0xf] %vm2422, %v2409
    %2429 = vst.msk [vmem:[#allocation3 + $0x18] sm:$0xf] %vm2422, %v2411
    %2430 = vst.msk [vmem:[#allocation3 + $0x1c] sm:$0xf] %vm2422, %v2413
    %2431 = vrot.lane.b32.xlu0 %v2032, 80
    %v2432 = vpop.permute.xlu0 %2431
    %2433 = vrot.lane.b32.xlu0 %v2037, 80
    %v2434 = vpop.permute.xlu0 %2433
    %v2437 = vsel %vm306, %v2432, 0
    %2439 = vmatpush.bf16.msra.mxu0 0
    %2440 = vmatpush.bf16.msra.mxu0 0
    %2441 = vmatpush.bf16.msra.mxu0 0
    %2442 = vmatpush.bf16.msra.mxu0 0
    %2443 = vmatpush.bf16.msra.mxu0 0
    %2444 = vmatpush.bf16.msra.mxu0 0
    %2445 = vmatpush.bf16.msra.mxu0 0
    %2446 = vmatpush.bf16.msra.mxu0 %v2434
    %2447 = vmatmul.bf16.gmra.mxu0 %v2437
    %v2448 = vpop.f32.mrf.mxu0
    %v2449 = vadd.f32 0.0, %v2448
    %v2450 = vpop.f32.mrf.mxu0
    %v2451 = vadd.f32 0.0, %v2450
    %2452 = vdwg.mxu0
    %2453 = vrot.lane.b32.xlu0 %v2060, 80
    %v2454 = vpop.permute.xlu0 %2453
    %2455 = vrot.lane.b32.xlu0 %v2065, 80
    %v2456 = vpop.permute.xlu0 %2455
    %v2459 = vsel %vm306, %v2454, 0
    %2461 = vmatpush.bf16.msra.mxu0 0
    %2462 = vmatpush.bf16.msra.mxu0 0
    %2463 = vmatpush.bf16.msra.mxu0 0
    %2464 = vmatpush.bf16.msra.mxu0 0
    %2465 = vmatpush.bf16.msra.mxu0 0
    %2466 = vmatpush.bf16.msra.mxu0 0
    %2467 = vmatpush.bf16.msra.mxu0 0
    %2468 = vmatpush.bf16.msra.mxu0 %v2456
    %2469 = vmatmul.bf16.gmra.mxu0 %v2459
    %v2470 = vpop.f32.mrf.mxu0
    %v2471 = vadd.f32 0.0, %v2470
    %v2472 = vpop.f32.mrf.mxu0
    %v2473 = vadd.f32 0.0, %v2472
    %2474 = vdwg.mxu0
    %2475 = vrot.lane.b32.xlu0 %v2088, 80
    %v2476 = vpop.permute.xlu0 %2475
    %2477 = vrot.lane.b32.xlu0 %v2093, 80
    %v2478 = vpop.permute.xlu0 %2477
    %v2481 = vsel %vm306, %v2476, 0
    %2483 = vmatpush.bf16.msra.mxu0 0
    %2484 = vmatpush.bf16.msra.mxu0 0
    %2485 = vmatpush.bf16.msra.mxu0 0
    %2486 = vmatpush.bf16.msra.mxu0 0
    %2487 = vmatpush.bf16.msra.mxu0 0
    %2488 = vmatpush.bf16.msra.mxu0 0
    %2489 = vmatpush.bf16.msra.mxu0 0
    %2490 = vmatpush.bf16.msra.mxu0 %v2478
    %2491 = vmatmul.bf16.gmra.mxu0 %v2481
    %v2492 = vpop.f32.mrf.mxu0
    %v2493 = vadd.f32 0.0, %v2492
    %v2494 = vpop.f32.mrf.mxu0
    %v2495 = vadd.f32 0.0, %v2494
    %2496 = vdwg.mxu0
    %2497 = vrot.lane.b32.xlu0 %v2116, 80
    %v2498 = vpop.permute.xlu0 %2497
    %2499 = vrot.lane.b32.xlu0 %v2121, 80
    %v2500 = vpop.permute.xlu0 %2499
    %v2503 = vsel %vm306, %v2498, 0
    %2505 = vmatpush.bf16.msra.mxu0 0
    %2506 = vmatpush.bf16.msra.mxu0 0
    %2507 = vmatpush.bf16.msra.mxu0 0
    %2508 = vmatpush.bf16.msra.mxu0 0
    %2509 = vmatpush.bf16.msra.mxu0 0
    %2510 = vmatpush.bf16.msra.mxu0 0
    %2511 = vmatpush.bf16.msra.mxu0 0
    %2512 = vmatpush.bf16.msra.mxu0 %v2500
    %2513 = vmatmul.bf16.gmra.mxu0 %v2503
    %v2514 = vpop.f32.mrf.mxu0
    %v2515 = vadd.f32 0.0, %v2514
    %v2516 = vpop.f32.mrf.mxu0
    %v2517 = vadd.f32 0.0, %v2516
    %2518 = vdwg.mxu0
    %v2519 = vpack.c.bf16 %v2449, %v2449
    %v2520 = vpack.c.bf16 %v2451, %v2451
    %v2521 = vpack.c.bf16 %v2471, %v2471
    %v2522 = vpack.c.bf16 %v2473, %v2473
    %v2523 = vpack.c.bf16 %v2493, %v2493
    %v2524 = vpack.c.bf16 %v2495, %v2495
    %v2525 = vpack.c.bf16 %v2515, %v2515
    %v2526 = vpack.c.bf16 %v2517, %v2517
    %2535 = vrot.lane.b32.xlu0 %v2519, 48
    %v2536 = vpop.permute.xlu0 %2535
    %2537 = vrot.lane.b32.xlu0 %v2520, 48
    %v2538 = vpop.permute.xlu0 %2537
    %2539 = vrot.lane.b32.xlu0 %v2521, 48
    %v2540 = vpop.permute.xlu0 %2539
    %2541 = vrot.lane.b32.xlu0 %v2522, 48
    %v2542 = vpop.permute.xlu0 %2541
    %2543 = vrot.lane.b32.xlu0 %v2523, 48
    %v2544 = vpop.permute.xlu0 %2543
    %2545 = vrot.lane.b32.xlu0 %v2524, 48
    %v2546 = vpop.permute.xlu0 %2545
    %2547 = vrot.lane.b32.xlu0 %v2525, 48
    %v2548 = vpop.permute.xlu0 %2547
    %2549 = vrot.lane.b32.xlu0 %v2526, 48
    %v2550 = vpop.permute.xlu0 %2549
    %vm2559 = vcmask 519552
    %2560 = vst.msk [vmem:[#allocation3] sm:$0xf] %vm2559, %v2536
    %2561 = vst.msk [vmem:[#allocation3 + $0x4] sm:$0xf] %vm2559, %v2538
    %2562 = vst.msk [vmem:[#allocation3 + $0x8] sm:$0xf] %vm2559, %v2540
    %2563 = vst.msk [vmem:[#allocation3 + $0xc] sm:$0xf] %vm2559, %v2542
    %2564 = vst.msk [vmem:[#allocation3 + $0x10] sm:$0xf] %vm2559, %v2544
    %2565 = vst.msk [vmem:[#allocation3 + $0x14] sm:$0xf] %vm2559, %v2546
    %2566 = vst.msk [vmem:[#allocation3 + $0x18] sm:$0xf] %vm2559, %v2548
    %2567 = vst.msk [vmem:[#allocation3 + $0x1c] sm:$0xf] %vm2559, %v2550
    %2568 = vrot.lane.b32.xlu0 %v2032, 64
    %v2569 = vpop.permute.xlu0 %2568
    %2570 = vrot.lane.b32.xlu0 %v2037, 64
    %v2571 = vpop.permute.xlu0 %2570
    %v2574 = vsel %vm306, %v2569, 0
    %2576 = vmatpush.bf16.msra.mxu0 0
    %2577 = vmatpush.bf16.msra.mxu0 0
    %2578 = vmatpush.bf16.msra.mxu0 0
    %2579 = vmatpush.bf16.msra.mxu0 0
    %2580 = vmatpush.bf16.msra.mxu0 0
    %2581 = vmatpush.bf16.msra.mxu0 0
    %2582 = vmatpush.bf16.msra.mxu0 0
    %2583 = vmatpush.bf16.msra.mxu0 %v2571
    %2584 = vmatmul.bf16.gmra.mxu0 %v2574
    %v2585 = vpop.f32.mrf.mxu0
    %v2586 = vadd.f32 0.0, %v2585
    %v2587 = vpop.f32.mrf.mxu0
    %v2588 = vadd.f32 0.0, %v2587
    %2589 = vdwg.mxu0
    %2590 = vrot.lane.b32.xlu0 %v2060, 64
    %v2591 = vpop.permute.xlu0 %2590
    %2592 = vrot.lane.b32.xlu0 %v2065, 64
    %v2593 = vpop.permute.xlu0 %2592
    %v2596 = vsel %vm306, %v2591, 0
    %2598 = vmatpush.bf16.msra.mxu0 0
    %2599 = vmatpush.bf16.msra.mxu0 0
    %2600 = vmatpush.bf16.msra.mxu0 0
    %2601 = vmatpush.bf16.msra.mxu0 0
    %2602 = vmatpush.bf16.msra.mxu0 0
    %2603 = vmatpush.bf16.msra.mxu0 0
    %2604 = vmatpush.bf16.msra.mxu0 0
    %2605 = vmatpush.bf16.msra.mxu0 %v2593
    %2606 = vmatmul.bf16.gmra.mxu0 %v2596
    %v2607 = vpop.f32.mrf.mxu0
    %v2608 = vadd.f32 0.0, %v2607
    %v2609 = vpop.f32.mrf.mxu0
    %v2610 = vadd.f32 0.0, %v2609
    %2611 = vdwg.mxu0
    %2612 = vrot.lane.b32.xlu0 %v2088, 64
    %v2613 = vpop.permute.xlu0 %2612
    %2614 = vrot.lane.b32.xlu0 %v2093, 64
    %v2615 = vpop.permute.xlu0 %2614
    %v2618 = vsel %vm306, %v2613, 0
    %2620 = vmatpush.bf16.msra.mxu0 0
    %2621 = vmatpush.bf16.msra.mxu0 0
    %2622 = vmatpush.bf16.msra.mxu0 0
    %2623 = vmatpush.bf16.msra.mxu0 0
    %2624 = vmatpush.bf16.msra.mxu0 0
    %2625 = vmatpush.bf16.msra.mxu0 0
    %2626 = vmatpush.bf16.msra.mxu0 0
    %2627 = vmatpush.bf16.msra.mxu0 %v2615
    %2628 = vmatmul.bf16.gmra.mxu0 %v2618
    %v2629 = vpop.f32.mrf.mxu0
    %v2630 = vadd.f32 0.0, %v2629
    %v2631 = vpop.f32.mrf.mxu0
    %v2632 = vadd.f32 0.0, %v2631
    %2633 = vdwg.mxu0
    %2634 = vrot.lane.b32.xlu0 %v2116, 64
    %v2635 = vpop.permute.xlu0 %2634
    %2636 = vrot.lane.b32.xlu0 %v2121, 64
    %v2637 = vpop.permute.xlu0 %2636
    %v2640 = vsel %vm306, %v2635, 0
    %2642 = vmatpush.bf16.msra.mxu0 0
    %2643 = vmatpush.bf16.msra.mxu0 0
    %2644 = vmatpush.bf16.msra.mxu0 0
    %2645 = vmatpush.bf16.msra.mxu0 0
    %2646 = vmatpush.bf16.msra.mxu0 0
    %2647 = vmatpush.bf16.msra.mxu0 0
    %2648 = vmatpush.bf16.msra.mxu0 0
    %2649 = vmatpush.bf16.msra.mxu0 %v2637
    %2650 = vmatmul.bf16.gmra.mxu0 %v2640
    %v2651 = vpop.f32.mrf.mxu0
    %v2652 = vadd.f32 0.0, %v2651
    %v2653 = vpop.f32.mrf.mxu0
    %v2654 = vadd.f32 0.0, %v2653
    %2655 = vdwg.mxu0
    %v2656 = vpack.c.bf16 %v2586, %v2586
    %v2657 = vpack.c.bf16 %v2588, %v2588
    %v2658 = vpack.c.bf16 %v2608, %v2608
    %v2659 = vpack.c.bf16 %v2610, %v2610
    %v2660 = vpack.c.bf16 %v2630, %v2630
    %v2661 = vpack.c.bf16 %v2632, %v2632
    %v2662 = vpack.c.bf16 %v2652, %v2652
    %v2663 = vpack.c.bf16 %v2654, %v2654
    %2672 = vrot.lane.b32.xlu0 %v2656, 64
    %v2673 = vpop.permute.xlu0 %2672
    %2674 = vrot.lane.b32.xlu0 %v2657, 64
    %v2675 = vpop.permute.xlu0 %2674
    %2676 = vrot.lane.b32.xlu0 %v2658, 64
    %v2677 = vpop.permute.xlu0 %2676
    %2678 = vrot.lane.b32.xlu0 %v2659, 64
    %v2679 = vpop.permute.xlu0 %2678
    %2680 = vrot.lane.b32.xlu0 %v2660, 64
    %v2681 = vpop.permute.xlu0 %2680
    %2682 = vrot.lane.b32.xlu0 %v2661, 64
    %v2683 = vpop.permute.xlu0 %2682
    %2684 = vrot.lane.b32.xlu0 %v2662, 64
    %v2685 = vpop.permute.xlu0 %2684
    %2686 = vrot.lane.b32.xlu0 %v2663, 64
    %v2687 = vpop.permute.xlu0 %2686
    %vm2696 = vcmask 650752
    %2697 = vst.msk [vmem:[#allocation3] sm:$0xf] %vm2696, %v2673
    %2698 = vst.msk [vmem:[#allocation3 + $0x4] sm:$0xf] %vm2696, %v2675
    %2699 = vst.msk [vmem:[#allocation3 + $0x8] sm:$0xf] %vm2696, %v2677
    %2700 = vst.msk [vmem:[#allocation3 + $0xc] sm:$0xf] %vm2696, %v2679
    %2701 = vst.msk [vmem:[#allocation3 + $0x10] sm:$0xf] %vm2696, %v2681
    %2702 = vst.msk [vmem:[#allocation3 + $0x14] sm:$0xf] %vm2696, %v2683
    %2703 = vst.msk [vmem:[#allocation3 + $0x18] sm:$0xf] %vm2696, %v2685
    %2704 = vst.msk [vmem:[#allocation3 + $0x1c] sm:$0xf] %vm2696, %v2687
    %2705 = vrot.lane.b32.xlu0 %v2032, 48
    %v2706 = vpop.permute.xlu0 %2705
    %2707 = vrot.lane.b32.xlu0 %v2037, 48
    %v2708 = vpop.permute.xlu0 %2707
    %v2711 = vsel %vm306, %v2706, 0
    %2713 = vmatpush.bf16.msra.mxu0 0
    %2714 = vmatpush.bf16.msra.mxu0 0
    %2715 = vmatpush.bf16.msra.mxu0 0
    %2716 = vmatpush.bf16.msra.mxu0 0
    %2717 = vmatpush.bf16.msra.mxu0 0
    %2718 = vmatpush.bf16.msra.mxu0 0
    %2719 = vmatpush.bf16.msra.mxu0 0
    %2720 = vmatpush.bf16.msra.mxu0 %v2708
    %2721 = vmatmul.bf16.gmra.mxu0 %v2711
    %v2722 = vpop.f32.mrf.mxu0
    %v2723 = vadd.f32 0.0, %v2722
    %v2724 = vpop.f32.mrf.mxu0
    %v2725 = vadd.f32 0.0, %v2724
    %2726 = vdwg.mxu0
    %2727 = vrot.lane.b32.xlu0 %v2060, 48
    %v2728 = vpop.permute.xlu0 %2727
    %2729 = vrot.lane.b32.xlu0 %v2065, 48
    %v2730 = vpop.permute.xlu0 %2729
    %v2733 = vsel %vm306, %v2728, 0
    %2735 = vmatpush.bf16.msra.mxu0 0
    %2736 = vmatpush.bf16.msra.mxu0 0
    %2737 = vmatpush.bf16.msra.mxu0 0
    %2738 = vmatpush.bf16.msra.mxu0 0
    %2739 = vmatpush.bf16.msra.mxu0 0
    %2740 = vmatpush.bf16.msra.mxu0 0
    %2741 = vmatpush.bf16.msra.mxu0 0
    %2742 = vmatpush.bf16.msra.mxu0 %v2730
    %2743 = vmatmul.bf16.gmra.mxu0 %v2733
    %v2744 = vpop.f32.mrf.mxu0
    %v2745 = vadd.f32 0.0, %v2744
    %v2746 = vpop.f32.mrf.mxu0
    %v2747 = vadd.f32 0.0, %v2746
    %2748 = vdwg.mxu0
    %2749 = vrot.lane.b32.xlu0 %v2088, 48
    %v2750 = vpop.permute.xlu0 %2749
    %2751 = vrot.lane.b32.xlu0 %v2093, 48
    %v2752 = vpop.permute.xlu0 %2751
    %v2755 = vsel %vm306, %v2750, 0
    %2757 = vmatpush.bf16.msra.mxu0 0
    %2758 = vmatpush.bf16.msra.mxu0 0
    %2759 = vmatpush.bf16.msra.mxu0 0
    %2760 = vmatpush.bf16.msra.mxu0 0
    %2761 = vmatpush.bf16.msra.mxu0 0
    %2762 = vmatpush.bf16.msra.mxu0 0
    %2763 = vmatpush.bf16.msra.mxu0 0
    %2764 = vmatpush.bf16.msra.mxu0 %v2752
    %2765 = vmatmul.bf16.gmra.mxu0 %v2755
    %v2766 = vpop.f32.mrf.mxu0
    %v2767 = vadd.f32 0.0, %v2766
    %v2768 = vpop.f32.mrf.mxu0
    %v2769 = vadd.f32 0.0, %v2768
    %2770 = vdwg.mxu0
    %2771 = vrot.lane.b32.xlu0 %v2116, 48
    %v2772 = vpop.permute.xlu0 %2771
    %2773 = vrot.lane.b32.xlu0 %v2121, 48
    %v2774 = vpop.permute.xlu0 %2773
    %v2777 = vsel %vm306, %v2772, 0
    %2779 = vmatpush.bf16.msra.mxu0 0
    %2780 = vmatpush.bf16.msra.mxu0 0
    %2781 = vmatpush.bf16.msra.mxu0 0
    %2782 = vmatpush.bf16.msra.mxu0 0
    %2783 = vmatpush.bf16.msra.mxu0 0
    %2784 = vmatpush.bf16.msra.mxu0 0
    %2785 = vmatpush.bf16.msra.mxu0 0
    %2786 = vmatpush.bf16.msra.mxu0 %v2774
    %2787 = vmatmul.bf16.gmra.mxu0 %v2777
    %v2788 = vpop.f32.mrf.mxu0
    %v2789 = vadd.f32 0.0, %v2788
    %v2790 = vpop.f32.mrf.mxu0
    %v2791 = vadd.f32 0.0, %v2790
    %2792 = vdwg.mxu0
    %v2793 = vpack.c.bf16 %v2723, %v2723
    %v2794 = vpack.c.bf16 %v2725, %v2725
    %v2795 = vpack.c.bf16 %v2745, %v2745
    %v2796 = vpack.c.bf16 %v2747, %v2747
    %v2797 = vpack.c.bf16 %v2767, %v2767
    %v2798 = vpack.c.bf16 %v2769, %v2769
    %v2799 = vpack.c.bf16 %v2789, %v2789
    %v2800 = vpack.c.bf16 %v2791, %v2791
    %2809 = vrot.lane.b32.xlu0 %v2793, 80
    %v2810 = vpop.permute.xlu0 %2809
    %2811 = vrot.lane.b32.xlu0 %v2794, 80
    %v2812 = vpop.permute.xlu0 %2811
    %2813 = vrot.lane.b32.xlu0 %v2795, 80
    %v2814 = vpop.permute.xlu0 %2813
    %2815 = vrot.lane.b32.xlu0 %v2796, 80
    %v2816 = vpop.permute.xlu0 %2815
    %2817 = vrot.lane.b32.xlu0 %v2797, 80
    %v2818 = vpop.permute.xlu0 %2817
    %2819 = vrot.lane.b32.xlu0 %v2798, 80
    %v2820 = vpop.permute.xlu0 %2819
    %2821 = vrot.lane.b32.xlu0 %v2799, 80
    %v2822 = vpop.permute.xlu0 %2821
    %2823 = vrot.lane.b32.xlu0 %v2800, 80
    %v2824 = vpop.permute.xlu0 %2823
    %vm2833 = vcmask 781952
    %2834 = vst.msk [vmem:[#allocation3] sm:$0xf] %vm2833, %v2810
    %2835 = vst.msk [vmem:[#allocation3 + $0x4] sm:$0xf] %vm2833, %v2812
    %2836 = vst.msk [vmem:[#allocation3 + $0x8] sm:$0xf] %vm2833, %v2814
    %2837 = vst.msk [vmem:[#allocation3 + $0xc] sm:$0xf] %vm2833, %v2816
    %2838 = vst.msk [vmem:[#allocation3 + $0x10] sm:$0xf] %vm2833, %v2818
    %2839 = vst.msk [vmem:[#allocation3 + $0x14] sm:$0xf] %vm2833, %v2820
    %2840 = vst.msk [vmem:[#allocation3 + $0x18] sm:$0xf] %vm2833, %v2822
    %2841 = vst.msk [vmem:[#allocation3 + $0x1c] sm:$0xf] %vm2833, %v2824
    %2842 = vrot.lane.b32.xlu0 %v2032, 32
    %v2843 = vpop.permute.xlu0 %2842
    %2844 = vrot.lane.b32.xlu0 %v2037, 32
    %v2845 = vpop.permute.xlu0 %2844
    %v2848 = vsel %vm306, %v2843, 0
    %2850 = vmatpush.bf16.msra.mxu0 0
    %2851 = vmatpush.bf16.msra.mxu0 0
    %2852 = vmatpush.bf16.msra.mxu0 0
    %2853 = vmatpush.bf16.msra.mxu0 0
    %2854 = vmatpush.bf16.msra.mxu0 0
    %2855 = vmatpush.bf16.msra.mxu0 0
    %2856 = vmatpush.bf16.msra.mxu0 0
    %2857 = vmatpush.bf16.msra.mxu0 %v2845
    %2858 = vmatmul.bf16.gmra.mxu0 %v2848
    %v2859 = vpop.f32.mrf.mxu0
    %v2860 = vadd.f32 0.0, %v2859
    %v2861 = vpop.f32.mrf.mxu0
    %v2862 = vadd.f32 0.0, %v2861
    %2863 = vdwg.mxu0
    %2864 = vrot.lane.b32.xlu0 %v2060, 32
    %v2865 = vpop.permute.xlu0 %2864
    %2866 = vrot.lane.b32.xlu0 %v2065, 32
    %v2867 = vpop.permute.xlu0 %2866
    %v2870 = vsel %vm306, %v2865, 0
    %2872 = vmatpush.bf16.msra.mxu0 0
    %2873 = vmatpush.bf16.msra.mxu0 0
    %2874 = vmatpush.bf16.msra.mxu0 0
    %2875 = vmatpush.bf16.msra.mxu0 0
    %2876 = vmatpush.bf16.msra.mxu0 0
    %2877 = vmatpush.bf16.msra.mxu0 0
    %2878 = vmatpush.bf16.msra.mxu0 0
    %2879 = vmatpush.bf16.msra.mxu0 %v2867
    %2880 = vmatmul.bf16.gmra.mxu0 %v2870
    %v2881 = vpop.f32.mrf.mxu0
    %v2882 = vadd.f32 0.0, %v2881
    %v2883 = vpop.f32.mrf.mxu0
    %v2884 = vadd.f32 0.0, %v2883
    %2885 = vdwg.mxu0
    %2886 = vrot.lane.b32.xlu0 %v2088, 32
    %v2887 = vpop.permute.xlu0 %2886
    %2888 = vrot.lane.b32.xlu0 %v2093, 32
    %v2889 = vpop.permute.xlu0 %2888
    %v2892 = vsel %vm306, %v2887, 0
    %2894 = vmatpush.bf16.msra.mxu0 0
    %2895 = vmatpush.bf16.msra.mxu0 0
    %2896 = vmatpush.bf16.msra.mxu0 0
    %2897 = vmatpush.bf16.msra.mxu0 0
    %2898 = vmatpush.bf16.msra.mxu0 0
    %2899 = vmatpush.bf16.msra.mxu0 0
    %2900 = vmatpush.bf16.msra.mxu0 0
    %2901 = vmatpush.bf16.msra.mxu0 %v2889
    %2902 = vmatmul.bf16.gmra.mxu0 %v2892
    %v2903 = vpop.f32.mrf.mxu0
    %v2904 = vadd.f32 0.0, %v2903
    %v2905 = vpop.f32.mrf.mxu0
    %v2906 = vadd.f32 0.0, %v2905
    %2907 = vdwg.mxu0
    %2908 = vrot.lane.b32.xlu0 %v2116, 32
    %v2909 = vpop.permute.xlu0 %2908
    %2910 = vrot.lane.b32.xlu0 %v2121, 32
    %v2911 = vpop.permute.xlu0 %2910
    %v2914 = vsel %vm306, %v2909, 0
    %2916 = vmatpush.bf16.msra.mxu0 0
    %2917 = vmatpush.bf16.msra.mxu0 0
    %2918 = vmatpush.bf16.msra.mxu0 0
    %2919 = vmatpush.bf16.msra.mxu0 0
    %2920 = vmatpush.bf16.msra.mxu0 0
    %2921 = vmatpush.bf16.msra.mxu0 0
    %2922 = vmatpush.bf16.msra.mxu0 0
    %2923 = vmatpush.bf16.msra.mxu0 %v2911
    %2924 = vmatmul.bf16.gmra.mxu0 %v2914
    %v2925 = vpop.f32.mrf.mxu0
    %v2926 = vadd.f32 0.0, %v2925
    %v2927 = vpop.f32.mrf.mxu0
    %v2928 = vadd.f32 0.0, %v2927
    %2929 = vdwg.mxu0
    %v2930 = vpack.c.bf16 %v2860, %v2860
    %v2931 = vpack.c.bf16 %v2862, %v2862
    %v2932 = vpack.c.bf16 %v2882, %v2882
    %v2933 = vpack.c.bf16 %v2884, %v2884
    %v2934 = vpack.c.bf16 %v2904, %v2904
    %v2935 = vpack.c.bf16 %v2906, %v2906
    %v2936 = vpack.c.bf16 %v2926, %v2926
    %v2937 = vpack.c.bf16 %v2928, %v2928
    %2946 = vrot.lane.b32.xlu0 %v2930, 96
    %v2947 = vpop.permute.xlu0 %2946
    %2948 = vrot.lane.b32.xlu0 %v2931, 96
    %v2949 = vpop.permute.xlu0 %2948
    %2950 = vrot.lane.b32.xlu0 %v2932, 96
    %v2951 = vpop.permute.xlu0 %2950
    %2952 = vrot.lane.b32.xlu0 %v2933, 96
    %v2953 = vpop.permute.xlu0 %2952
    %2954 = vrot.lane.b32.xlu0 %v2934, 96
    %v2955 = vpop.permute.xlu0 %2954
    %2956 = vrot.lane.b32.xlu0 %v2935, 96
    %v2957 = vpop.permute.xlu0 %2956
    %2958 = vrot.lane.b32.xlu0 %v2936, 96
    %v2959 = vpop.permute.xlu0 %2958
    %2960 = vrot.lane.b32.xlu0 %v2937, 96
    %v2961 = vpop.permute.xlu0 %2960
    %vm2970 = vcmask 913152
    %2971 = vst.msk [vmem:[#allocation3] sm:$0xf] %vm2970, %v2947
    %2972 = vst.msk [vmem:[#allocation3 + $0x4] sm:$0xf] %vm2970, %v2949
    %2973 = vst.msk [vmem:[#allocation3 + $0x8] sm:$0xf] %vm2970, %v2951
    %2974 = vst.msk [vmem:[#allocation3 + $0xc] sm:$0xf] %vm2970, %v2953
    %2975 = vst.msk [vmem:[#allocation3 + $0x10] sm:$0xf] %vm2970, %v2955
    %2976 = vst.msk [vmem:[#allocation3 + $0x14] sm:$0xf] %vm2970, %v2957
    %2977 = vst.msk [vmem:[#allocation3 + $0x18] sm:$0xf] %vm2970, %v2959
    %2978 = vst.msk [vmem:[#allocation3 + $0x1c] sm:$0xf] %vm2970, %v2961
    %2979 = vrot.lane.b32.xlu0 %v2032, 16
    %v2980 = vpop.permute.xlu0 %2979
    %2981 = vrot.lane.b32.xlu0 %v2037, 16
    %v2982 = vpop.permute.xlu0 %2981
    %v2985 = vsel %vm306, %v2980, 0
    %2987 = vmatpush.bf16.msra.mxu0 0
    %2988 = vmatpush.bf16.msra.mxu0 0
    %2989 = vmatpush.bf16.msra.mxu0 0
    %2990 = vmatpush.bf16.msra.mxu0 0
    %2991 = vmatpush.bf16.msra.mxu0 0
    %2992 = vmatpush.bf16.msra.mxu0 0
    %2993 = vmatpush.bf16.msra.mxu0 0
    %2994 = vmatpush.bf16.msra.mxu0 %v2982
    %2995 = vmatmul.bf16.gmra.mxu0 %v2985
    %v2996 = vpop.f32.mrf.mxu0
    %v2997 = vadd.f32 0.0, %v2996
    %v2998 = vpop.f32.mrf.mxu0
    %v2999 = vadd.f32 0.0, %v2998
    %3000 = vdwg.mxu0
    %3001 = vrot.lane.b32.xlu0 %v2060, 16
    %v3002 = vpop.permute.xlu0 %3001
    %3003 = vrot.lane.b32.xlu0 %v2065, 16
    %v3004 = vpop.permute.xlu0 %3003
    %v3007 = vsel %vm306, %v3002, 0
    %3009 = vmatpush.bf16.msra.mxu0 0
    %3010 = vmatpush.bf16.msra.mxu0 0
    %3011 = vmatpush.bf16.msra.mxu0 0
    %3012 = vmatpush.bf16.msra.mxu0 0
    %3013 = vmatpush.bf16.msra.mxu0 0
    %3014 = vmatpush.bf16.msra.mxu0 0
    %3015 = vmatpush.bf16.msra.mxu0 0
    %3016 = vmatpush.bf16.msra.mxu0 %v3004
    %3017 = vmatmul.bf16.gmra.mxu0 %v3007
    %v3018 = vpop.f32.mrf.mxu0
    %v3019 = vadd.f32 0.0, %v3018
    %v3020 = vpop.f32.mrf.mxu0
    %v3021 = vadd.f32 0.0, %v3020
    %3022 = vdwg.mxu0
    %3023 = vrot.lane.b32.xlu0 %v2088, 16
    %v3024 = vpop.permute.xlu0 %3023
    %3025 = vrot.lane.b32.xlu0 %v2093, 16
    %v3026 = vpop.permute.xlu0 %3025
    %v3029 = vsel %vm306, %v3024, 0
    %3031 = vmatpush.bf16.msra.mxu0 0
    %3032 = vmatpush.bf16.msra.mxu0 0
    %3033 = vmatpush.bf16.msra.mxu0 0
    %3034 = vmatpush.bf16.msra.mxu0 0
    %3035 = vmatpush.bf16.msra.mxu0 0
    %3036 = vmatpush.bf16.msra.mxu0 0
    %3037 = vmatpush.bf16.msra.mxu0 0
    %3038 = vmatpush.bf16.msra.mxu0 %v3026
    %3039 = vmatmul.bf16.gmra.mxu0 %v3029
    %v3040 = vpop.f32.mrf.mxu0
    %v3041 = vadd.f32 0.0, %v3040
    %v3042 = vpop.f32.mrf.mxu0
    %v3043 = vadd.f32 0.0, %v3042
    %3044 = vdwg.mxu0
    %3045 = vrot.lane.b32.xlu0 %v2116, 16
    %v3046 = vpop.permute.xlu0 %3045
    %3047 = vrot.lane.b32.xlu0 %v2121, 16
    %v3048 = vpop.permute.xlu0 %3047
    %v3051 = vsel %vm306, %v3046, 0
    %3053 = vmatpush.bf16.msra.mxu0 0
    %3054 = vmatpush.bf16.msra.mxu0 0
    %3055 = vmatpush.bf16.msra.mxu0 0
    %3056 = vmatpush.bf16.msra.mxu0 0
    %3057 = vmatpush.bf16.msra.mxu0 0
    %3058 = vmatpush.bf16.msra.mxu0 0
    %3059 = vmatpush.bf16.msra.mxu0 0
    %3060 = vmatpush.bf16.msra.mxu0 %v3048
    %3061 = vmatmul.bf16.gmra.mxu0 %v3051
    %v3062 = vpop.f32.mrf.mxu0
    %v3063 = vadd.f32 0.0, %v3062
    %v3064 = vpop.f32.mrf.mxu0
    %v3065 = vadd.f32 0.0, %v3064
    %3066 = vdwg.mxu0
    %v3067 = vpack.c.bf16 %v2997, %v2997
    %v3068 = vpack.c.bf16 %v2999, %v2999
    %v3069 = vpack.c.bf16 %v3019, %v3019
    %v3070 = vpack.c.bf16 %v3021, %v3021
    %v3071 = vpack.c.bf16 %v3041, %v3041
    %v3072 = vpack.c.bf16 %v3043, %v3043
    %v3073 = vpack.c.bf16 %v3063, %v3063
    %v3074 = vpack.c.bf16 %v3065, %v3065
    %3083 = vrot.lane.b32.xlu0 %v3067, 112
    %v3084 = vpop.permute.xlu0 %3083
    %3085 = vrot.lane.b32.xlu0 %v3068, 112
    %v3086 = vpop.permute.xlu0 %3085
    %3087 = vrot.lane.b32.xlu0 %v3069, 112
    %v3088 = vpop.permute.xlu0 %3087
    %3089 = vrot.lane.b32.xlu0 %v3070, 112
    %v3090 = vpop.permute.xlu0 %3089
    %3091 = vrot.lane.b32.xlu0 %v3071, 112
    %v3092 = vpop.permute.xlu0 %3091
    %3093 = vrot.lane.b32.xlu0 %v3072, 112
    %v3094 = vpop.permute.xlu0 %3093
    %3095 = vrot.lane.b32.xlu0 %v3073, 112
    %v3096 = vpop.permute.xlu0 %3095
    %3097 = vrot.lane.b32.xlu0 %v3074, 112
    %v3098 = vpop.permute.xlu0 %3097
    %vm3107 = vcmask 1044352
    %3108 = vst.msk [vmem:[#allocation3] sm:$0xf] %vm3107, %v3084
    %3109 = vst.msk [vmem:[#allocation3 + $0x4] sm:$0xf] %vm3107, %v3086
    %3110 = vst.msk [vmem:[#allocation3 + $0x8] sm:$0xf] %vm3107, %v3088
    %3111 = vst.msk [vmem:[#allocation3 + $0xc] sm:$0xf] %vm3107, %v3090
    %3112 = vst.msk [vmem:[#allocation3 + $0x10] sm:$0xf] %vm3107, %v3092
    %3113 = vst.msk [vmem:[#allocation3 + $0x14] sm:$0xf] %vm3107, %v3094
    %3114 = vst.msk [vmem:[#allocation3 + $0x18] sm:$0xf] %vm3107, %v3096
    %3115 = vst.msk [vmem:[#allocation3 + $0x1c] sm:$0xf] %vm3107, %v3098
    %v3116 = vld [vmem:[#allocation3] sm:$0xf]
    %v3117 = vld [vmem:[#allocation3 + $0x4] sm:$0xf]
    %v3118 = vld [vmem:[#allocation3 + $0x8] sm:$0xf]
    %v3119 = vld [vmem:[#allocation3 + $0xc] sm:$0xf]
    %v3120 = vld [vmem:[#allocation3 + $0x10] sm:$0xf]
    %v3121 = vld [vmem:[#allocation3 + $0x14] sm:$0xf]
    %v3122 = vld [vmem:[#allocation3 + $0x18] sm:$0xf]
    %v3123 = vld [vmem:[#allocation3 + $0x1c] sm:$0xf]
    %v3124 = vld [vmem:[%s8] sm:$0xf]
    %v3125 = vld [vmem:[%s8 + $0x4] sm:$0xf]
    %v3126 = vld [vmem:[%s8 + $0x8] sm:$0xf]
    %v3127 = vld [vmem:[%s8 + $0xc] sm:$0xf]
    %v3128 = vld [vmem:[%s8 + $0x10] sm:$0xf]
    %v3129 = vld [vmem:[%s8 + $0x14] sm:$0xf]
    %v3130 = vld [vmem:[%s8 + $0x18] sm:$0xf]
    %v3131 = vld [vmem:[%s8 + $0x1c] sm:$0xf]
    %v3132 = vld [vmem:[%s8 + $0x20] sm:$0xf]
    %v3133 = vld [vmem:[%s8 + $0x24] sm:$0xf]
    %v3134 = vld [vmem:[%s8 + $0x28] sm:$0xf]
    %v3135 = vld [vmem:[%s8 + $0x2c] sm:$0xf]
    %v3136 = vld [vmem:[%s8 + $0x30] sm:$0xf]
    %v3137 = vld [vmem:[%s8 + $0x34] sm:$0xf]
    %v3138 = vld [vmem:[%s8 + $0x38] sm:$0xf]
    %v3139 = vld [vmem:[%s8 + $0x3c] sm:$0xf]
    %v3140 = vld [vmem:[%s9] sm:$0x1]
    %v3142 = vperm.slane %v3140, 0
    %v3152 = vunpack.c.l.b16 %v3116
    %v3153 = vunpack.c.l.b16 %v3117
    %v3154 = vunpack.c.l.b16 %v3118
    %v3155 = vunpack.c.l.b16 %v3119
    %v3156 = vunpack.c.l.b16 %v3120
    %v3157 = vunpack.c.l.b16 %v3121
    %v3158 = vunpack.c.l.b16 %v3122
    %v3159 = vunpack.c.l.b16 %v3123
    %v3160 = vpack.c.b16 %v3153, %v3152
    %v3161 = vpack.c.b16 %v3155, %v3154
    %v3162 = vpack.c.b16 %v3157, %v3156
    %v3163 = vpack.c.b16 %v3159, %v3158
    %v3184 = vunpack.c.l.b16 %v3124
    %v3185 = vunpack.c.l.b16 %v3125
    %v3186 = vunpack.c.l.b16 %v3126
    %v3187 = vunpack.c.l.b16 %v3127
    %v3188 = vunpack.c.l.b16 %v3128
    %v3189 = vunpack.c.l.b16 %v3129
    %v3190 = vunpack.c.l.b16 %v3130
    %v3191 = vunpack.c.l.b16 %v3131
    %v3192 = vunpack.c.l.b16 %v3132
    %v3193 = vunpack.c.l.b16 %v3133
    %v3194 = vunpack.c.l.b16 %v3134
    %v3195 = vunpack.c.l.b16 %v3135
    %v3196 = vunpack.c.l.b16 %v3136
    %v3197 = vunpack.c.l.b16 %v3137
    %v3198 = vunpack.c.l.b16 %v3138
    %v3199 = vunpack.c.l.b16 %v3139
    %v3200 = vpack.c.b16 %v3185, %v3184
    %v3201 = vpack.c.b16 %v3187, %v3186
    %v3202 = vpack.c.b16 %v3189, %v3188
    %v3203 = vpack.c.b16 %v3191, %v3190
    %v3204 = vpack.c.b16 %v3193, %v3192
    %v3205 = vpack.c.b16 %v3195, %v3194
    %v3206 = vpack.c.b16 %v3197, %v3196
    %v3207 = vpack.c.b16 %v3199, %v3198
    %3216 = vmatpush.bf16.msra.mxu0 %v3207
    %3217 = vmatpush.bf16.msra.mxu0 %v3206
    %3218 = vmatpush.bf16.msra.mxu0 %v3205
    %3219 = vmatpush.bf16.msra.mxu0 %v3204
    %3220 = vmatpush.bf16.msra.mxu0 %v3203
    %3221 = vmatpush.bf16.msra.mxu0 %v3202
    %3222 = vmatpush.bf16.msra.mxu0 %v3201
    %3223 = vmatpush.bf16.msra.mxu0 %v3200
    %3224 = vmatmul.bf16.gmra.mxu0 %v3160
    %v3225 = vpop.f32.mrf.mxu0
    %v3226 = vadd.f32 %v3142, %v3225
    %v3227 = vpop.f32.mrf.mxu0
    %v3228 = vadd.f32 %v3142, %v3227
    %3229 = vmatmul.bf16.gmra.mxu0 %v3161
    %v3230 = vpop.f32.mrf.mxu0
    %v3231 = vadd.f32 %v3142, %v3230
    %v3232 = vpop.f32.mrf.mxu0
    %v3233 = vadd.f32 %v3142, %v3232
    %3234 = vmatmul.bf16.gmra.mxu0 %v3162
    %v3235 = vpop.f32.mrf.mxu0
    %v3236 = vadd.f32 %v3142, %v3235
    %v3237 = vpop.f32.mrf.mxu0
    %v3238 = vadd.f32 %v3142, %v3237
    %3239 = vmatmul.bf16.gmra.mxu0 %v3163
    %v3240 = vpop.f32.mrf.mxu0
    %v3241 = vadd.f32 %v3142, %v3240
    %v3242 = vpop.f32.mrf.mxu0
    %v3243 = vadd.f32 %v3142, %v3242
    %3244 = vdwg.mxu0
    %3245 = vst.msk [vmem:[%s10] sm:$0xff] %vm151, %v3226
    %3246 = vst.msk [vmem:[%s10 + $0x8] sm:$0xff] %vm151, %v3228
    %3247 = vst.msk [vmem:[%s10 + $0x10] sm:$0xff] %vm151, %v3231
    %3248 = vst.msk [vmem:[%s10 + $0x18] sm:$0xff] %vm151, %v3233
    %3249 = vst.msk [vmem:[%s10 + $0x20] sm:$0xff] %vm151, %v3236
    %3250 = vst.msk [vmem:[%s10 + $0x28] sm:$0xff] %vm151, %v3238
    %3251 = vst.msk [vmem:[%s10 + $0x30] sm:$0xff] %vm151, %v3241
    %3252 = vst.msk [vmem:[%s10 + $0x38] sm:$0xff] %vm151, %v3243
    // Predicated region
    $region54: #{tpu_custom_call.1} parent=1 // pred_check
      _
    $region55: #{tpu_custom_call.1} parent=1 // pred_check_branch
      %3254 = sbr.rel (0) target = $region57
    $region56: #{tpu_custom_call.1} parent=1 // pred_region
      _
    $region57: #{tpu_custom_call.1} parent=1 // pred_fallthru
      _
    // Predicated region
    $region58: #{tpu_custom_call.1} parent=1 // pred_check
      _
    $region59: #{tpu_custom_call.1} parent=1 // pred_check_branch
      %3256 = sbr.rel (0) target = $region61
    $region60: #{tpu_custom_call.1} parent=1 // pred_region
      _
    $region61: #{tpu_custom_call.1} parent=1 // pred_fallthru
      _
    %3257 = vsyncpa [#allocation5], 1
    %3258 = vsyncpa [#allocation7], 1

</llo_original>
